<compile_context>
chip_gen: v7x
topology: tpu7x:2x2x1
jax: 0.10.0
libtpu: 0.0.40
codegen_flags: <defaults>
</compile_context>

<pallas_src>
import functools

import jax
import jax.numpy as jnp
from jax import lax
from jax.experimental import pallas as pl
from jax.experimental.pallas import tpu as pltpu


def _round_up_128(c):
    return ((c + 127) // 128) * 128


def bottleneck_kernel(x_ref, w1_ref, b1_ref, w2_ref, b2_ref, w3_ref, b3_ref,
                      o_ref, pad_ref, *, H, W):
    # x_ref:   (1, HW, Cp)      bf16   (Cp = in/out channels padded to 128)
    # w1_ref:  (Cp, Cmp)        bf16   (bn1 scale folded in)   b1: (1, Cmp) f32
    # w2_ref:  (9, Cmp, Cmp)    bf16   (bn2 scale folded in)   b2: (1, Cmp) f32
    # w3_ref:  (Cmp, Cop)       bf16   (bn3 scale folded in)   b3: (1, Cop) f32
    # o_ref:   (1, HW, Cop)     f32 (or bf16)
    # pad_ref: (H+2, W+16, Cmp) bf16 scratch; 1-row / 8-column zero halo so all
    #          stores land on (8,128) tile boundaries (dense vst, no masks).
    HW = x_ref.shape[1]
    Cmp = w1_ref.shape[1]
    PADW = pad_ref.shape[1]                                      # W + 16

    x = x_ref[0]                                                 # (HW, Cp) bf16

    # ---- conv1 (1x1, bn1 scale pre-folded) + bias + relu --------------------
    y1 = jnp.dot(x, w1_ref[...], preferred_element_type=jnp.float32)
    y1 = jnp.maximum(y1 + b1_ref[...], 0.0)                      # (HW, Cmp) f32

    # ---- conv2 (3x3, stride 1, pad 1, bn2 scale pre-folded) + bias + relu ---
    # Fill the bf16 padded scratch with dense, tile-aligned stores.  Halos are
    # re-zeroed every step (not program_id-gated) so the batch axis stays
    # safely shardable across TensorCores.
    y1_img = y1.astype(jnp.bfloat16).reshape(H, W, Cmp)
    zrow = jnp.zeros((1, PADW, Cmp), jnp.bfloat16)
    zcol = jnp.zeros((H, 8, Cmp), jnp.bfloat16)
    pad_ref[0:1, :, :] = zrow
    pad_ref[H + 1:H + 2, :, :] = zrow
    pad_ref[1:H + 1, 0:8, :] = zcol
    pad_ref[1:H + 1, W + 8:W + 16, :] = zcol
    pad_ref[1:H + 1, 8:W + 8, :] = y1_img

    # Nine accumulated MXU dots (K = Cmp per tap) over shifted views of the
    # padded scratch; no (HW, 9*Cmp) im2col slab is ever materialized.
    acc = jnp.zeros((HW, Cmp), jnp.float32)
    for kh in range(3):
        for kw in range(3):
            win = pad_ref[kh:kh + H, kw + 7:kw + 7 + W, :].reshape(HW, Cmp)
            acc = acc + jnp.dot(win, w2_ref[3 * kh + kw],
                                preferred_element_type=jnp.float32)
    y2 = jnp.maximum(acc + b2_ref[...], 0.0)                     # (HW, Cmp) f32

    # ---- conv3 (1x1, bn3 scale pre-folded) + bias ----------------------------
    y3 = jnp.dot(y2.astype(jnp.bfloat16), w3_ref[...],
                 preferred_element_type=jnp.float32)
    y3 = y3 + b3_ref[...]                                        # (HW, Cop) f32

    # ---- residual add + relu (padded extra channels of x are zero) -----------
    o_ref[0] = jnp.maximum(y3 + x.astype(jnp.float32), 0.0).astype(o_ref.dtype)


def bottleneck_forward(x_nchw, params, *, out_dtype=jnp.float32):
    """x_nchw: (N, Cin, H, W) f32; params: dict of folded (unpadded) weights.

    out_dtype=jnp.bfloat16 halves HBM writeback (worth it on v5e) when the
    consumer tolerates a bf16 activation.
    """
    N, Cin, H, W = x_nchw.shape
    Cm = params["w1"].shape[1]
    Cout = params["w3"].shape[1]
    assert Cout == Cin, "downsample=None requires in_channels == out_channels*4"
    assert W % 8 == 0, "W must be a multiple of 8 for tile-aligned scratch stores"
    HW = H * W
    Cp = _round_up_128(Cin)     # lane-dense input/output channels
    Cmp = _round_up_128(Cm)     # lane-dense mid channels
    Cop = _round_up_128(Cout)
    assert Cop == Cp

    # NCHW -> NHWC, channel-pad to a 128 multiple, flatten spatial, bf16.
    x = jnp.transpose(x_nchw, (0, 2, 3, 1)).astype(jnp.float32)
    x = jnp.pad(x, ((0, 0), (0, 0), (0, 0), (0, Cp - Cin)))
    x = x.reshape(N, HW, Cp).astype(jnp.bfloat16)

    # Zero-pad weights to lane-dense channel counts, fold the (inference-mode)
    # BN scales into the conv weights, cast to bf16.  Padded channels stay
    # exactly zero end-to-end (biases pad with zeros and relu(0) = 0).
    s1 = jnp.pad(params["s1"], ((0, 0), (0, Cmp - Cm)))
    s2 = jnp.pad(params["s2"], ((0, 0), (0, Cmp - Cm)))
    s3 = jnp.pad(params["s3"], ((0, 0), (0, Cop - Cout)))
    w1 = jnp.pad(params["w1"], ((0, Cp - Cin), (0, Cmp - Cm)))
    w1 = (w1 * s1).astype(jnp.bfloat16)                         # (Cp, Cmp)
    w2 = jnp.pad(params["w2"], ((0, 0), (0, 0), (0, Cmp - Cm), (0, Cmp - Cm)))
    w2 = (w2 * s2[0]).reshape(9, Cmp, Cmp).astype(jnp.bfloat16)  # HWIO taps
    w3 = jnp.pad(params["w3"], ((0, Cmp - Cm), (0, Cop - Cout)))
    w3 = (w3 * s3).astype(jnp.bfloat16)                         # (Cmp, Cop)

    b1 = jnp.pad(params["b1"], ((0, 0), (0, Cmp - Cm))).astype(jnp.float32)
    b2 = jnp.pad(params["b2"], ((0, 0), (0, Cmp - Cm))).astype(jnp.float32)
    b3 = jnp.pad(params["b3"], ((0, 0), (0, Cop - Cout))).astype(jnp.float32)

    kernel = functools.partial(bottleneck_kernel, H=H, W=W)

    # Grid-invariant operands: constant index_map + single buffering (no point
    # double-buffering weights whose block never changes).
    def const_spec(shape):
        return pl.BlockSpec(shape, lambda n: (0,) * len(shape),
                            pipeline_mode=pl.Buffered(buffer_count=1))

    out = pl.pallas_call(
        kernel,
        out_shape=jax.ShapeDtypeStruct((N, HW, Cop), out_dtype),
        grid_spec=pltpu.PrefetchScalarGridSpec(
            num_scalar_prefetch=0,
            grid=(N,),
            in_specs=[
                pl.BlockSpec((1, HW, Cp), lambda n: (n, 0, 0)),   # x
                const_spec((Cp, Cmp)),                            # w1 (scaled)
                const_spec((1, Cmp)),                             # b1
                const_spec((9, Cmp, Cmp)),                        # w2 (scaled)
                const_spec((1, Cmp)),                             # b2
                const_spec((Cmp, Cop)),                           # w3 (scaled)
                const_spec((1, Cop)),                             # b3
            ],
            out_specs=pl.BlockSpec((1, HW, Cop), lambda n: (n, 0, 0)),
            scratch_shapes=[pltpu.VMEM((H + 2, W + 16, Cmp), jnp.bfloat16)],
        ),
        compiler_params=pltpu.CompilerParams(
            dimension_semantics=("parallel",),
            vmem_limit_bytes=48 * 1024 * 1024),
    )(x, w1, b1, w2, b2, w3, b3)

    out = out.reshape(N, H, W, Cop)[:, :, :, :Cout]
    return jnp.transpose(out, (0, 3, 1, 2))                      # back to NCHW


def make_params(key, in_channels, out_channels):
    """Deterministic synthetic params; BN folded to scale/bias (eps=1e-5)."""
    expansion = 4
    cm = out_channels
    cout = out_channels * expansion
    eps = 1e-5
    ks = jax.random.split(key, 12)

    def bn_fold(kg, kb, km, kv, c):
        gamma = 1.0 + 0.1 * jax.random.normal(kg, (c,), jnp.float32)
        beta = 0.1 * jax.random.normal(kb, (c,), jnp.float32)
        mean = 0.1 * jax.random.normal(km, (c,), jnp.float32)
        var = 1.0 + 0.1 * jnp.abs(jax.random.normal(kv, (c,), jnp.float32))
        scale = gamma / jnp.sqrt(var + eps)
        bias = beta - mean * scale
        return scale.reshape(1, c), bias.reshape(1, c)

    w1 = 0.1 * jax.random.normal(ks[0], (in_channels, cm), jnp.float32)   # 1x1, IO
    w2 = 0.1 * jax.random.normal(ks[1], (3, 3, cm, cm), jnp.float32)      # 3x3, HWIO
    w3 = 0.1 * jax.random.normal(ks[2], (cm, cout), jnp.float32)          # 1x1, IO
    s1, b1 = bn_fold(ks[3], ks[4], ks[5], ks[6], cm)
    s2, b2 = bn_fold(ks[7], ks[8], ks[9], ks[10], cm)
    s3, b3 = bn_fold(*jax.random.split(ks[11], 4), cout)
    return dict(w1=w1, s1=s1, b1=b1, w2=w2, s2=s2, b2=b2, w3=w3, s3=s3, b3=b3)


def reference_forward(x_nchw, params, *, quantize_bf16):
    """Pure-JAX NHWC reference.  With quantize_bf16=True it mirrors the kernel's
    quantization points (bf16 activations/weights with BN scales folded into the
    weights before the bf16 cast, f32 accumulation) for a tight comparison."""
    f32 = jnp.float32
    if quantize_bf16:
        q = lambda a: a.astype(jnp.bfloat16).astype(f32)
        w1 = q(params["w1"] * params["s1"][0])
        w2 = q(params["w2"] * params["s2"][0])
        w3 = q(params["w3"] * params["s3"][0])
        s1 = s2 = s3 = 1.0
        qa = q
    else:
        w1, w2, w3 = params["w1"], params["w2"], params["w3"]
        s1, s2, s3 = params["s1"][0], params["s2"][0], params["s3"][0]
        qa = lambda a: a.astype(f32)
    x = qa(jnp.transpose(x_nchw, (0, 2, 3, 1)).astype(f32))
    y = jnp.einsum("nhwc,cd->nhwd", x, w1)
    y = jnp.maximum(y * s1 + params["b1"][0], 0.0)
    y = lax.conv_general_dilated(
        qa(y), w2, window_strides=(1, 1), padding="SAME",
        dimension_numbers=("NHWC", "HWIO", "NHWC"))
    y = jnp.maximum(y * s2 + params["b2"][0], 0.0)
    y = jnp.einsum("nhwc,cd->nhwd", qa(y), w3)
    y = y * s3 + params["b3"][0]
    y = jnp.maximum(y + x, 0.0)
    return jnp.transpose(y, (0, 3, 1, 2))


if __name__ == "__main__":
    # Small shapes consistent with the module: out_channels=4, expansion=4
    # => in_channels = 16 (so the identity residual is shape-compatible).
    N, in_channels, out_channels, H, W = 2, 16, 4, 16, 16

    key = jax.random.PRNGKey(0)
    kx, kp = jax.random.split(key)
    x = jax.random.normal(kx, (N, in_channels, H, W), jnp.float32)
    params = make_params(kp, in_channels, out_channels)

    out = bottleneck_forward(x, params)
    out = jax.block_until_ready(out)
    assert out.shape == (N, out_channels * 4, H, W)

    # Tight check vs a reference matched to the kernel's quantization points.
    ref_bf16 = reference_forward(x, params, quantize_bf16=True)
    assert jnp.allclose(out, ref_bf16, rtol=2e-3, atol=2e-3), \
        "mismatch vs bf16-matched JAX reference"

    # Loose sanity check vs the full-f32 module semantics.
    ref_f32 = reference_forward(x, params, quantize_bf16=False)
    assert jnp.allclose(out, ref_f32, rtol=5e-2, atol=5e-2), \
        "mismatch vs f32 JAX reference"

    print("KERNEL_OK")
</pallas_src>

<mosaic_0001>
module attributes {stable_mosaic.version = 11 : i64} {
  func.func @bottleneck_kernel(%arg0: i32, %arg1: memref<1x256x128xbf16, #tpu.memory_space<vmem>>, %arg2: memref<128x128xbf16, #tpu.memory_space<vmem>>, %arg3: memref<1x128xf32, #tpu.memory_space<vmem>>, %arg4: memref<9x128x128xbf16, #tpu.memory_space<vmem>>, %arg5: memref<1x128xf32, #tpu.memory_space<vmem>>, %arg6: memref<128x128xbf16, #tpu.memory_space<vmem>>, %arg7: memref<1x128xf32, #tpu.memory_space<vmem>>, %arg8: memref<1x256x128xf32, #tpu.memory_space<vmem>>, %arg9: memref<18x32x128xbf16, #tpu.memory_space<vmem>>) attributes {dimension_semantics = [#tpu.dimension_semantics<parallel>], iteration_bounds = array<i64: 2>, scalar_prefetch = 0 : i64, scratch_operands = 1 : i64, tpu.core_type = #tpu.core_type<tc>, window_params = [{transform_indices = @transform_0, window_bounds = array<i64: 1, 256, 128>}, {pipeline_mode = #tpu.pipeline_mode<synchronous>, transform_indices = @transform_1, window_bounds = array<i64: 128, 128>}, {pipeline_mode = #tpu.pipeline_mode<synchronous>, transform_indices = @transform_2, window_bounds = array<i64: 1, 128>}, {pipeline_mode = #tpu.pipeline_mode<synchronous>, transform_indices = @transform_3, window_bounds = array<i64: 9, 128, 128>}, {pipeline_mode = #tpu.pipeline_mode<synchronous>, transform_indices = @transform_4, window_bounds = array<i64: 1, 128>}, {pipeline_mode = #tpu.pipeline_mode<synchronous>, transform_indices = @transform_5, window_bounds = array<i64: 128, 128>}, {pipeline_mode = #tpu.pipeline_mode<synchronous>, transform_indices = @transform_6, window_bounds = array<i64: 1, 128>}, {transform_indices = @transform_7, window_bounds = array<i64: 1, 256, 128>}]} {
    %c0 = arith.constant 0 : index
    %c0_0 = arith.constant 0 : index
    %c0_1 = arith.constant 0 : index
    %0 = vector.load %arg1[%c0, %c0_0, %c0_1] : memref<1x256x128xbf16, #tpu.memory_space<vmem>>, vector<1x256x128xbf16>
    %1 = vector.shape_cast %0 : vector<1x256x128xbf16> to vector<256x128xbf16>
    %c0_2 = arith.constant 0 : index
    %c0_3 = arith.constant 0 : index
    %2 = vector.load %arg2[%c0_2, %c0_3] : memref<128x128xbf16, #tpu.memory_space<vmem>>, vector<128x128xbf16>
    %cst = arith.constant dense<0.000000e+00> : vector<256x128xf32>
    %3 = tpu.matmul %1, %2, %cst {dimension_numbers = #tpu.dot_dimension_numbers<[1], [0], [0], [1], [0, 0, 1, 1], [], []>} : vector<256x128xbf16>, vector<128x128xbf16>, vector<256x128xf32> -> vector<256x128xf32>
    %c0_4 = arith.constant 0 : index
    %c0_5 = arith.constant 0 : index
    %4 = vector.load %arg3[%c0_4, %c0_5] : memref<1x128xf32, #tpu.memory_space<vmem>>, vector<1x128xf32>
    %5 = vector.broadcast %4 : vector<1x128xf32> to vector<256x128xf32>
    %6 = arith.addf %3, %5 : vector<256x128xf32>
    %cst_6 = arith.constant 0.000000e+00 : f32
    %7 = vector.broadcast %cst_6 : f32 to vector<256x128xf32>
    %8 = arith.maximumf %6, %7 : vector<256x128xf32>
    %9 = arith.truncf %8 : vector<256x128xf32> to vector<256x128xbf16>
    %10 = vector.shape_cast %9 : vector<256x128xbf16> to vector<16x16x128xbf16>
    %cst_7 = arith.constant 0.000000e+00 : bf16
    %11 = vector.broadcast %cst_7 : bf16 to vector<1x32x128xbf16>
    %cst_8 = arith.constant 0.000000e+00 : bf16
    %12 = vector.broadcast %cst_8 : bf16 to vector<16x8x128xbf16>
    %c0_9 = arith.constant 0 : index
    %c0_10 = arith.constant 0 : index
    %c0_11 = arith.constant 0 : index
    %13 = vector.load %arg9[%c0_9, %c0_10, %c0_11] : memref<18x32x128xbf16, #tpu.memory_space<vmem>>, vector<1x32x128xbf16>
    tpu.vector_store %arg9[%c0_9, %c0_10, %c0_11], %11 {strides = array<i32>} : memref<18x32x128xbf16, #tpu.memory_space<vmem>>, vector<1x32x128xbf16>,
    %c17 = arith.constant 17 : index
    %c0_12 = arith.constant 0 : index
    %c0_13 = arith.constant 0 : index
    %14 = vector.load %arg9[%c17, %c0_12, %c0_13] : memref<18x32x128xbf16, #tpu.memory_space<vmem>>, vector<1x32x128xbf16>
    tpu.vector_store %arg9[%c17, %c0_12, %c0_13], %11 {strides = array<i32>} : memref<18x32x128xbf16, #tpu.memory_space<vmem>>, vector<1x32x128xbf16>,
    %c1 = arith.constant 1 : index
    %c0_14 = arith.constant 0 : index
    %c0_15 = arith.constant 0 : index
    %15 = vector.load %arg9[%c1, %c0_14, %c0_15] : memref<18x32x128xbf16, #tpu.memory_space<vmem>>, vector<16x8x128xbf16>
    tpu.vector_store %arg9[%c1, %c0_14, %c0_15], %12 {strides = array<i32>} : memref<18x32x128xbf16, #tpu.memory_space<vmem>>, vector<16x8x128xbf16>,
    %c1_16 = arith.constant 1 : index
    %c24 = arith.constant 24 : index
    %c0_17 = arith.constant 0 : index
    %16 = vector.load %arg9[%c1_16, %c24, %c0_17] : memref<18x32x128xbf16, #tpu.memory_space<vmem>>, vector<16x8x128xbf16>
    tpu.vector_store %arg9[%c1_16, %c24, %c0_17], %12 {strides = array<i32>} : memref<18x32x128xbf16, #tpu.memory_space<vmem>>, vector<16x8x128xbf16>,
    %c1_18 = arith.constant 1 : index
    %c8 = arith.constant 8 : index
    %c0_19 = arith.constant 0 : index
    %17 = vector.load %arg9[%c1_18, %c8, %c0_19] : memref<18x32x128xbf16, #tpu.memory_space<vmem>>, vector<16x16x128xbf16>
    tpu.vector_store %arg9[%c1_18, %c8, %c0_19], %10 {strides = array<i32>} : memref<18x32x128xbf16, #tpu.memory_space<vmem>>, vector<16x16x128xbf16>,
    %cst_20 = arith.constant 0.000000e+00 : f32
    %18 = vector.broadcast %cst_20 : f32 to vector<256x128xf32>
    %c0_21 = arith.constant 0 : index
    %c7 = arith.constant 7 : index
    %c0_22 = arith.constant 0 : index
    %19 = vector.load %arg9[%c0_21, %c7, %c0_22] : memref<18x32x128xbf16, #tpu.memory_space<vmem>>, vector<16x16x128xbf16>
    %20 = vector.shape_cast %19 : vector<16x16x128xbf16> to vector<256x128xbf16>
    %c0_23 = arith.constant 0 : index
    %c0_24 = arith.constant 0 : index
    %c0_25 = arith.constant 0 : index
    %21 = vector.load %arg4[%c0_23, %c0_24, %c0_25] : memref<9x128x128xbf16, #tpu.memory_space<vmem>>, vector<1x128x128xbf16>
    %22 = vector.shape_cast %21 : vector<1x128x128xbf16> to vector<128x128xbf16>
    %cst_26 = arith.constant dense<0.000000e+00> : vector<256x128xf32>
    %23 = tpu.matmul %20, %22, %cst_26 {dimension_numbers = #tpu.dot_dimension_numbers<[1], [0], [0], [1], [0, 0, 1, 1], [], []>} : vector<256x128xbf16>, vector<128x128xbf16>, vector<256x128xf32> -> vector<256x128xf32>
    %24 = arith.addf %18, %23 : vector<256x128xf32>
    %c0_27 = arith.constant 0 : index
    %c8_28 = arith.constant 8 : index
    %c0_29 = arith.constant 0 : index
    %25 = vector.load %arg9[%c0_27, %c8_28, %c0_29] : memref<18x32x128xbf16, #tpu.memory_space<vmem>>, vector<16x16x128xbf16>
    %26 = vector.shape_cast %25 : vector<16x16x128xbf16> to vector<256x128xbf16>
    %c1_30 = arith.constant 1 : index
    %c0_31 = arith.constant 0 : index
    %c0_32 = arith.constant 0 : index
    %27 = vector.load %arg4[%c1_30, %c0_31, %c0_32] : memref<9x128x128xbf16, #tpu.memory_space<vmem>>, vector<1x128x128xbf16>
    %28 = vector.shape_cast %27 : vector<1x128x128xbf16> to vector<128x128xbf16>
    %cst_33 = arith.constant dense<0.000000e+00> : vector<256x128xf32>
    %29 = tpu.matmul %26, %28, %cst_33 {dimension_numbers = #tpu.dot_dimension_numbers<[1], [0], [0], [1], [0, 0, 1, 1], [], []>} : vector<256x128xbf16>, vector<128x128xbf16>, vector<256x128xf32> -> vector<256x128xf32>
    %30 = arith.addf %24, %29 : vector<256x128xf32>
    %c0_34 = arith.constant 0 : index
    %c9 = arith.constant 9 : index
    %c0_35 = arith.constant 0 : index
    %31 = vector.load %arg9[%c0_34, %c9, %c0_35] : memref<18x32x128xbf16, #tpu.memory_space<vmem>>, vector<16x16x128xbf16>
    %32 = vector.shape_cast %31 : vector<16x16x128xbf16> to vector<256x128xbf16>
    %c2 = arith.constant 2 : index
    %c0_36 = arith.constant 0 : index
    %c0_37 = arith.constant 0 : index
    %33 = vector.load %arg4[%c2, %c0_36, %c0_37] : memref<9x128x128xbf16, #tpu.memory_space<vmem>>, vector<1x128x128xbf16>
    %34 = vector.shape_cast %33 : vector<1x128x128xbf16> to vector<128x128xbf16>
    %cst_38 = arith.constant dense<0.000000e+00> : vector<256x128xf32>
    %35 = tpu.matmul %32, %34, %cst_38 {dimension_numbers = #tpu.dot_dimension_numbers<[1], [0], [0], [1], [0, 0, 1, 1], [], []>} : vector<256x128xbf16>, vector<128x128xbf16>, vector<256x128xf32> -> vector<256x128xf32>
    %36 = arith.addf %30, %35 : vector<256x128xf32>
    %c1_39 = arith.constant 1 : index
    %c7_40 = arith.constant 7 : index
    %c0_41 = arith.constant 0 : index
    %37 = vector.load %arg9[%c1_39, %c7_40, %c0_41] : memref<18x32x128xbf16, #tpu.memory_space<vmem>>, vector<16x16x128xbf16>
    %38 = vector.shape_cast %37 : vector<16x16x128xbf16> to vector<256x128xbf16>
    %c3 = arith.constant 3 : index
    %c0_42 = arith.constant 0 : index
    %c0_43 = arith.constant 0 : index
    %39 = vector.load %arg4[%c3, %c0_42, %c0_43] : memref<9x128x128xbf16, #tpu.memory_space<vmem>>, vector<1x128x128xbf16>
    %40 = vector.shape_cast %39 : vector<1x128x128xbf16> to vector<128x128xbf16>
    %cst_44 = arith.constant dense<0.000000e+00> : vector<256x128xf32>
    %41 = tpu.matmul %38, %40, %cst_44 {dimension_numbers = #tpu.dot_dimension_numbers<[1], [0], [0], [1], [0, 0, 1, 1], [], []>} : vector<256x128xbf16>, vector<128x128xbf16>, vector<256x128xf32> -> vector<256x128xf32>
    %42 = arith.addf %36, %41 : vector<256x128xf32>
    %c1_45 = arith.constant 1 : index
    %c8_46 = arith.constant 8 : index
    %c0_47 = arith.constant 0 : index
    %43 = vector.load %arg9[%c1_45, %c8_46, %c0_47] : memref<18x32x128xbf16, #tpu.memory_space<vmem>>, vector<16x16x128xbf16>
    %44 = vector.shape_cast %43 : vector<16x16x128xbf16> to vector<256x128xbf16>
    %c4 = arith.constant 4 : index
    %c0_48 = arith.constant 0 : index
    %c0_49 = arith.constant 0 : index
    %45 = vector.load %arg4[%c4, %c0_48, %c0_49] : memref<9x128x128xbf16, #tpu.memory_space<vmem>>, vector<1x128x128xbf16>
    %46 = vector.shape_cast %45 : vector<1x128x128xbf16> to vector<128x128xbf16>
    %cst_50 = arith.constant dense<0.000000e+00> : vector<256x128xf32>
    %47 = tpu.matmul %44, %46, %cst_50 {dimension_numbers = #tpu.dot_dimension_numbers<[1], [0], [0], [1], [0, 0, 1, 1], [], []>} : vector<256x128xbf16>, vector<128x128xbf16>, vector<256x128xf32> -> vector<256x128xf32>
    %48 = arith.addf %42, %47 : vector<256x128xf32>
    %c1_51 = arith.constant 1 : index
    %c9_52 = arith.constant 9 : index
    %c0_53 = arith.constant 0 : index
    %49 = vector.load %arg9[%c1_51, %c9_52, %c0_53] : memref<18x32x128xbf16, #tpu.memory_space<vmem>>, vector<16x16x128xbf16>
    %50 = vector.shape_cast %49 : vector<16x16x128xbf16> to vector<256x128xbf16>
    %c5 = arith.constant 5 : index
    %c0_54 = arith.constant 0 : index
    %c0_55 = arith.constant 0 : index
    %51 = vector.load %arg4[%c5, %c0_54, %c0_55] : memref<9x128x128xbf16, #tpu.memory_space<vmem>>, vector<1x128x128xbf16>
    %52 = vector.shape_cast %51 : vector<1x128x128xbf16> to vector<128x128xbf16>
    %cst_56 = arith.constant dense<0.000000e+00> : vector<256x128xf32>
    %53 = tpu.matmul %50, %52, %cst_56 {dimension_numbers = #tpu.dot_dimension_numbers<[1], [0], [0], [1], [0, 0, 1, 1], [], []>} : vector<256x128xbf16>, vector<128x128xbf16>, vector<256x128xf32> -> vector<256x128xf32>
    %54 = arith.addf %48, %53 : vector<256x128xf32>
    %c2_57 = arith.constant 2 : index
    %c7_58 = arith.constant 7 : index
    %c0_59 = arith.constant 0 : index
    %55 = vector.load %arg9[%c2_57, %c7_58, %c0_59] : memref<18x32x128xbf16, #tpu.memory_space<vmem>>, vector<16x16x128xbf16>
    %56 = vector.shape_cast %55 : vector<16x16x128xbf16> to vector<256x128xbf16>
    %c6 = arith.constant 6 : index
    %c0_60 = arith.constant 0 : index
    %c0_61 = arith.constant 0 : index
    %57 = vector.load %arg4[%c6, %c0_60, %c0_61] : memref<9x128x128xbf16, #tpu.memory_space<vmem>>, vector<1x128x128xbf16>
    %58 = vector.shape_cast %57 : vector<1x128x128xbf16> to vector<128x128xbf16>
    %cst_62 = arith.constant dense<0.000000e+00> : vector<256x128xf32>
    %59 = tpu.matmul %56, %58, %cst_62 {dimension_numbers = #tpu.dot_dimension_numbers<[1], [0], [0], [1], [0, 0, 1, 1], [], []>} : vector<256x128xbf16>, vector<128x128xbf16>, vector<256x128xf32> -> vector<256x128xf32>
    %60 = arith.addf %54, %59 : vector<256x128xf32>
    %c2_63 = arith.constant 2 : index
    %c8_64 = arith.constant 8 : index
    %c0_65 = arith.constant 0 : index
    %61 = vector.load %arg9[%c2_63, %c8_64, %c0_65] : memref<18x32x128xbf16, #tpu.memory_space<vmem>>, vector<16x16x128xbf16>
    %62 = vector.shape_cast %61 : vector<16x16x128xbf16> to vector<256x128xbf16>
    %c7_66 = arith.constant 7 : index
    %c0_67 = arith.constant 0 : index
    %c0_68 = arith.constant 0 : index
    %63 = vector.load %arg4[%c7_66, %c0_67, %c0_68] : memref<9x128x128xbf16, #tpu.memory_space<vmem>>, vector<1x128x128xbf16>
    %64 = vector.shape_cast %63 : vector<1x128x128xbf16> to vector<128x128xbf16>
    %cst_69 = arith.constant dense<0.000000e+00> : vector<256x128xf32>
    %65 = tpu.matmul %62, %64, %cst_69 {dimension_numbers = #tpu.dot_dimension_numbers<[1], [0], [0], [1], [0, 0, 1, 1], [], []>} : vector<256x128xbf16>, vector<128x128xbf16>, vector<256x128xf32> -> vector<256x128xf32>
    %66 = arith.addf %60, %65 : vector<256x128xf32>
    %c2_70 = arith.constant 2 : index
    %c9_71 = arith.constant 9 : index
    %c0_72 = arith.constant 0 : index
    %67 = vector.load %arg9[%c2_70, %c9_71, %c0_72] : memref<18x32x128xbf16, #tpu.memory_space<vmem>>, vector<16x16x128xbf16>
    %68 = vector.shape_cast %67 : vector<16x16x128xbf16> to vector<256x128xbf16>
    %c8_73 = arith.constant 8 : index
    %c0_74 = arith.constant 0 : index
    %c0_75 = arith.constant 0 : index
    %69 = vector.load %arg4[%c8_73, %c0_74, %c0_75] : memref<9x128x128xbf16, #tpu.memory_space<vmem>>, vector<1x128x128xbf16>
    %70 = vector.shape_cast %69 : vector<1x128x128xbf16> to vector<128x128xbf16>
    %cst_76 = arith.constant dense<0.000000e+00> : vector<256x128xf32>
    %71 = tpu.matmul %68, %70, %cst_76 {dimension_numbers = #tpu.dot_dimension_numbers<[1], [0], [0], [1], [0, 0, 1, 1], [], []>} : vector<256x128xbf16>, vector<128x128xbf16>, vector<256x128xf32> -> vector<256x128xf32>
    %72 = arith.addf %66, %71 : vector<256x128xf32>
    %c0_77 = arith.constant 0 : index
    %c0_78 = arith.constant 0 : index
    %73 = vector.load %arg5[%c0_77, %c0_78] : memref<1x128xf32, #tpu.memory_space<vmem>>, vector<1x128xf32>
    %74 = vector.broadcast %73 : vector<1x128xf32> to vector<256x128xf32>
    %75 = arith.addf %72, %74 : vector<256x128xf32>
    %cst_79 = arith.constant 0.000000e+00 : f32
    %76 = vector.broadcast %cst_79 : f32 to vector<256x128xf32>
    %77 = arith.maximumf %75, %76 : vector<256x128xf32>
    %78 = arith.truncf %77 : vector<256x128xf32> to vector<256x128xbf16>
    %c0_80 = arith.constant 0 : index
    %c0_81 = arith.constant 0 : index
    %79 = vector.load %arg6[%c0_80, %c0_81] : memref<128x128xbf16, #tpu.memory_space<vmem>>, vector<128x128xbf16>
    %cst_82 = arith.constant dense<0.000000e+00> : vector<256x128xf32>
    %80 = tpu.matmul %78, %79, %cst_82 {dimension_numbers = #tpu.dot_dimension_numbers<[1], [0], [0], [1], [0, 0, 1, 1], [], []>} : vector<256x128xbf16>, vector<128x128xbf16>, vector<256x128xf32> -> vector<256x128xf32>
    %c0_83 = arith.constant 0 : index
    %c0_84 = arith.constant 0 : index
    %81 = vector.load %arg7[%c0_83, %c0_84] : memref<1x128xf32, #tpu.memory_space<vmem>>, vector<1x128xf32>
    %82 = vector.broadcast %81 : vector<1x128xf32> to vector<256x128xf32>
    %83 = arith.addf %80, %82 : vector<256x128xf32>
    %84 = arith.extf %1 : vector<256x128xbf16> to vector<256x128xf32>
    %85 = arith.addf %83, %84 : vector<256x128xf32>
    %cst_85 = arith.constant 0.000000e+00 : f32
    %86 = vector.broadcast %cst_85 : f32 to vector<256x128xf32>
    %87 = arith.maximumf %85, %86 : vector<256x128xf32>
    %c0_86 = arith.constant 0 : index
    %c0_87 = arith.constant 0 : index
    %c0_88 = arith.constant 0 : index
    %88 = vector.load %arg8[%c0_86, %c0_87, %c0_88] : memref<1x256x128xf32, #tpu.memory_space<vmem>>, vector<1x256x128xf32>
    %89 = vector.shape_cast %88 : vector<1x256x128xf32> to vector<256x128xf32>
    %90 = vector.shape_cast %87 : vector<256x128xf32> to vector<1x256x128xf32>
    tpu.vector_store %arg8[%c0_86, %c0_87, %c0_88], %90 {strides = array<i32>} : memref<1x256x128xf32, #tpu.memory_space<vmem>>, vector<1x256x128xf32>,
    return
  }
  func.func @transform_0(%arg0: i32) -> (i32, i32, i32) {
    %c0_i32 = arith.constant 0 : i32
    %c0_i32_0 = arith.constant 0 : i32
    %c0_i32_1 = arith.constant 0 : i32
    return %arg0, %c0_i32, %c0_i32_0 : i32, i32, i32
  }
  func.func @transform_1(%arg0: i32) -> (i32, i32) {
    %c0_i32 = arith.constant 0 : i32
    %c0_i32_0 = arith.constant 0 : i32
    %c0_i32_1 = arith.constant 0 : i32
    return %c0_i32, %c0_i32_0 : i32, i32
  }
  func.func @transform_2(%arg0: i32) -> (i32, i32) {
    %c0_i32 = arith.constant 0 : i32
    %c0_i32_0 = arith.constant 0 : i32
    %c0_i32_1 = arith.constant 0 : i32
    return %c0_i32, %c0_i32_0 : i32, i32
  }
  func.func @transform_3(%arg0: i32) -> (i32, i32, i32) {
    %c0_i32 = arith.constant 0 : i32
    %c0_i32_0 = arith.constant 0 : i32
    %c0_i32_1 = arith.constant 0 : i32
    %c0_i32_2 = arith.constant 0 : i32
    return %c0_i32, %c0_i32_0, %c0_i32_1 : i32, i32, i32
  }
  func.func @transform_4(%arg0: i32) -> (i32, i32) {
    %c0_i32 = arith.constant 0 : i32
    %c0_i32_0 = arith.constant 0 : i32
    %c0_i32_1 = arith.constant 0 : i32
    return %c0_i32, %c0_i32_0 : i32, i32
  }
  func.func @transform_5(%arg0: i32) -> (i32, i32) {
    %c0_i32 = arith.constant 0 : i32
    %c0_i32_0 = arith.constant 0 : i32
    %c0_i32_1 = arith.constant 0 : i32
    return %c0_i32, %c0_i32_0 : i32, i32
  }
  func.func @transform_6(%arg0: i32) -> (i32, i32) {
    %c0_i32 = arith.constant 0 : i32
    %c0_i32_0 = arith.constant 0 : i32
    %c0_i32_1 = arith.constant 0 : i32
    return %c0_i32, %c0_i32_0 : i32, i32
  }
  func.func @transform_7(%arg0: i32) -> (i32, i32, i32) {
    %c0_i32 = arith.constant 0 : i32
    %c0_i32_0 = arith.constant 0 : i32
    %c0_i32_1 = arith.constant 0 : i32
    return %arg0, %c0_i32, %c0_i32_0 : i32, i32, i32
  }
}

</mosaic_0001>

<llo_original>
// kernel: tpu_custom_call.1
$region0: #{tpu_custom_call.1}
  #allocation0 [shape = 'u32[]', space=smem, size = 0x4, offset = 0x4, fixed_abs, tag = 'smem constant byte address 0x4 - core index']
  #allocation1 [shape = 'u32[144,128]{1,0:T(1,128)}', space=vmem, size = 0x12000, scoped, tag = 'internal scratch']
  #allocation2 [shape = 'bf16[18,32,128]{2,1,0:T(16,128)(2,1)}', space=vmem, size = 0x24000, scoped, tag = 'scratch operand']
  %s0 = inlined_call_operand.hbm [shape: bf16[2,256,128], index: 0, kind: input, shape index: {}]
  %s1 = inlined_call_operand.hbm [shape: bf16[128,128], index: 1, kind: input, shape index: {}]
  %s2 = inlined_call_operand.vmem [shape: f32[1,128], index: 2, kind: input, shape index: {}]
  %s3 = inlined_call_operand.hbm [shape: bf16[9,128,128], index: 3, kind: input, shape index: {}]
  %s4 = inlined_call_operand.vmem [shape: f32[1,128], index: 4, kind: input, shape index: {}]
  %s5 = inlined_call_operand.hbm [shape: bf16[128,128], index: 5, kind: input, shape index: {}]
  %s6 = inlined_call_operand.vmem [shape: f32[1,128], index: 6, kind: input, shape index: {}]
  %s7 = inlined_call_operand.hbm [shape: f32[2,256,128], index: 7, kind: output, shape index: {}]
  %s8 = sld [smem:[#allocation0]]
  $region77: #{tpu_custom_call.1} parent=0
    _
  %s10 = ssub.s32 1, %s8
  %s11 = scalar_select 0, %s10, %s8
  $region1: #{tpu_custom_call.1} parent=0
    #allocation3 [shape = 'u8[131072]{0}', space=vmem, size = 0x20000, scoped, tag = 'input window, operand 0']
    #allocation4 [shape = 's32[2]{0}', space=sflag, size = 0x8, scoped, tag = 'scoped memory for tpu_custom_call.1']
    #allocation5 [shape = 's32[2]{0}', space=sflag, size = 0x8, scoped, tag = 'scoped memory for tpu_custom_call.1']
    #allocation6 [shape = 'u8[32768]{0}', space=vmem, size = 0x8000, scoped, tag = 'input window, operand 1, single buffered']
    #allocation7 [shape = 's32[1]{0}', space=sflag, size = 0x4, scoped, tag = 'scoped memory for tpu_custom_call.1']
    #allocation8 [shape = 'u8[294912]{0}', space=vmem, size = 0x48000, scoped, tag = 'input window, operand 3, single buffered']
    #allocation9 [shape = 'u8[32768]{0}', space=vmem, size = 0x8000, scoped, tag = 'input window, operand 5, single buffered']
    #allocation10 [shape = 's32[1]{0}', space=sflag, size = 0x4, scoped, tag = 'scoped memory for tpu_custom_call.1']
    #allocation11 [shape = 'u8[262144]{0}', space=vmem, size = 0x40000, scoped, tag = 'output window, operand 0']
    %12 = vsyncpa [#allocation4], 0
    %s13 = scalar_lea.sflag [#allocation4], 1
    %14 = vsyncpa %s13, 0
    %15 = vsyncpa [#allocation7], 0
    %16 = vsyncpa [#allocation10], 0
    %17 = vsyncpa [#allocation5], 0
    %s18 = scalar_lea.sflag [#allocation5], 1
    %19 = vsyncpa %s18, 0
    loop: start=0, step=1, limit=4
    $region2: #{tpu_custom_call.1} parent=1 // loop_pre_header
      _
    $region3: #{tpu_custom_call.1} parent=1 // loop_header
      %s21 = sphi 0, %s25
      %p22 = scmp.ge.s32.totalorder %s21, 4
      %s31 = sphi 0, %s33
      %s34 = sphi 0, %s31
      %s35 = sphi 0, %s34
      %s51 = sphi 0, %s35
      %s55 = sphi 0, %s55
      %s57 = sphi 0, %s55
      %s58 = sphi 0, %s57
      %s72 = sphi 0, %s58
      %s76 = sphi 0, %s76
      %s78 = sphi 0, %s76
      %s79 = sphi 0, %s78
      %s93 = sphi 0, %s79
      %s97 = sphi 0, %s97
      %s99 = sphi 0, %s97
      %s100 = sphi 0, %s99
      %s114 = sphi 0, %s100
      %s118 = sphi 0, %s118
      %s120 = sphi 0, %s118
      %s121 = sphi 0, %s120
      %s135 = sphi 0, %s121
      %s139 = sphi 0, %s139
      %s141 = sphi 0, %s139
      %s142 = sphi 0, %s141
      %s156 = sphi 0, %s142
      %s160 = sphi 0, %s160
      %s162 = sphi 0, %s160
      %s163 = sphi 0, %s162
      %s177 = sphi 0, %s163
      %s183 = sphi 0, %s185
      %s186 = sphi 0, %s183
      %s187 = sphi 0, %s186
      %s203 = sphi 0, %s187
    $region4: #{tpu_custom_call.1} parent=1 // loop_header_branch
      %24 = sbr.rel (%p22) target = $region8
    $region5: #{tpu_custom_call.1} parent=1 // loop_body
      %s26 = ssub.s32 %s21, 1
      %s27 = ssub.s32 %s21, 2
      %s28 = sadd.s32 %s21, 1
      %s29 = ssub.s32 %s21, %s28
      %p30 = scmp.eq.s32.totalorder %s29, 0
      %s32 = sadd.s32 %s31, 1
      %s33 = scalar_select %p30, %s31, %s32
      %p36 = pneg %p30
      %p37 = scmp.eq.s32.totalorder %s21, 1
      %p38 = por %p36, %p37
      %p39 = scmp.ne.s32.totalorder %s31, %s34
      %p40 = scmp.eq.s32.totalorder %s21, 0
      %p41 = por %p39, %p40
      %p42 = scmp.ne.s32.totalorder %s31, %s34
      %p43 = scmp.eq.s32.totalorder %s26, 1
      %p44 = por %p42, %p43
      %p45 = scmp.ne.s32.totalorder %s34, %s35
      %p46 = scmp.eq.s32.totalorder %s26, 0
      %p47 = por %p45, %p46
      %p48 = scmp.ne.s32.totalorder %s34, %s35
      %p49 = scmp.eq.s32.totalorder %s27, 1
      %p50 = por %p48, %p49
      %p52 = scmp.ne.s32.totalorder %s35, %s51
      %p53 = scmp.eq.s32.totalorder %s27, 0
      %p54 = por %p52, %p53
      %s56 = sadd.s32 %s55, 1
      %p59 = scmp.eq.s32.totalorder %s21, 1
      %p60 = scmp.ne.s32.totalorder %s55, %s57
      %p61 = scmp.eq.s32.totalorder %s21, 0
      %p62 = por %p60, %p61
      %p63 = scmp.ne.s32.totalorder %s55, %s57
      %p64 = scmp.eq.s32.totalorder %s26, 1
      %p65 = por %p63, %p64
      %p66 = scmp.ne.s32.totalorder %s57, %s58
      %p67 = scmp.eq.s32.totalorder %s26, 0
      %p68 = por %p66, %p67
      %p69 = scmp.ne.s32.totalorder %s57, %s58
      %p70 = scmp.eq.s32.totalorder %s27, 1
      %p71 = por %p69, %p70
      %p73 = scmp.ne.s32.totalorder %s58, %s72
      %p74 = scmp.eq.s32.totalorder %s27, 0
      %p75 = por %p73, %p74
      %s77 = sadd.s32 %s76, 1
      %p80 = scmp.eq.s32.totalorder %s21, 1
      %p81 = scmp.ne.s32.totalorder %s76, %s78
      %p82 = scmp.eq.s32.totalorder %s21, 0
      %p83 = por %p81, %p82
      %p84 = scmp.ne.s32.totalorder %s76, %s78
      %p85 = scmp.eq.s32.totalorder %s26, 1
      %p86 = por %p84, %p85
      %p87 = scmp.ne.s32.totalorder %s78, %s79
      %p88 = scmp.eq.s32.totalorder %s26, 0
      %p89 = por %p87, %p88
      %p90 = scmp.ne.s32.totalorder %s78, %s79
      %p91 = scmp.eq.s32.totalorder %s27, 1
      %p92 = por %p90, %p91
      %p94 = scmp.ne.s32.totalorder %s79, %s93
      %p95 = scmp.eq.s32.totalorder %s27, 0
      %p96 = por %p94, %p95
      %s98 = sadd.s32 %s97, 1
      %p101 = scmp.eq.s32.totalorder %s21, 1
      %p102 = scmp.ne.s32.totalorder %s97, %s99
      %p103 = scmp.eq.s32.totalorder %s21, 0
      %p104 = por %p102, %p103
      %p105 = scmp.ne.s32.totalorder %s97, %s99
      %p106 = scmp.eq.s32.totalorder %s26, 1
      %p107 = por %p105, %p106
      %p108 = scmp.ne.s32.totalorder %s99, %s100
      %p109 = scmp.eq.s32.totalorder %s26, 0
      %p110 = por %p108, %p109
      %p111 = scmp.ne.s32.totalorder %s99, %s100
      %p112 = scmp.eq.s32.totalorder %s27, 1
      %p113 = por %p111, %p112
      %p115 = scmp.ne.s32.totalorder %s100, %s114
      %p116 = scmp.eq.s32.totalorder %s27, 0
      %p117 = por %p115, %p116
      %s119 = sadd.s32 %s118, 1
      %p122 = scmp.eq.s32.totalorder %s21, 1
      %p123 = scmp.ne.s32.totalorder %s118, %s120
      %p124 = scmp.eq.s32.totalorder %s21, 0
      %p125 = por %p123, %p124
      %p126 = scmp.ne.s32.totalorder %s118, %s120
      %p127 = scmp.eq.s32.totalorder %s26, 1
      %p128 = por %p126, %p127
      %p129 = scmp.ne.s32.totalorder %s120, %s121
      %p130 = scmp.eq.s32.totalorder %s26, 0
      %p131 = por %p129, %p130
      %p132 = scmp.ne.s32.totalorder %s120, %s121
      %p133 = scmp.eq.s32.totalorder %s27, 1
      %p134 = por %p132, %p133
      %p136 = scmp.ne.s32.totalorder %s121, %s135
      %p137 = scmp.eq.s32.totalorder %s27, 0
      %p138 = por %p136, %p137
      %s140 = sadd.s32 %s139, 1
      %p143 = scmp.eq.s32.totalorder %s21, 1
      %p144 = scmp.ne.s32.totalorder %s139, %s141
      %p145 = scmp.eq.s32.totalorder %s21, 0
      %p146 = por %p144, %p145
      %p147 = scmp.ne.s32.totalorder %s139, %s141
      %p148 = scmp.eq.s32.totalorder %s26, 1
      %p149 = por %p147, %p148
      %p150 = scmp.ne.s32.totalorder %s141, %s142
      %p151 = scmp.eq.s32.totalorder %s26, 0
      %p152 = por %p150, %p151
      %p153 = scmp.ne.s32.totalorder %s141, %s142
      %p154 = scmp.eq.s32.totalorder %s27, 1
      %p155 = por %p153, %p154
      %p157 = scmp.ne.s32.totalorder %s142, %s156
      %p158 = scmp.eq.s32.totalorder %s27, 0
      %p159 = por %p157, %p158
      %s161 = sadd.s32 %s160, 1
      %p164 = scmp.eq.s32.totalorder %s21, 1
      %p165 = scmp.ne.s32.totalorder %s160, %s162
      %p166 = scmp.eq.s32.totalorder %s21, 0
      %p167 = por %p165, %p166
      %p168 = scmp.ne.s32.totalorder %s160, %s162
      %p169 = scmp.eq.s32.totalorder %s26, 1
      %p170 = por %p168, %p169
      %p171 = scmp.ne.s32.totalorder %s162, %s163
      %p172 = scmp.eq.s32.totalorder %s26, 0
      %p173 = por %p171, %p172
      %p174 = scmp.ne.s32.totalorder %s162, %s163
      %p175 = scmp.eq.s32.totalorder %s27, 1
      %p176 = por %p174, %p175
      %p178 = scmp.ne.s32.totalorder %s163, %s177
      %p179 = scmp.eq.s32.totalorder %s27, 0
      %p180 = por %p178, %p179
      %s181 = ssub.s32 %s21, %s28
      %p182 = scmp.eq.s32.totalorder %s181, 0
      %s184 = sadd.s32 %s183, 1
      %s185 = scalar_select %p182, %s183, %s184
      %p188 = pneg %p182
      %p189 = scmp.eq.s32.totalorder %s21, 1
      %p190 = por %p188, %p189
      %p191 = scmp.ne.s32.totalorder %s183, %s186
      %p192 = scmp.eq.s32.totalorder %s21, 0
      %p193 = por %p191, %p192
      %p194 = scmp.ne.s32.totalorder %s183, %s186
      %p195 = scmp.eq.s32.totalorder %s26, 1
      %p196 = por %p194, %p195
      %p197 = scmp.ne.s32.totalorder %s186, %s187
      %p198 = scmp.eq.s32.totalorder %s26, 0
      %p199 = por %p197, %p198
      %p200 = scmp.ne.s32.totalorder %s186, %s187
      %p201 = scmp.eq.s32.totalorder %s27, 1
      %p202 = por %p200, %p201
      %p204 = scmp.ne.s32.totalorder %s187, %s203
      %p205 = scmp.eq.s32.totalorder %s27, 0
      %p206 = por %p204, %p205
      %p207 = scmp.le.s32.totalorder 1, %s21
      %p208 = scmp.lt.s32.totalorder %s21, 3
      %p209 = pnand %p207, %p208
      %p210 = pneg %p209
      // Predicated region
      $region9: #{tpu_custom_call.1} parent=5 // pred_check
        _
      $region10: #{tpu_custom_call.1} parent=5 // pred_check_branch
        %212 = sbr.rel (%p209) target = $region12
      $region11: #{tpu_custom_call.1} parent=5 // pred_region
        %s213 = ssub.s32 %s21, 1
        // Predicated region
        $region13: #{tpu_custom_call.1} parent=11 // pred_check
          %p214 = pneg %p68
        $region14: #{tpu_custom_call.1} parent=11 // pred_check_branch
          %216 = sbr.rel (%p214) target = $region16
        $region15: #{tpu_custom_call.1} parent=11 // pred_region
          %s218 = ssub.s32 1024, 1024
          %219 = vsyncadd [#allocation7], %s218
          %s220 = sshll.u32 [#allocation6], 4
          %s221 = int_to_ptr.vmem [resolvable:$true] %s220
          %226 = dma.hbm_to_vmem [thread:$0]  %s1, 1024, %s221, [#allocation7], 64, 64, 4
        $region16: #{tpu_custom_call.1} parent=11 // pred_fallthru
          _
        // Predicated region
        $region17: #{tpu_custom_call.1} parent=11 // pred_check
          %p227 = pneg %p89
        $region18: #{tpu_custom_call.1} parent=11 // pred_check_branch
          %229 = sbr.rel (%p227) target = $region20
        $region19: #{tpu_custom_call.1} parent=11 // pred_region
          _
        $region20: #{tpu_custom_call.1} parent=11 // pred_fallthru
          _
        // Predicated region
        $region21: #{tpu_custom_call.1} parent=11 // pred_check
          %p230 = pneg %p110
        $region22: #{tpu_custom_call.1} parent=11 // pred_check_branch
          %232 = sbr.rel (%p230) target = $region24
        $region23: #{tpu_custom_call.1} parent=11 // pred_region
          %s234 = ssub.s32 9216, 9216
          %235 = vsyncadd [#allocation7], %s234
          %s236 = sshll.u32 [#allocation8], 4
          %s237 = int_to_ptr.vmem [resolvable:$true] %s236
          %242 = dma.hbm_to_vmem [thread:$0]  %s3, 9216, %s237, [#allocation7], 64, 64, 4
        $region24: #{tpu_custom_call.1} parent=11 // pred_fallthru
          _
        // Predicated region
        $region25: #{tpu_custom_call.1} parent=11 // pred_check
          %p243 = pneg %p131
        $region26: #{tpu_custom_call.1} parent=11 // pred_check_branch
          %245 = sbr.rel (%p243) target = $region28
        $region27: #{tpu_custom_call.1} parent=11 // pred_region
          _
        $region28: #{tpu_custom_call.1} parent=11 // pred_fallthru
          _
        // Predicated region
        $region29: #{tpu_custom_call.1} parent=11 // pred_check
          %p246 = pneg %p152
        $region30: #{tpu_custom_call.1} parent=11 // pred_check_branch
          %248 = sbr.rel (%p246) target = $region32
        $region31: #{tpu_custom_call.1} parent=11 // pred_region
          %s250 = ssub.s32 1024, 1024
          %251 = vsyncadd [#allocation10], %s250
          %s252 = sshll.u32 [#allocation9], 4
          %s253 = int_to_ptr.vmem [resolvable:$true] %s252
          %258 = dma.hbm_to_vmem [thread:$0]  %s5, 1024, %s253, [#allocation10], 64, 64, 4
        $region32: #{tpu_custom_call.1} parent=11 // pred_fallthru
          _
        // Predicated region
        $region33: #{tpu_custom_call.1} parent=11 // pred_check
          %p259 = pneg %p173
        $region34: #{tpu_custom_call.1} parent=11 // pred_check_branch
          %261 = sbr.rel (%p259) target = $region36
        $region35: #{tpu_custom_call.1} parent=11 // pred_region
          _
        $region36: #{tpu_custom_call.1} parent=11 // pred_fallthru
          _
      $region12: #{tpu_custom_call.1} parent=5 // pred_fallthru
        _
      %p262 = scmp.lt.s32.totalorder %s21, 2
      // Predicated region
      $region37: #{tpu_custom_call.1} parent=5 // pred_check
        %p263 = pneg %p262
      $region38: #{tpu_custom_call.1} parent=5 // pred_check_branch
        %265 = sbr.rel (%p263) target = $region40
      $region39: #{tpu_custom_call.1} parent=5 // pred_region
        // Predicated region
        $region41: #{tpu_custom_call.1} parent=39 // pred_check
          %p266 = pneg %p41
        $region42: #{tpu_custom_call.1} parent=39 // pred_check_branch
          %268 = sbr.rel (%p266) target = $region44
        $region43: #{tpu_custom_call.1} parent=39 // pred_region
          %s269 = sand.u32 %s31, 1
          %s270 = scalar_lea.sflag [#allocation4], %s269
          %s271 = sand.u32 %s31, 1
          %s272 = smul.addr %s271, 128
          %s273 = scalar_lea.vmem [#allocation3], %s272
          %s275 = ssub.s32 2048, 2048
          %276 = vsyncadd %s270, %s275
          %s277 = smul.addr %s21, 32
          %s278 = smul.addr %s277, 64
          %s279 = scalar_lea.hbm %s0, %s278
          %s280 = sshll.u32 %s273, 4
          %s281 = int_to_ptr.vmem [resolvable:$true] %s280
          %286 = dma.hbm_to_vmem [thread:$0]  %s279, 2048, %s281, %s270, 64, 64, 4
        $region44: #{tpu_custom_call.1} parent=39 // pred_fallthru
          _
      $region40: #{tpu_custom_call.1} parent=5 // pred_fallthru
        _
      %p287 = scmp.le.s32.totalorder 1, %s21
      %p288 = scmp.lt.s32.totalorder %s21, 3
      %p289 = pnand %p287, %p288
      %p290 = pneg %p289
      // Predicated region
      $region45: #{tpu_custom_call.1} parent=5 // pred_check
        _
      $region46: #{tpu_custom_call.1} parent=5 // pred_check_branch
        %292 = sbr.rel (%p289) target = $region48
      $region47: #{tpu_custom_call.1} parent=5 // pred_region
        %s293 = ssub.s32 %s21, 1
        %s294 = sand.u32 %s34, 1
        %s295 = scalar_lea.sflag [#allocation4], %s294
        %s296 = sand.u32 %s34, 1
        %s297 = smul.addr %s296, 128
        %s298 = scalar_lea.vmem [#allocation3], %s297
        // Predicated region
        $region49: #{tpu_custom_call.1} parent=47 // pred_check
          %p299 = pneg %p47
        $region50: #{tpu_custom_call.1} parent=47 // pred_check_branch
          %301 = sbr.rel (%p299) target = $region52
        $region51: #{tpu_custom_call.1} parent=47 // pred_region
          %302 = dma.done %s295, 2048
        $region52: #{tpu_custom_call.1} parent=47 // pred_fallthru
          _
        // Predicated region
        $region53: #{tpu_custom_call.1} parent=47 // pred_check
          %p303 = pneg %p68
        $region54: #{tpu_custom_call.1} parent=47 // pred_check_branch
          %305 = sbr.rel (%p303) target = $region56
        $region55: #{tpu_custom_call.1} parent=47 // pred_region
          %306 = dma.done [#allocation7], 1024
        $region56: #{tpu_custom_call.1} parent=47 // pred_fallthru
          _
        // Predicated region
        $region57: #{tpu_custom_call.1} parent=47 // pred_check
          %p307 = pneg %p110
        $region58: #{tpu_custom_call.1} parent=47 // pred_check_branch
          %309 = sbr.rel (%p307) target = $region60
        $region59: #{tpu_custom_call.1} parent=47 // pred_region
          %310 = dma.done [#allocation7], 9216
        $region60: #{tpu_custom_call.1} parent=47 // pred_fallthru
          _
        // Predicated region
        $region61: #{tpu_custom_call.1} parent=47 // pred_check
          %p311 = pneg %p152
        $region62: #{tpu_custom_call.1} parent=47 // pred_check_branch
          %313 = sbr.rel (%p311) target = $region64
        $region63: #{tpu_custom_call.1} parent=47 // pred_region
          %314 = dma.done [#allocation10], 1024
        $region64: #{tpu_custom_call.1} parent=47 // pred_fallthru
          _
        %s315 = sand.u32 %s34, 1
        %s316 = scalar_lea.sflag [#allocation4], %s315
        %s317 = sand.u32 %s34, 1
        %s318 = smul.addr %s317, 128
        %s319 = scalar_lea.vmem [#allocation3], %s318
        %p320 = pneg %p47
        %p321 = pneg %p44
        %p322 = pneg %p68
        %p323 = pneg %p65
        %p324 = pneg %p89
        %p325 = pneg %p86
        %p326 = pneg %p110
        %p327 = pneg %p107
        %p328 = pneg %p131
        %p329 = pneg %p128
        %p330 = pneg %p152
        %p331 = pneg %p149
        %p332 = pneg %p173
        %p333 = pneg %p170
        %p334 = pneg %p199
        %p335 = pneg %p196
        %s336 = sand.u32 %s186, 1
        %s337 = scalar_lea.sflag [#allocation5], %s336
        %s338 = sand.u32 %s186, 1
        %s339 = smul.addr %s338, 256
        %s340 = scalar_lea.vmem [#allocation11], %s339
        %v342 = vld [vmem:[%s298] sm:$0xf]
        %v343 = vld [vmem:[%s298 + $0x4] sm:$0xf]
        %v344 = vld [vmem:[%s298 + $0x8] sm:$0xf]
        %v345 = vld [vmem:[%s298 + $0xc] sm:$0xf]
        %v346 = vld [vmem:[%s298 + $0x10] sm:$0xf]
        %v347 = vld [vmem:[%s298 + $0x14] sm:$0xf]
        %v348 = vld [vmem:[%s298 + $0x18] sm:$0xf]
        %v349 = vld [vmem:[%s298 + $0x1c] sm:$0xf]
        %v350 = vld [vmem:[%s298 + $0x20] sm:$0xf]
        %v351 = vld [vmem:[%s298 + $0x24] sm:$0xf]
        %v352 = vld [vmem:[%s298 + $0x28] sm:$0xf]
        %v353 = vld [vmem:[%s298 + $0x2c] sm:$0xf]
        %v354 = vld [vmem:[%s298 + $0x30] sm:$0xf]
        %v355 = vld [vmem:[%s298 + $0x34] sm:$0xf]
        %v356 = vld [vmem:[%s298 + $0x38] sm:$0xf]
        %v357 = vld [vmem:[%s298 + $0x3c] sm:$0xf]
        %v358 = vld [vmem:[%s298 + $0x40] sm:$0xf]
        %v359 = vld [vmem:[%s298 + $0x44] sm:$0xf]
        %v360 = vld [vmem:[%s298 + $0x48] sm:$0xf]
        %v361 = vld [vmem:[%s298 + $0x4c] sm:$0xf]
        %v362 = vld [vmem:[%s298 + $0x50] sm:$0xf]
        %v363 = vld [vmem:[%s298 + $0x54] sm:$0xf]
        %v364 = vld [vmem:[%s298 + $0x58] sm:$0xf]
        %v365 = vld [vmem:[%s298 + $0x5c] sm:$0xf]
        %v366 = vld [vmem:[%s298 + $0x60] sm:$0xf]
        %v367 = vld [vmem:[%s298 + $0x64] sm:$0xf]
        %v368 = vld [vmem:[%s298 + $0x68] sm:$0xf]
        %v369 = vld [vmem:[%s298 + $0x6c] sm:$0xf]
        %v370 = vld [vmem:[%s298 + $0x70] sm:$0xf]
        %v371 = vld [vmem:[%s298 + $0x74] sm:$0xf]
        %v372 = vld [vmem:[%s298 + $0x78] sm:$0xf]
        %v373 = vld [vmem:[%s298 + $0x7c] sm:$0xf]
        %v374 = vld [vmem:[#allocation6] sm:$0xf]
        %v375 = vld [vmem:[#allocation6 + $0x4] sm:$0xf]
        %v376 = vld [vmem:[#allocation6 + $0x8] sm:$0xf]
        %v377 = vld [vmem:[#allocation6 + $0xc] sm:$0xf]
        %v378 = vld [vmem:[#allocation6 + $0x10] sm:$0xf]
        %v379 = vld [vmem:[#allocation6 + $0x14] sm:$0xf]
        %v380 = vld [vmem:[#allocation6 + $0x18] sm:$0xf]
        %v381 = vld [vmem:[#allocation6 + $0x1c] sm:$0xf]
        %v382 = vld [vmem:[#allocation6 + $0x20] sm:$0xf]
        %v383 = vld [vmem:[#allocation6 + $0x24] sm:$0xf]
        %v384 = vld [vmem:[#allocation6 + $0x28] sm:$0xf]
        %v385 = vld [vmem:[#allocation6 + $0x2c] sm:$0xf]
        %v386 = vld [vmem:[#allocation6 + $0x30] sm:$0xf]
        %v387 = vld [vmem:[#allocation6 + $0x34] sm:$0xf]
        %v388 = vld [vmem:[#allocation6 + $0x38] sm:$0xf]
        %v389 = vld [vmem:[#allocation6 + $0x3c] sm:$0xf]
        %v390 = vld [vmem:[%s2] sm:$0x1]
        %v392 = vlaneseq
        %v393 = vshrl.u32 %v392, 7
        %v394 = vsub.s32 0, %v393
        %v395 = vrot.slane %v390, %v394
        %v429 = vunpack.c.l.b16 %v342
        %v430 = vunpack.c.l.b16 %v343
        %v431 = vunpack.c.l.b16 %v344
        %v432 = vunpack.c.l.b16 %v345
        %v433 = vunpack.c.l.b16 %v346
        %v434 = vunpack.c.l.b16 %v347
        %v435 = vunpack.c.l.b16 %v348
        %v436 = vunpack.c.l.b16 %v349
        %v437 = vunpack.c.l.b16 %v350
        %v438 = vunpack.c.l.b16 %v351
        %v439 = vunpack.c.l.b16 %v352
        %v440 = vunpack.c.l.b16 %v353
        %v441 = vunpack.c.l.b16 %v354
        %v442 = vunpack.c.l.b16 %v355
        %v443 = vunpack.c.l.b16 %v356
        %v444 = vunpack.c.l.b16 %v357
        %v445 = vunpack.c.l.b16 %v358
        %v446 = vunpack.c.l.b16 %v359
        %v447 = vunpack.c.l.b16 %v360
        %v448 = vunpack.c.l.b16 %v361
        %v449 = vunpack.c.l.b16 %v362
        %v450 = vunpack.c.l.b16 %v363
        %v451 = vunpack.c.l.b16 %v364
        %v452 = vunpack.c.l.b16 %v365
        %v453 = vunpack.c.l.b16 %v366
        %v454 = vunpack.c.l.b16 %v367
        %v455 = vunpack.c.l.b16 %v368
        %v456 = vunpack.c.l.b16 %v369
        %v457 = vunpack.c.l.b16 %v370
        %v458 = vunpack.c.l.b16 %v371
        %v459 = vunpack.c.l.b16 %v372
        %v460 = vunpack.c.l.b16 %v373
        %v461 = vpack.c.b16 %v430, %v429
        %v462 = vpack.c.b16 %v432, %v431
        %v463 = vpack.c.b16 %v434, %v433
        %v464 = vpack.c.b16 %v436, %v435
        %v465 = vpack.c.b16 %v438, %v437
        %v466 = vpack.c.b16 %v440, %v439
        %v467 = vpack.c.b16 %v442, %v441
        %v468 = vpack.c.b16 %v444, %v443
        %v469 = vpack.c.b16 %v446, %v445
        %v470 = vpack.c.b16 %v448, %v447
        %v471 = vpack.c.b16 %v450, %v449
        %v472 = vpack.c.b16 %v452, %v451
        %v473 = vpack.c.b16 %v454, %v453
        %v474 = vpack.c.b16 %v456, %v455
        %v475 = vpack.c.b16 %v458, %v457
        %v476 = vpack.c.b16 %v460, %v459
        %v509 = vunpack.c.l.b16 %v374
        %v510 = vunpack.c.l.b16 %v375
        %v511 = vunpack.c.l.b16 %v376
        %v512 = vunpack.c.l.b16 %v377
        %v513 = vunpack.c.l.b16 %v378
        %v514 = vunpack.c.l.b16 %v379
        %v515 = vunpack.c.l.b16 %v380
        %v516 = vunpack.c.l.b16 %v381
        %v517 = vunpack.c.l.b16 %v382
        %v518 = vunpack.c.l.b16 %v383
        %v519 = vunpack.c.l.b16 %v384
        %v520 = vunpack.c.l.b16 %v385
        %v521 = vunpack.c.l.b16 %v386
        %v522 = vunpack.c.l.b16 %v387
        %v523 = vunpack.c.l.b16 %v388
        %v524 = vunpack.c.l.b16 %v389
        %v525 = vpack.c.b16 %v510, %v509
        %v526 = vpack.c.b16 %v512, %v511
        %v527 = vpack.c.b16 %v514, %v513
        %v528 = vpack.c.b16 %v516, %v515
        %v529 = vpack.c.b16 %v518, %v517
        %v530 = vpack.c.b16 %v520, %v519
        %v531 = vpack.c.b16 %v522, %v521
        %v532 = vpack.c.b16 %v524, %v523
        %541 = vmatprep.subr.bf16.mxu0 0
        %542 = vmatpush1.bf16.msra.mxu0 %v525
        %543 = vmatprep.subr.bf16.mxu0 0
        %544 = vmatpush1.bf16.msra.mxu0 %v526
        %545 = vmatprep.subr.bf16.mxu0 0
        %546 = vmatpush1.bf16.msra.mxu0 %v527
        %547 = vmatprep.subr.bf16.mxu0 0
        %548 = vmatpush1.bf16.msra.mxu0 %v528
        %549 = vmatprep.subr.bf16.mxu0 0
        %550 = vmatpush1.bf16.msra.mxu0 %v529
        %551 = vmatprep.subr.bf16.mxu0 0
        %552 = vmatpush1.bf16.msra.mxu0 %v530
        %553 = vmatprep.subr.bf16.mxu0 0
        %554 = vmatpush1.bf16.msra.mxu0 %v531
        %555 = vmatprep.subr.bf16.mxu0 0
        %556 = vmatpush1.bf16.msra.mxu0 %v532
        %557 = vmatprep.subr.bf16.mxu0 0
        %558 = vmatpush1.bf16.msra.mxu0 0
        %559 = vmatprep.subr.bf16.mxu0 0
        %560 = vmatpush1.bf16.msra.mxu0 0
        %561 = vmatprep.subr.bf16.mxu0 0
        %562 = vmatpush1.bf16.msra.mxu0 0
        %563 = vmatprep.subr.bf16.mxu0 0
        %564 = vmatpush1.bf16.msra.mxu0 0
        %565 = vmatprep.subr.bf16.mxu0 0
        %566 = vmatpush1.bf16.msra.mxu0 0
        %567 = vmatprep.subr.bf16.mxu0 0
        %568 = vmatpush1.bf16.msra.mxu0 0
        %569 = vmatprep.subr.bf16.mxu0 0
        %570 = vmatpush1.bf16.msra.mxu0 0
        %571 = vmatprep.subr.bf16.mxu0 0
        %572 = vmatpush1.bf16.msra.mxu0 0
        %573 = vmatprep.mubr.bf16.mxu0 0
        %574 = vmatmul.mubr.bf16.gmra.mrb[0].mxu0 %v461
        %v575 = vpop.f32.mrb[0].mxu0
        %v576 = vadd.f32 %v395, %v575
        %v577 = vpop.f32.mrb[0].mxu0
        %v578 = vpop.f32.mrb[0].mxu0
        %v579 = vadd.f32 %v395, %v578
        %v580 = vpop.f32.mrb[0].mxu0
        %581 = vmatprep.mubr.bf16.mxu0 0
        %582 = vmatmul.mubr.bf16.gmra.mrb[0].mxu0 %v462
        %v583 = vpop.f32.mrb[0].mxu0
        %v584 = vadd.f32 %v395, %v583
        %v585 = vpop.f32.mrb[0].mxu0
        %v586 = vpop.f32.mrb[0].mxu0
        %v587 = vadd.f32 %v395, %v586
        %v588 = vpop.f32.mrb[0].mxu0
        %589 = vmatprep.mubr.bf16.mxu0 0
        %590 = vmatmul.mubr.bf16.gmra.mrb[0].mxu0 %v463
        %v591 = vpop.f32.mrb[0].mxu0
        %v592 = vadd.f32 %v395, %v591
        %v593 = vpop.f32.mrb[0].mxu0
        %v594 = vpop.f32.mrb[0].mxu0
        %v595 = vadd.f32 %v395, %v594
        %v596 = vpop.f32.mrb[0].mxu0
        %597 = vmatprep.mubr.bf16.mxu0 0
        %598 = vmatmul.mubr.bf16.gmra.mrb[0].mxu0 %v464
        %v599 = vpop.f32.mrb[0].mxu0
        %v600 = vadd.f32 %v395, %v599
        %v601 = vpop.f32.mrb[0].mxu0
        %v602 = vpop.f32.mrb[0].mxu0
        %v603 = vadd.f32 %v395, %v602
        %v604 = vpop.f32.mrb[0].mxu0
        %605 = vmatprep.mubr.bf16.mxu0 0
        %606 = vmatmul.mubr.bf16.gmra.mrb[0].mxu0 %v465
        %v607 = vpop.f32.mrb[0].mxu0
        %v608 = vadd.f32 %v395, %v607
        %v609 = vpop.f32.mrb[0].mxu0
        %v610 = vpop.f32.mrb[0].mxu0
        %v611 = vadd.f32 %v395, %v610
        %v612 = vpop.f32.mrb[0].mxu0
        %613 = vmatprep.mubr.bf16.mxu0 0
        %614 = vmatmul.mubr.bf16.gmra.mrb[0].mxu0 %v466
        %v615 = vpop.f32.mrb[0].mxu0
        %v616 = vadd.f32 %v395, %v615
        %v617 = vpop.f32.mrb[0].mxu0
        %v618 = vpop.f32.mrb[0].mxu0
        %v619 = vadd.f32 %v395, %v618
        %v620 = vpop.f32.mrb[0].mxu0
        %621 = vmatprep.mubr.bf16.mxu0 0
        %622 = vmatmul.mubr.bf16.gmra.mrb[0].mxu0 %v467
        %v623 = vpop.f32.mrb[0].mxu0
        %v624 = vadd.f32 %v395, %v623
        %v625 = vpop.f32.mrb[0].mxu0
        %v626 = vpop.f32.mrb[0].mxu0
        %v627 = vadd.f32 %v395, %v626
        %v628 = vpop.f32.mrb[0].mxu0
        %629 = vmatprep.mubr.bf16.mxu0 0
        %630 = vmatmul.mubr.bf16.gmra.mrb[0].mxu0 %v468
        %v631 = vpop.f32.mrb[0].mxu0
        %v632 = vadd.f32 %v395, %v631
        %v633 = vpop.f32.mrb[0].mxu0
        %v634 = vpop.f32.mrb[0].mxu0
        %v635 = vadd.f32 %v395, %v634
        %v636 = vpop.f32.mrb[0].mxu0
        %637 = vmatprep.mubr.bf16.mxu0 0
        %638 = vmatmul.mubr.bf16.gmra.mrb[0].mxu0 %v469
        %v639 = vpop.f32.mrb[0].mxu0
        %v640 = vadd.f32 %v395, %v639
        %v641 = vpop.f32.mrb[0].mxu0
        %v642 = vpop.f32.mrb[0].mxu0
        %v643 = vadd.f32 %v395, %v642
        %v644 = vpop.f32.mrb[0].mxu0
        %645 = vmatprep.mubr.bf16.mxu0 0
        %646 = vmatmul.mubr.bf16.gmra.mrb[0].mxu0 %v470
        %v647 = vpop.f32.mrb[0].mxu0
        %v648 = vadd.f32 %v395, %v647
        %v649 = vpop.f32.mrb[0].mxu0
        %v650 = vpop.f32.mrb[0].mxu0
        %v651 = vadd.f32 %v395, %v650
        %v652 = vpop.f32.mrb[0].mxu0
        %653 = vmatprep.mubr.bf16.mxu0 0
        %654 = vmatmul.mubr.bf16.gmra.mrb[0].mxu0 %v471
        %v655 = vpop.f32.mrb[0].mxu0
        %v656 = vadd.f32 %v395, %v655
        %v657 = vpop.f32.mrb[0].mxu0
        %v658 = vpop.f32.mrb[0].mxu0
        %v659 = vadd.f32 %v395, %v658
        %v660 = vpop.f32.mrb[0].mxu0
        %661 = vmatprep.mubr.bf16.mxu0 0
        %662 = vmatmul.mubr.bf16.gmra.mrb[0].mxu0 %v472
        %v663 = vpop.f32.mrb[0].mxu0
        %v664 = vadd.f32 %v395, %v663
        %v665 = vpop.f32.mrb[0].mxu0
        %v666 = vpop.f32.mrb[0].mxu0
        %v667 = vadd.f32 %v395, %v666
        %v668 = vpop.f32.mrb[0].mxu0
        %669 = vmatprep.mubr.bf16.mxu0 0
        %670 = vmatmul.mubr.bf16.gmra.mrb[0].mxu0 %v473
        %v671 = vpop.f32.mrb[0].mxu0
        %v672 = vadd.f32 %v395, %v671
        %v673 = vpop.f32.mrb[0].mxu0
        %v674 = vpop.f32.mrb[0].mxu0
        %v675 = vadd.f32 %v395, %v674
        %v676 = vpop.f32.mrb[0].mxu0
        %677 = vmatprep.mubr.bf16.mxu0 0
        %678 = vmatmul.mubr.bf16.gmra.mrb[0].mxu0 %v474
        %v679 = vpop.f32.mrb[0].mxu0
        %v680 = vadd.f32 %v395, %v679
        %v681 = vpop.f32.mrb[0].mxu0
        %v682 = vpop.f32.mrb[0].mxu0
        %v683 = vadd.f32 %v395, %v682
        %v684 = vpop.f32.mrb[0].mxu0
        %685 = vmatprep.mubr.bf16.mxu0 0
        %686 = vmatmul.mubr.bf16.gmra.mrb[0].mxu0 %v475
        %v687 = vpop.f32.mrb[0].mxu0
        %v688 = vadd.f32 %v395, %v687
        %v689 = vpop.f32.mrb[0].mxu0
        %v690 = vpop.f32.mrb[0].mxu0
        %v691 = vadd.f32 %v395, %v690
        %v692 = vpop.f32.mrb[0].mxu0
        %693 = vmatprep.mubr.bf16.mxu0 0
        %694 = vmatmul.mubr.bf16.gmra.mrb[0].mxu0 %v476
        %v695 = vpop.f32.mrb[0].mxu0
        %v696 = vadd.f32 %v395, %v695
        %v697 = vpop.f32.mrb[0].mxu0
        %v698 = vpop.f32.mrb[0].mxu0
        %v699 = vadd.f32 %v395, %v698
        %v700 = vpop.f32.mrb[0].mxu0
        %701 = vdwg.mxu0
        %v702 = vmax.f32 %v576, 0.0
        %v703 = vmax.f32 %v579, 0.0
        %v704 = vmax.f32 %v584, 0.0
        %v705 = vmax.f32 %v587, 0.0
        %v706 = vmax.f32 %v592, 0.0
        %v707 = vmax.f32 %v595, 0.0
        %v708 = vmax.f32 %v600, 0.0
        %v709 = vmax.f32 %v603, 0.0
        %v710 = vmax.f32 %v608, 0.0
        %v711 = vmax.f32 %v611, 0.0
        %v712 = vmax.f32 %v616, 0.0
        %v713 = vmax.f32 %v619, 0.0
        %v714 = vmax.f32 %v624, 0.0
        %v715 = vmax.f32 %v627, 0.0
        %v716 = vmax.f32 %v632, 0.0
        %v717 = vmax.f32 %v635, 0.0
        %v718 = vmax.f32 %v640, 0.0
        %v719 = vmax.f32 %v643, 0.0
        %v720 = vmax.f32 %v648, 0.0
        %v721 = vmax.f32 %v651, 0.0
        %v722 = vmax.f32 %v656, 0.0
        %v723 = vmax.f32 %v659, 0.0
        %v724 = vmax.f32 %v664, 0.0
        %v725 = vmax.f32 %v667, 0.0
        %v726 = vmax.f32 %v672, 0.0
        %v727 = vmax.f32 %v675, 0.0
        %v728 = vmax.f32 %v680, 0.0
        %v729 = vmax.f32 %v683, 0.0
        %v730 = vmax.f32 %v688, 0.0
        %v731 = vmax.f32 %v691, 0.0
        %v732 = vmax.f32 %v696, 0.0
        %v733 = vmax.f32 %v699, 0.0
        %v734 = vpack.c.bf16 %v703, %v702
        %v735 = vpack.c.bf16 %v705, %v704
        %v736 = vpack.c.bf16 %v707, %v706
        %v737 = vpack.c.bf16 %v709, %v708
        %v738 = vpack.c.bf16 %v711, %v710
        %v739 = vpack.c.bf16 %v713, %v712
        %v740 = vpack.c.bf16 %v715, %v714
        %v741 = vpack.c.bf16 %v717, %v716
        %v742 = vpack.c.bf16 %v719, %v718
        %v743 = vpack.c.bf16 %v721, %v720
        %v744 = vpack.c.bf16 %v723, %v722
        %v745 = vpack.c.bf16 %v725, %v724
        %v746 = vpack.c.bf16 %v727, %v726
        %v747 = vpack.c.bf16 %v729, %v728
        %v748 = vpack.c.bf16 %v731, %v730
        %v749 = vpack.c.bf16 %v733, %v732
        %750 = vst [vmem:[#allocation2] sm:$0xff] 0
        %751 = vst [vmem:[#allocation2 + $0x8] sm:$0xff] 0
        %s752 = scalar_lea.vmem [#allocation2], 272
        %753 = vst [vmem:[%s752] sm:$0xff] 0
        %754 = vst [vmem:[%s752 + $0x8] sm:$0xff] 0
        %s755 = scalar_lea.vmem [#allocation2], 16
        %756 = vst [vmem:[%s755] sm:$0xf] 0
        %757 = vst [vmem:[%s755 + $0x10] sm:$0xf] 0
        %758 = vst [vmem:[%s755 + $0x20] sm:$0xf] 0
        %759 = vst [vmem:[%s755 + $0x30] sm:$0xf] 0
        %760 = vst [vmem:[%s755 + $0x40] sm:$0xf] 0
        %761 = vst [vmem:[%s755 + $0x50] sm:$0xf] 0
        %762 = vst [vmem:[%s755 + $0x60] sm:$0xf] 0
        %763 = vst [vmem:[%s755 + $0x70] sm:$0xf] 0
        %764 = vst [vmem:[%s755 + $0x80] sm:$0xf] 0
        %765 = vst [vmem:[%s755 + $0x90] sm:$0xf] 0
        %766 = vst [vmem:[%s755 + $0xa0] sm:$0xf] 0
        %767 = vst [vmem:[%s755 + $0xb0] sm:$0xf] 0
        %768 = vst [vmem:[%s755 + $0xc0] sm:$0xf] 0
        %769 = vst [vmem:[%s755 + $0xd0] sm:$0xf] 0
        %770 = vst [vmem:[%s755 + $0xe0] sm:$0xf] 0
        %771 = vst [vmem:[%s755 + $0xf0] sm:$0xf] 0
        %772 = vst [vmem:[%s755 + $0x8] sm:$0xf0] 0
        %773 = vst [vmem:[%s755 + $0x18] sm:$0xf0] 0
        %774 = vst [vmem:[%s755 + $0x28] sm:$0xf0] 0
        %775 = vst [vmem:[%s755 + $0x38] sm:$0xf0] 0
        %776 = vst [vmem:[%s755 + $0x48] sm:$0xf0] 0
        %777 = vst [vmem:[%s755 + $0x58] sm:$0xf0] 0
        %778 = vst [vmem:[%s755 + $0x68] sm:$0xf0] 0
        %779 = vst [vmem:[%s755 + $0x78] sm:$0xf0] 0
        %780 = vst [vmem:[%s755 + $0x88] sm:$0xf0] 0
        %781 = vst [vmem:[%s755 + $0x98] sm:$0xf0] 0
        %782 = vst [vmem:[%s755 + $0xa8] sm:$0xf0] 0
        %783 = vst [vmem:[%s755 + $0xb8] sm:$0xf0] 0
        %784 = vst [vmem:[%s755 + $0xc8] sm:$0xf0] 0
        %785 = vst [vmem:[%s755 + $0xd8] sm:$0xf0] 0
        %786 = vst [vmem:[%s755 + $0xe8] sm:$0xf0] 0
        %787 = vst [vmem:[%s755 + $0xf8] sm:$0xf0] 0
        %v804 = vrot.slane %v734, 4
        %v805 = vrot.slane %v735, 4
        %v806 = vrot.slane %v736, 4
        %v807 = vrot.slane %v737, 4
        %v808 = vrot.slane %v738, 4
        %v809 = vrot.slane %v739, 4
        %v810 = vrot.slane %v740, 4
        %v811 = vrot.slane %v741, 4
        %v812 = vrot.slane %v742, 4
        %v813 = vrot.slane %v743, 4
        %v814 = vrot.slane %v744, 4
        %v815 = vrot.slane %v745, 4
        %v816 = vrot.slane %v746, 4
        %v817 = vrot.slane %v747, 4
        %v818 = vrot.slane %v748, 4
        %v819 = vrot.slane %v749, 4
        %836 = vst [vmem:[%s755] sm:$0xf0] %v804
        %837 = vst [vmem:[%s755 + $0x8] sm:$0xf] %v804
        %838 = vst [vmem:[%s755 + $0x10] sm:$0xf0] %v805
        %839 = vst [vmem:[%s755 + $0x18] sm:$0xf] %v805
        %840 = vst [vmem:[%s755 + $0x20] sm:$0xf0] %v806
        %841 = vst [vmem:[%s755 + $0x28] sm:$0xf] %v806
        %842 = vst [vmem:[%s755 + $0x30] sm:$0xf0] %v807
        %843 = vst [vmem:[%s755 + $0x38] sm:$0xf] %v807
        %844 = vst [vmem:[%s755 + $0x40] sm:$0xf0] %v808
        %845 = vst [vmem:[%s755 + $0x48] sm:$0xf] %v808
        %846 = vst [vmem:[%s755 + $0x50] sm:$0xf0] %v809
        %847 = vst [vmem:[%s755 + $0x58] sm:$0xf] %v809
        %848 = vst [vmem:[%s755 + $0x60] sm:$0xf0] %v810
        %849 = vst [vmem:[%s755 + $0x68] sm:$0xf] %v810
        %850 = vst [vmem:[%s755 + $0x70] sm:$0xf0] %v811
        %851 = vst [vmem:[%s755 + $0x78] sm:$0xf] %v811
        %852 = vst [vmem:[%s755 + $0x80] sm:$0xf0] %v812
        %853 = vst [vmem:[%s755 + $0x88] sm:$0xf] %v812
        %854 = vst [vmem:[%s755 + $0x90] sm:$0xf0] %v813
        %855 = vst [vmem:[%s755 + $0x98] sm:$0xf] %v813
        %856 = vst [vmem:[%s755 + $0xa0] sm:$0xf0] %v814
        %857 = vst [vmem:[%s755 + $0xa8] sm:$0xf] %v814
        %858 = vst [vmem:[%s755 + $0xb0] sm:$0xf0] %v815
        %859 = vst [vmem:[%s755 + $0xb8] sm:$0xf] %v815
        %860 = vst [vmem:[%s755 + $0xc0] sm:$0xf0] %v816
        %861 = vst [vmem:[%s755 + $0xc8] sm:$0xf] %v816
        %862 = vst [vmem:[%s755 + $0xd0] sm:$0xf0] %v817
        %863 = vst [vmem:[%s755 + $0xd8] sm:$0xf] %v817
        %864 = vst [vmem:[%s755 + $0xe0] sm:$0xf0] %v818
        %865 = vst [vmem:[%s755 + $0xe8] sm:$0xf] %v818
        %866 = vst [vmem:[%s755 + $0xf0] sm:$0xf0] %v819
        %867 = vst [vmem:[%s755 + $0xf8] sm:$0xf] %v819
        %v868 = vld [vmem:[#allocation2] sm:$0xf8]
        %v869 = vld [vmem:[#allocation2 + $0x8] sm:$0xf]
        %v870 = vld [vmem:[#allocation2 + $0x10] sm:$0xf8]
        %v871 = vld [vmem:[#allocation2 + $0x18] sm:$0xf]
        %v872 = vld [vmem:[#allocation2 + $0x20] sm:$0xf8]
        %v873 = vld [vmem:[#allocation2 + $0x28] sm:$0xf]
        %v874 = vld [vmem:[#allocation2 + $0x30] sm:$0xf8]
        %v875 = vld [vmem:[#allocation2 + $0x38] sm:$0xf]
        %v876 = vld [vmem:[#allocation2 + $0x40] sm:$0xf8]
        %v877 = vld [vmem:[#allocation2 + $0x48] sm:$0xf]
        %v878 = vld [vmem:[#allocation2 + $0x50] sm:$0xf8]
        %v879 = vld [vmem:[#allocation2 + $0x58] sm:$0xf]
        %v880 = vld [vmem:[#allocation2 + $0x60] sm:$0xf8]
        %v881 = vld [vmem:[#allocation2 + $0x68] sm:$0xf]
        %v882 = vld [vmem:[#allocation2 + $0x70] sm:$0xf8]
        %v883 = vld [vmem:[#allocation2 + $0x78] sm:$0xf]
        %v884 = vld [vmem:[#allocation2 + $0x80] sm:$0xf8]
        %v885 = vld [vmem:[#allocation2 + $0x88] sm:$0xf]
        %v886 = vld [vmem:[#allocation2 + $0x90] sm:$0xf8]
        %v887 = vld [vmem:[#allocation2 + $0x98] sm:$0xf]
        %v888 = vld [vmem:[#allocation2 + $0xa0] sm:$0xf8]
        %v889 = vld [vmem:[#allocation2 + $0xa8] sm:$0xf]
        %v890 = vld [vmem:[#allocation2 + $0xb0] sm:$0xf8]
        %v891 = vld [vmem:[#allocation2 + $0xb8] sm:$0xf]
        %v892 = vld [vmem:[#allocation2 + $0xc0] sm:$0xf8]
        %v893 = vld [vmem:[#allocation2 + $0xc8] sm:$0xf]
        %v894 = vld [vmem:[#allocation2 + $0xd0] sm:$0xf8]
        %v895 = vld [vmem:[#allocation2 + $0xd8] sm:$0xf]
        %v896 = vld [vmem:[#allocation2 + $0xe0] sm:$0xf8]
        %v897 = vld [vmem:[#allocation2 + $0xe8] sm:$0xf]
        %v898 = vld [vmem:[#allocation2 + $0xf0] sm:$0xf8]
        %v899 = vld [vmem:[#allocation2 + $0xf8] sm:$0xf]
        %vm900 = vsmask.f32 4352
        %v902 = vshrl.u32 %v868, 16
        %v904 = vrot.slane %v902, 3
        %v905 = vshll.u32 %v868, 16
        %v907 = vrot.slane %v905, 4
        %v908 = vor.u32 %v904, %v907
        %v910 = vshrl.u32 %v869, 16
        %v912 = vrot.slane %v910, 3
        %v913 = vshll.u32 %v869, 16
        %v915 = vrot.slane %v913, 4
        %v916 = vor.u32 %v912, %v915
        %v917 = vsel %vm900, %v908, %v916
        %v919 = vshrl.u32 %v870, 16
        %v921 = vrot.slane %v919, 3
        %v922 = vshll.u32 %v870, 16
        %v924 = vrot.slane %v922, 4
        %v925 = vor.u32 %v921, %v924
        %v927 = vshrl.u32 %v871, 16
        %v929 = vrot.slane %v927, 3
        %v930 = vshll.u32 %v871, 16
        %v932 = vrot.slane %v930, 4
        %v933 = vor.u32 %v929, %v932
        %v934 = vsel %vm900, %v925, %v933
        %v936 = vshrl.u32 %v872, 16
        %v938 = vrot.slane %v936, 3
        %v939 = vshll.u32 %v872, 16
        %v941 = vrot.slane %v939, 4
        %v942 = vor.u32 %v938, %v941
        %v944 = vshrl.u32 %v873, 16
        %v946 = vrot.slane %v944, 3
        %v947 = vshll.u32 %v873, 16
        %v949 = vrot.slane %v947, 4
        %v950 = vor.u32 %v946, %v949
        %v951 = vsel %vm900, %v942, %v950
        %v953 = vshrl.u32 %v874, 16
        %v955 = vrot.slane %v953, 3
        %v956 = vshll.u32 %v874, 16
        %v958 = vrot.slane %v956, 4
        %v959 = vor.u32 %v955, %v958
        %v961 = vshrl.u32 %v875, 16
        %v963 = vrot.slane %v961, 3
        %v964 = vshll.u32 %v875, 16
        %v966 = vrot.slane %v964, 4
        %v967 = vor.u32 %v963, %v966
        %v968 = vsel %vm900, %v959, %v967
        %v970 = vshrl.u32 %v876, 16
        %v972 = vrot.slane %v970, 3
        %v973 = vshll.u32 %v876, 16
        %v975 = vrot.slane %v973, 4
        %v976 = vor.u32 %v972, %v975
        %v978 = vshrl.u32 %v877, 16
        %v980 = vrot.slane %v978, 3
        %v981 = vshll.u32 %v877, 16
        %v983 = vrot.slane %v981, 4
        %v984 = vor.u32 %v980, %v983
        %v985 = vsel %vm900, %v976, %v984
        %v987 = vshrl.u32 %v878, 16
        %v989 = vrot.slane %v987, 3
        %v990 = vshll.u32 %v878, 16
        %v992 = vrot.slane %v990, 4
        %v993 = vor.u32 %v989, %v992
        %v995 = vshrl.u32 %v879, 16
        %v997 = vrot.slane %v995, 3
        %v998 = vshll.u32 %v879, 16
        %v1000 = vrot.slane %v998, 4
        %v1001 = vor.u32 %v997, %v1000
        %v1002 = vsel %vm900, %v993, %v1001
        %v1004 = vshrl.u32 %v880, 16
        %v1006 = vrot.slane %v1004, 3
        %v1007 = vshll.u32 %v880, 16
        %v1009 = vrot.slane %v1007, 4
        %v1010 = vor.u32 %v1006, %v1009
        %v1012 = vshrl.u32 %v881, 16
        %v1014 = vrot.slane %v1012, 3
        %v1015 = vshll.u32 %v881, 16
        %v1017 = vrot.slane %v1015, 4
        %v1018 = vor.u32 %v1014, %v1017
        %v1019 = vsel %vm900, %v1010, %v1018
        %v1021 = vshrl.u32 %v882, 16
        %v1023 = vrot.slane %v1021, 3
        %v1024 = vshll.u32 %v882, 16
        %v1026 = vrot.slane %v1024, 4
        %v1027 = vor.u32 %v1023, %v1026
        %v1029 = vshrl.u32 %v883, 16
        %v1031 = vrot.slane %v1029, 3
        %v1032 = vshll.u32 %v883, 16
        %v1034 = vrot.slane %v1032, 4
        %v1035 = vor.u32 %v1031, %v1034
        %v1036 = vsel %vm900, %v1027, %v1035
        %v1038 = vshrl.u32 %v884, 16
        %v1040 = vrot.slane %v1038, 3
        %v1041 = vshll.u32 %v884, 16
        %v1043 = vrot.slane %v1041, 4
        %v1044 = vor.u32 %v1040, %v1043
        %v1046 = vshrl.u32 %v885, 16
        %v1048 = vrot.slane %v1046, 3
        %v1049 = vshll.u32 %v885, 16
        %v1051 = vrot.slane %v1049, 4
        %v1052 = vor.u32 %v1048, %v1051
        %v1053 = vsel %vm900, %v1044, %v1052
        %v1055 = vshrl.u32 %v886, 16
        %v1057 = vrot.slane %v1055, 3
        %v1058 = vshll.u32 %v886, 16
        %v1060 = vrot.slane %v1058, 4
        %v1061 = vor.u32 %v1057, %v1060
        %v1063 = vshrl.u32 %v887, 16
        %v1065 = vrot.slane %v1063, 3
        %v1066 = vshll.u32 %v887, 16
        %v1068 = vrot.slane %v1066, 4
        %v1069 = vor.u32 %v1065, %v1068
        %v1070 = vsel %vm900, %v1061, %v1069
        %v1072 = vshrl.u32 %v888, 16
        %v1074 = vrot.slane %v1072, 3
        %v1075 = vshll.u32 %v888, 16
        %v1077 = vrot.slane %v1075, 4
        %v1078 = vor.u32 %v1074, %v1077
        %v1080 = vshrl.u32 %v889, 16
        %v1082 = vrot.slane %v1080, 3
        %v1083 = vshll.u32 %v889, 16
        %v1085 = vrot.slane %v1083, 4
        %v1086 = vor.u32 %v1082, %v1085
        %v1087 = vsel %vm900, %v1078, %v1086
        %v1089 = vshrl.u32 %v890, 16
        %v1091 = vrot.slane %v1089, 3
        %v1092 = vshll.u32 %v890, 16
        %v1094 = vrot.slane %v1092, 4
        %v1095 = vor.u32 %v1091, %v1094
        %v1097 = vshrl.u32 %v891, 16
        %v1099 = vrot.slane %v1097, 3
        %v1100 = vshll.u32 %v891, 16
        %v1102 = vrot.slane %v1100, 4
        %v1103 = vor.u32 %v1099, %v1102
        %v1104 = vsel %vm900, %v1095, %v1103
        %v1106 = vshrl.u32 %v892, 16
        %v1108 = vrot.slane %v1106, 3
        %v1109 = vshll.u32 %v892, 16
        %v1111 = vrot.slane %v1109, 4
        %v1112 = vor.u32 %v1108, %v1111
        %v1114 = vshrl.u32 %v893, 16
        %v1116 = vrot.slane %v1114, 3
        %v1117 = vshll.u32 %v893, 16
        %v1119 = vrot.slane %v1117, 4
        %v1120 = vor.u32 %v1116, %v1119
        %v1121 = vsel %vm900, %v1112, %v1120
        %v1123 = vshrl.u32 %v894, 16
        %v1125 = vrot.slane %v1123, 3
        %v1126 = vshll.u32 %v894, 16
        %v1128 = vrot.slane %v1126, 4
        %v1129 = vor.u32 %v1125, %v1128
        %v1131 = vshrl.u32 %v895, 16
        %v1133 = vrot.slane %v1131, 3
        %v1134 = vshll.u32 %v895, 16
        %v1136 = vrot.slane %v1134, 4
        %v1137 = vor.u32 %v1133, %v1136
        %v1138 = vsel %vm900, %v1129, %v1137
        %v1140 = vshrl.u32 %v896, 16
        %v1142 = vrot.slane %v1140, 3
        %v1143 = vshll.u32 %v896, 16
        %v1145 = vrot.slane %v1143, 4
        %v1146 = vor.u32 %v1142, %v1145
        %v1148 = vshrl.u32 %v897, 16
        %v1150 = vrot.slane %v1148, 3
        %v1151 = vshll.u32 %v897, 16
        %v1153 = vrot.slane %v1151, 4
        %v1154 = vor.u32 %v1150, %v1153
        %v1155 = vsel %vm900, %v1146, %v1154
        %v1157 = vshrl.u32 %v898, 16
        %v1159 = vrot.slane %v1157, 3
        %v1160 = vshll.u32 %v898, 16
        %v1162 = vrot.slane %v1160, 4
        %v1163 = vor.u32 %v1159, %v1162
        %v1165 = vshrl.u32 %v899, 16
        %v1167 = vrot.slane %v1165, 3
        %v1168 = vshll.u32 %v899, 16
        %v1170 = vrot.slane %v1168, 4
        %v1171 = vor.u32 %v1167, %v1170
        %v1172 = vsel %vm900, %v1163, %v1171
        %v1189 = vld [vmem:[#allocation8] sm:$0xf]
        %v1190 = vld [vmem:[#allocation8 + $0x4] sm:$0xf]
        %v1191 = vld [vmem:[#allocation8 + $0x8] sm:$0xf]
        %v1192 = vld [vmem:[#allocation8 + $0xc] sm:$0xf]
        %v1193 = vld [vmem:[#allocation8 + $0x10] sm:$0xf]
        %v1194 = vld [vmem:[#allocation8 + $0x14] sm:$0xf]
        %v1195 = vld [vmem:[#allocation8 + $0x18] sm:$0xf]
        %v1196 = vld [vmem:[#allocation8 + $0x1c] sm:$0xf]
        %v1197 = vld [vmem:[#allocation8 + $0x20] sm:$0xf]
        %v1198 = vld [vmem:[#allocation8 + $0x24] sm:$0xf]
        %v1199 = vld [vmem:[#allocation8 + $0x28] sm:$0xf]
        %v1200 = vld [vmem:[#allocation8 + $0x2c] sm:$0xf]
        %v1201 = vld [vmem:[#allocation8 + $0x30] sm:$0xf]
        %v1202 = vld [vmem:[#allocation8 + $0x34] sm:$0xf]
        %v1203 = vld [vmem:[#allocation8 + $0x38] sm:$0xf]
        %v1204 = vld [vmem:[#allocation8 + $0x3c] sm:$0xf]
        %v1205 = vld [vmem:[#allocation2] sm:$0xf0]
        %v1206 = vld [vmem:[#allocation2 + $0x10] sm:$0xf0]
        %v1207 = vld [vmem:[#allocation2 + $0x20] sm:$0xf0]
        %v1208 = vld [vmem:[#allocation2 + $0x30] sm:$0xf0]
        %v1209 = vld [vmem:[#allocation2 + $0x40] sm:$0xf0]
        %v1210 = vld [vmem:[#allocation2 + $0x50] sm:$0xf0]
        %v1211 = vld [vmem:[#allocation2 + $0x60] sm:$0xf0]
        %v1212 = vld [vmem:[#allocation2 + $0x70] sm:$0xf0]
        %v1213 = vld [vmem:[#allocation2 + $0x80] sm:$0xf0]
        %v1214 = vld [vmem:[#allocation2 + $0x90] sm:$0xf0]
        %v1215 = vld [vmem:[#allocation2 + $0xa0] sm:$0xf0]
        %v1216 = vld [vmem:[#allocation2 + $0xb0] sm:$0xf0]
        %v1217 = vld [vmem:[#allocation2 + $0xc0] sm:$0xf0]
        %v1218 = vld [vmem:[#allocation2 + $0xd0] sm:$0xf0]
        %v1219 = vld [vmem:[#allocation2 + $0xe0] sm:$0xf0]
        %v1220 = vld [vmem:[#allocation2 + $0xf0] sm:$0xf0]
        %vm1253 = vcmask 1043456
        %v1254 = vrot.slane %v1205, 4
        %v1255 = vrot.slane %v869, 4
        %v1256 = vsel %vm1253, %v1254, %v1255
        %v1257 = vrot.slane %v1206, 4
        %v1258 = vrot.slane %v871, 4
        %v1259 = vsel %vm1253, %v1257, %v1258
        %v1260 = vrot.slane %v1207, 4
        %v1261 = vrot.slane %v873, 4
        %v1262 = vsel %vm1253, %v1260, %v1261
        %v1263 = vrot.slane %v1208, 4
        %v1264 = vrot.slane %v875, 4
        %v1265 = vsel %vm1253, %v1263, %v1264
        %v1266 = vrot.slane %v1209, 4
        %v1267 = vrot.slane %v877, 4
        %v1268 = vsel %vm1253, %v1266, %v1267
        %v1269 = vrot.slane %v1210, 4
        %v1270 = vrot.slane %v879, 4
        %v1271 = vsel %vm1253, %v1269, %v1270
        %v1272 = vrot.slane %v1211, 4
        %v1273 = vrot.slane %v881, 4
        %v1274 = vsel %vm1253, %v1272, %v1273
        %v1275 = vrot.slane %v1212, 4
        %v1276 = vrot.slane %v883, 4
        %v1277 = vsel %vm1253, %v1275, %v1276
        %v1278 = vrot.slane %v1213, 4
        %v1279 = vrot.slane %v885, 4
        %v1280 = vsel %vm1253, %v1278, %v1279
        %v1281 = vrot.slane %v1214, 4
        %v1282 = vrot.slane %v887, 4
        %v1283 = vsel %vm1253, %v1281, %v1282
        %v1284 = vrot.slane %v1215, 4
        %v1285 = vrot.slane %v889, 4
        %v1286 = vsel %vm1253, %v1284, %v1285
        %v1287 = vrot.slane %v1216, 4
        %v1288 = vrot.slane %v891, 4
        %v1289 = vsel %vm1253, %v1287, %v1288
        %v1290 = vrot.slane %v1217, 4
        %v1291 = vrot.slane %v893, 4
        %v1292 = vsel %vm1253, %v1290, %v1291
        %v1293 = vrot.slane %v1218, 4
        %v1294 = vrot.slane %v895, 4
        %v1295 = vsel %vm1253, %v1293, %v1294
        %v1296 = vrot.slane %v1219, 4
        %v1297 = vrot.slane %v897, 4
        %v1298 = vsel %vm1253, %v1296, %v1297
        %v1299 = vrot.slane %v1220, 4
        %v1300 = vrot.slane %v899, 4
        %v1301 = vsel %vm1253, %v1299, %v1300
        %s1318 = scalar_lea.vmem [#allocation8], 64
        %v1319 = vld [vmem:[%s1318] sm:$0xf]
        %v1320 = vld [vmem:[%s1318 + $0x4] sm:$0xf]
        %v1321 = vld [vmem:[%s1318 + $0x8] sm:$0xf]
        %v1322 = vld [vmem:[%s1318 + $0xc] sm:$0xf]
        %v1323 = vld [vmem:[%s1318 + $0x10] sm:$0xf]
        %v1324 = vld [vmem:[%s1318 + $0x14] sm:$0xf]
        %v1325 = vld [vmem:[%s1318 + $0x18] sm:$0xf]
        %v1326 = vld [vmem:[%s1318 + $0x1c] sm:$0xf]
        %v1327 = vld [vmem:[%s1318 + $0x20] sm:$0xf]
        %v1328 = vld [vmem:[%s1318 + $0x24] sm:$0xf]
        %v1329 = vld [vmem:[%s1318 + $0x28] sm:$0xf]
        %v1330 = vld [vmem:[%s1318 + $0x2c] sm:$0xf]
        %v1331 = vld [vmem:[%s1318 + $0x30] sm:$0xf]
        %v1332 = vld [vmem:[%s1318 + $0x34] sm:$0xf]
        %v1333 = vld [vmem:[%s1318 + $0x38] sm:$0xf]
        %v1334 = vld [vmem:[%s1318 + $0x3c] sm:$0xf]
        %v1351 = vunpack.c.l.b16 %v1319
        %v1352 = vunpack.c.l.b16 %v1320
        %v1353 = vunpack.c.l.b16 %v1321
        %v1354 = vunpack.c.l.b16 %v1322
        %v1355 = vunpack.c.l.b16 %v1323
        %v1356 = vunpack.c.l.b16 %v1324
        %v1357 = vunpack.c.l.b16 %v1325
        %v1358 = vunpack.c.l.b16 %v1326
        %v1359 = vunpack.c.l.b16 %v1327
        %v1360 = vunpack.c.l.b16 %v1328
        %v1361 = vunpack.c.l.b16 %v1329
        %v1362 = vunpack.c.l.b16 %v1330
        %v1363 = vunpack.c.l.b16 %v1331
        %v1364 = vunpack.c.l.b16 %v1332
        %v1365 = vunpack.c.l.b16 %v1333
        %v1366 = vunpack.c.l.b16 %v1334
        %v1367 = vpack.c.b16 %v1352, %v1351
        %v1368 = vpack.c.b16 %v1354, %v1353
        %v1369 = vpack.c.b16 %v1356, %v1355
        %v1370 = vpack.c.b16 %v1358, %v1357
        %v1371 = vpack.c.b16 %v1360, %v1359
        %v1372 = vpack.c.b16 %v1362, %v1361
        %v1373 = vpack.c.b16 %v1364, %v1363
        %v1374 = vpack.c.b16 %v1366, %v1365
        %1383 = vmatprep.subr.bf16.mxu0 0
        %1384 = vmatpush1.bf16.msra.mxu0 %v1367
        %1385 = vmatprep.subr.bf16.mxu0 0
        %1386 = vmatpush1.bf16.msra.mxu0 %v1368
        %1387 = vmatprep.subr.bf16.mxu0 0
        %1388 = vmatpush1.bf16.msra.mxu0 %v1369
        %1389 = vmatprep.subr.bf16.mxu0 0
        %1390 = vmatpush1.bf16.msra.mxu0 %v1370
        %1391 = vmatprep.subr.bf16.mxu0 0
        %1392 = vmatpush1.bf16.msra.mxu0 %v1371
        %1393 = vmatprep.subr.bf16.mxu0 0
        %1394 = vmatpush1.bf16.msra.mxu0 %v1372
        %1395 = vmatprep.subr.bf16.mxu0 0
        %1396 = vmatpush1.bf16.msra.mxu0 %v1373
        %1397 = vmatprep.subr.bf16.mxu0 0
        %1398 = vmatpush1.bf16.msra.mxu0 %v1374
        %1399 = vmatprep.subr.bf16.mxu0 0
        %1400 = vmatpush1.bf16.msra.mxu0 0
        %1401 = vmatprep.subr.bf16.mxu0 0
        %1402 = vmatpush1.bf16.msra.mxu0 0
        %1403 = vmatprep.subr.bf16.mxu0 0
        %1404 = vmatpush1.bf16.msra.mxu0 0
        %1405 = vmatprep.subr.bf16.mxu0 0
        %1406 = vmatpush1.bf16.msra.mxu0 0
        %1407 = vmatprep.subr.bf16.mxu0 0
        %1408 = vmatpush1.bf16.msra.mxu0 0
        %1409 = vmatprep.subr.bf16.mxu0 0
        %1410 = vmatpush1.bf16.msra.mxu0 0
        %1411 = vmatprep.subr.bf16.mxu0 0
        %1412 = vmatpush1.bf16.msra.mxu0 0
        %1413 = vmatprep.subr.bf16.mxu0 0
        %1414 = vmatpush1.bf16.msra.mxu0 0
        %1415 = vmatprep.mubr.bf16.mxu0 0
        %1416 = vmatmul.mubr.bf16.gmra.mrb[0].mxu0 %v1256
        %v1417 = vpop.f32.mrb[0].mxu0
        %v1418 = vadd.f32 0.0, %v1417
        %v1419 = vpop.f32.mrb[0].mxu0
        %v1420 = vpop.f32.mrb[0].mxu0
        %v1421 = vadd.f32 0.0, %v1420
        %v1422 = vpop.f32.mrb[0].mxu0
        %1423 = vmatprep.mubr.bf16.mxu0 0
        %1424 = vmatmul.mubr.bf16.gmra.mrb[0].mxu0 %v1259
        %v1425 = vpop.f32.mrb[0].mxu0
        %v1426 = vadd.f32 0.0, %v1425
        %v1427 = vpop.f32.mrb[0].mxu0
        %v1428 = vpop.f32.mrb[0].mxu0
        %v1429 = vadd.f32 0.0, %v1428
        %v1430 = vpop.f32.mrb[0].mxu0
        %1431 = vmatprep.mubr.bf16.mxu0 0
        %1432 = vmatmul.mubr.bf16.gmra.mrb[0].mxu0 %v1262
        %v1433 = vpop.f32.mrb[0].mxu0
        %v1434 = vadd.f32 0.0, %v1433
        %v1435 = vpop.f32.mrb[0].mxu0
        %v1436 = vpop.f32.mrb[0].mxu0
        %v1437 = vadd.f32 0.0, %v1436
        %v1438 = vpop.f32.mrb[0].mxu0
        %1439 = vmatprep.mubr.bf16.mxu0 0
        %1440 = vmatmul.mubr.bf16.gmra.mrb[0].mxu0 %v1265
        %v1441 = vpop.f32.mrb[0].mxu0
        %v1442 = vadd.f32 0.0, %v1441
        %v1443 = vpop.f32.mrb[0].mxu0
        %v1444 = vpop.f32.mrb[0].mxu0
        %v1445 = vadd.f32 0.0, %v1444
        %v1446 = vpop.f32.mrb[0].mxu0
        %1447 = vmatprep.mubr.bf16.mxu0 0
        %1448 = vmatmul.mubr.bf16.gmra.mrb[0].mxu0 %v1268
        %v1449 = vpop.f32.mrb[0].mxu0
        %v1450 = vadd.f32 0.0, %v1449
        %v1451 = vpop.f32.mrb[0].mxu0
        %v1452 = vpop.f32.mrb[0].mxu0
        %v1453 = vadd.f32 0.0, %v1452
        %v1454 = vpop.f32.mrb[0].mxu0
        %1455 = vmatprep.mubr.bf16.mxu0 0
        %1456 = vmatmul.mubr.bf16.gmra.mrb[0].mxu0 %v1271
        %v1457 = vpop.f32.mrb[0].mxu0
        %v1458 = vadd.f32 0.0, %v1457
        %v1459 = vpop.f32.mrb[0].mxu0
        %v1460 = vpop.f32.mrb[0].mxu0
        %v1461 = vadd.f32 0.0, %v1460
        %v1462 = vpop.f32.mrb[0].mxu0
        %1463 = vmatprep.mubr.bf16.mxu0 0
        %1464 = vmatmul.mubr.bf16.gmra.mrb[0].mxu0 %v1274
        %v1465 = vpop.f32.mrb[0].mxu0
        %v1466 = vadd.f32 0.0, %v1465
        %v1467 = vpop.f32.mrb[0].mxu0
        %v1468 = vpop.f32.mrb[0].mxu0
        %v1469 = vadd.f32 0.0, %v1468
        %v1470 = vpop.f32.mrb[0].mxu0
        %1471 = vmatprep.mubr.bf16.mxu0 0
        %1472 = vmatmul.mubr.bf16.gmra.mrb[0].mxu0 %v1277
        %v1473 = vpop.f32.mrb[0].mxu0
        %v1474 = vadd.f32 0.0, %v1473
        %v1475 = vpop.f32.mrb[0].mxu0
        %v1476 = vpop.f32.mrb[0].mxu0
        %v1477 = vadd.f32 0.0, %v1476
        %v1478 = vpop.f32.mrb[0].mxu0
        %1479 = vmatprep.mubr.bf16.mxu0 0
        %1480 = vmatmul.mubr.bf16.gmra.mrb[0].mxu0 %v1280
        %v1481 = vpop.f32.mrb[0].mxu0
        %v1482 = vadd.f32 0.0, %v1481
        %v1483 = vpop.f32.mrb[0].mxu0
        %v1484 = vpop.f32.mrb[0].mxu0
        %v1485 = vadd.f32 0.0, %v1484
        %v1486 = vpop.f32.mrb[0].mxu0
        %1487 = vmatprep.mubr.bf16.mxu0 0
        %1488 = vmatmul.mubr.bf16.gmra.mrb[0].mxu0 %v1283
        %v1489 = vpop.f32.mrb[0].mxu0
        %v1490 = vadd.f32 0.0, %v1489
        %v1491 = vpop.f32.mrb[0].mxu0
        %v1492 = vpop.f32.mrb[0].mxu0
        %v1493 = vadd.f32 0.0, %v1492
        %v1494 = vpop.f32.mrb[0].mxu0
        %1495 = vmatprep.mubr.bf16.mxu0 0
        %1496 = vmatmul.mubr.bf16.gmra.mrb[0].mxu0 %v1286
        %v1497 = vpop.f32.mrb[0].mxu0
        %v1498 = vadd.f32 0.0, %v1497
        %v1499 = vpop.f32.mrb[0].mxu0
        %v1500 = vpop.f32.mrb[0].mxu0
        %v1501 = vadd.f32 0.0, %v1500
        %v1502 = vpop.f32.mrb[0].mxu0
        %1503 = vmatprep.mubr.bf16.mxu0 0
        %1504 = vmatmul.mubr.bf16.gmra.mrb[0].mxu0 %v1289
        %v1505 = vpop.f32.mrb[0].mxu0
        %v1506 = vadd.f32 0.0, %v1505
        %v1507 = vpop.f32.mrb[0].mxu0
        %v1508 = vpop.f32.mrb[0].mxu0
        %v1509 = vadd.f32 0.0, %v1508
        %v1510 = vpop.f32.mrb[0].mxu0
        %1511 = vmatprep.mubr.bf16.mxu0 0
        %1512 = vmatmul.mubr.bf16.gmra.mrb[0].mxu0 %v1292
        %v1513 = vpop.f32.mrb[0].mxu0
        %v1514 = vadd.f32 0.0, %v1513
        %v1515 = vpop.f32.mrb[0].mxu0
        %v1516 = vpop.f32.mrb[0].mxu0
        %v1517 = vadd.f32 0.0, %v1516
        %v1518 = vpop.f32.mrb[0].mxu0
        %1519 = vmatprep.mubr.bf16.mxu0 0
        %1520 = vmatmul.mubr.bf16.gmra.mrb[0].mxu0 %v1295
        %v1521 = vpop.f32.mrb[0].mxu0
        %v1522 = vadd.f32 0.0, %v1521
        %v1523 = vpop.f32.mrb[0].mxu0
        %v1524 = vpop.f32.mrb[0].mxu0
        %v1525 = vadd.f32 0.0, %v1524
        %v1526 = vpop.f32.mrb[0].mxu0
        %1527 = vmatprep.mubr.bf16.mxu0 0
        %1528 = vmatmul.mubr.bf16.gmra.mrb[0].mxu0 %v1298
        %v1529 = vpop.f32.mrb[0].mxu0
        %v1530 = vadd.f32 0.0, %v1529
        %v1531 = vpop.f32.mrb[0].mxu0
        %v1532 = vpop.f32.mrb[0].mxu0
        %v1533 = vadd.f32 0.0, %v1532
        %v1534 = vpop.f32.mrb[0].mxu0
        %1535 = vmatprep.mubr.bf16.mxu0 0
        %1536 = vmatmul.mubr.bf16.gmra.mrb[0].mxu0 %v1301
        %v1537 = vpop.f32.mrb[0].mxu0
        %v1538 = vadd.f32 0.0, %v1537
        %v1539 = vpop.f32.mrb[0].mxu0
        %v1540 = vpop.f32.mrb[0].mxu0
        %v1541 = vadd.f32 0.0, %v1540
        %v1542 = vpop.f32.mrb[0].mxu0
        %1543 = vdwg.mxu0
        %v1560 = vunpack.c.l.b16 %v1189
        %v1561 = vunpack.c.l.b16 %v1190
        %v1562 = vunpack.c.l.b16 %v1191
        %v1563 = vunpack.c.l.b16 %v1192
        %v1564 = vunpack.c.l.b16 %v1193
        %v1565 = vunpack.c.l.b16 %v1194
        %v1566 = vunpack.c.l.b16 %v1195
        %v1567 = vunpack.c.l.b16 %v1196
        %v1568 = vunpack.c.l.b16 %v1197
        %v1569 = vunpack.c.l.b16 %v1198
        %v1570 = vunpack.c.l.b16 %v1199
        %v1571 = vunpack.c.l.b16 %v1200
        %v1572 = vunpack.c.l.b16 %v1201
        %v1573 = vunpack.c.l.b16 %v1202
        %v1574 = vunpack.c.l.b16 %v1203
        %v1575 = vunpack.c.l.b16 %v1204
        %v1576 = vpack.c.b16 %v1561, %v1560
        %v1577 = vpack.c.b16 %v1563, %v1562
        %v1578 = vpack.c.b16 %v1565, %v1564
        %v1579 = vpack.c.b16 %v1567, %v1566
        %v1580 = vpack.c.b16 %v1569, %v1568
        %v1581 = vpack.c.b16 %v1571, %v1570
        %v1582 = vpack.c.b16 %v1573, %v1572
        %v1583 = vpack.c.b16 %v1575, %v1574
        %1592 = vmatprep.subr.bf16.mxu0 0
        %1593 = vmatpush1.bf16.msra.mxu0 %v1576
        %1594 = vmatprep.subr.bf16.mxu0 0
        %1595 = vmatpush1.bf16.msra.mxu0 %v1577
        %1596 = vmatprep.subr.bf16.mxu0 0
        %1597 = vmatpush1.bf16.msra.mxu0 %v1578
        %1598 = vmatprep.subr.bf16.mxu0 0
        %1599 = vmatpush1.bf16.msra.mxu0 %v1579
        %1600 = vmatprep.subr.bf16.mxu0 0
        %1601 = vmatpush1.bf16.msra.mxu0 %v1580
        %1602 = vmatprep.subr.bf16.mxu0 0
        %1603 = vmatpush1.bf16.msra.mxu0 %v1581
        %1604 = vmatprep.subr.bf16.mxu0 0
        %1605 = vmatpush1.bf16.msra.mxu0 %v1582
        %1606 = vmatprep.subr.bf16.mxu0 0
        %1607 = vmatpush1.bf16.msra.mxu0 %v1583
        %1608 = vmatprep.subr.bf16.mxu0 0
        %1609 = vmatpush1.bf16.msra.mxu0 0
        %1610 = vmatprep.subr.bf16.mxu0 0
        %1611 = vmatpush1.bf16.msra.mxu0 0
        %1612 = vmatprep.subr.bf16.mxu0 0
        %1613 = vmatpush1.bf16.msra.mxu0 0
        %1614 = vmatprep.subr.bf16.mxu0 0
        %1615 = vmatpush1.bf16.msra.mxu0 0
        %1616 = vmatprep.subr.bf16.mxu0 0
        %1617 = vmatpush1.bf16.msra.mxu0 0
        %1618 = vmatprep.subr.bf16.mxu0 0
        %1619 = vmatpush1.bf16.msra.mxu0 0
        %1620 = vmatprep.subr.bf16.mxu0 0
        %1621 = vmatpush1.bf16.msra.mxu0 0
        %1622 = vmatprep.subr.bf16.mxu0 0
        %1623 = vmatpush1.bf16.msra.mxu0 0
        %1624 = vmatprep.mubr.bf16.mxu0 0
        %1625 = vmatmul.mubr.bf16.gmra.mrb[0].mxu0 %v917
        %v1626 = vpop.f32.mrb[0].mxu0
        %v1627 = vadd.f32 %v1418, %v1626
        %v1628 = vpop.f32.mrb[0].mxu0
        %v1629 = vpop.f32.mrb[0].mxu0
        %v1630 = vadd.f32 %v1421, %v1629
        %v1631 = vpop.f32.mrb[0].mxu0
        %1632 = vmatprep.mubr.bf16.mxu0 0
        %1633 = vmatmul.mubr.bf16.gmra.mrb[0].mxu0 %v934
        %v1634 = vpop.f32.mrb[0].mxu0
        %v1635 = vadd.f32 %v1426, %v1634
        %v1636 = vpop.f32.mrb[0].mxu0
        %v1637 = vpop.f32.mrb[0].mxu0
        %v1638 = vadd.f32 %v1429, %v1637
        %v1639 = vpop.f32.mrb[0].mxu0
        %1640 = vmatprep.mubr.bf16.mxu0 0
        %1641 = vmatmul.mubr.bf16.gmra.mrb[0].mxu0 %v951
        %v1642 = vpop.f32.mrb[0].mxu0
        %v1643 = vadd.f32 %v1434, %v1642
        %v1644 = vpop.f32.mrb[0].mxu0
        %v1645 = vpop.f32.mrb[0].mxu0
        %v1646 = vadd.f32 %v1437, %v1645
        %v1647 = vpop.f32.mrb[0].mxu0
        %1648 = vmatprep.mubr.bf16.mxu0 0
        %1649 = vmatmul.mubr.bf16.gmra.mrb[0].mxu0 %v968
        %v1650 = vpop.f32.mrb[0].mxu0
        %v1651 = vadd.f32 %v1442, %v1650
        %v1652 = vpop.f32.mrb[0].mxu0
        %v1653 = vpop.f32.mrb[0].mxu0
        %v1654 = vadd.f32 %v1445, %v1653
        %v1655 = vpop.f32.mrb[0].mxu0
        %1656 = vmatprep.mubr.bf16.mxu0 0
        %1657 = vmatmul.mubr.bf16.gmra.mrb[0].mxu0 %v985
        %v1658 = vpop.f32.mrb[0].mxu0
        %v1659 = vadd.f32 %v1450, %v1658
        %v1660 = vpop.f32.mrb[0].mxu0
        %v1661 = vpop.f32.mrb[0].mxu0
        %v1662 = vadd.f32 %v1453, %v1661
        %v1663 = vpop.f32.mrb[0].mxu0
        %1664 = vmatprep.mubr.bf16.mxu0 0
        %1665 = vmatmul.mubr.bf16.gmra.mrb[0].mxu0 %v1002
        %v1666 = vpop.f32.mrb[0].mxu0
        %v1667 = vadd.f32 %v1458, %v1666
        %v1668 = vpop.f32.mrb[0].mxu0
        %v1669 = vpop.f32.mrb[0].mxu0
        %v1670 = vadd.f32 %v1461, %v1669
        %v1671 = vpop.f32.mrb[0].mxu0
        %1672 = vmatprep.mubr.bf16.mxu0 0
        %1673 = vmatmul.mubr.bf16.gmra.mrb[0].mxu0 %v1019
        %v1674 = vpop.f32.mrb[0].mxu0
        %v1675 = vadd.f32 %v1466, %v1674
        %v1676 = vpop.f32.mrb[0].mxu0
        %v1677 = vpop.f32.mrb[0].mxu0
        %v1678 = vadd.f32 %v1469, %v1677
        %v1679 = vpop.f32.mrb[0].mxu0
        %1680 = vmatprep.mubr.bf16.mxu0 0
        %1681 = vmatmul.mubr.bf16.gmra.mrb[0].mxu0 %v1036
        %v1682 = vpop.f32.mrb[0].mxu0
        %v1683 = vadd.f32 %v1474, %v1682
        %v1684 = vpop.f32.mrb[0].mxu0
        %v1685 = vpop.f32.mrb[0].mxu0
        %v1686 = vadd.f32 %v1477, %v1685
        %v1687 = vpop.f32.mrb[0].mxu0
        %1688 = vmatprep.mubr.bf16.mxu0 0
        %1689 = vmatmul.mubr.bf16.gmra.mrb[0].mxu0 %v1053
        %v1690 = vpop.f32.mrb[0].mxu0
        %v1691 = vadd.f32 %v1482, %v1690
        %v1692 = vpop.f32.mrb[0].mxu0
        %v1693 = vpop.f32.mrb[0].mxu0
        %v1694 = vadd.f32 %v1485, %v1693
        %v1695 = vpop.f32.mrb[0].mxu0
        %1696 = vmatprep.mubr.bf16.mxu0 0
        %1697 = vmatmul.mubr.bf16.gmra.mrb[0].mxu0 %v1070
        %v1698 = vpop.f32.mrb[0].mxu0
        %v1699 = vadd.f32 %v1490, %v1698
        %v1700 = vpop.f32.mrb[0].mxu0
        %v1701 = vpop.f32.mrb[0].mxu0
        %v1702 = vadd.f32 %v1493, %v1701
        %v1703 = vpop.f32.mrb[0].mxu0
        %1704 = vmatprep.mubr.bf16.mxu0 0
        %1705 = vmatmul.mubr.bf16.gmra.mrb[0].mxu0 %v1087
        %v1706 = vpop.f32.mrb[0].mxu0
        %v1707 = vadd.f32 %v1498, %v1706
        %v1708 = vpop.f32.mrb[0].mxu0
        %v1709 = vpop.f32.mrb[0].mxu0
        %v1710 = vadd.f32 %v1501, %v1709
        %v1711 = vpop.f32.mrb[0].mxu0
        %1712 = vmatprep.mubr.bf16.mxu0 0
        %1713 = vmatmul.mubr.bf16.gmra.mrb[0].mxu0 %v1104
        %v1714 = vpop.f32.mrb[0].mxu0
        %v1715 = vadd.f32 %v1506, %v1714
        %v1716 = vpop.f32.mrb[0].mxu0
        %v1717 = vpop.f32.mrb[0].mxu0
        %v1718 = vadd.f32 %v1509, %v1717
        %v1719 = vpop.f32.mrb[0].mxu0
        %1720 = vmatprep.mubr.bf16.mxu0 0
        %1721 = vmatmul.mubr.bf16.gmra.mrb[0].mxu0 %v1121
        %v1722 = vpop.f32.mrb[0].mxu0
        %v1723 = vadd.f32 %v1514, %v1722
        %v1724 = vpop.f32.mrb[0].mxu0
        %v1725 = vpop.f32.mrb[0].mxu0
        %v1726 = vadd.f32 %v1517, %v1725
        %v1727 = vpop.f32.mrb[0].mxu0
        %1728 = vmatprep.mubr.bf16.mxu0 0
        %1729 = vmatmul.mubr.bf16.gmra.mrb[0].mxu0 %v1138
        %v1730 = vpop.f32.mrb[0].mxu0
        %v1731 = vadd.f32 %v1522, %v1730
        %v1732 = vpop.f32.mrb[0].mxu0
        %v1733 = vpop.f32.mrb[0].mxu0
        %v1734 = vadd.f32 %v1525, %v1733
        %v1735 = vpop.f32.mrb[0].mxu0
        %1736 = vmatprep.mubr.bf16.mxu0 0
        %1737 = vmatmul.mubr.bf16.gmra.mrb[0].mxu0 %v1155
        %v1738 = vpop.f32.mrb[0].mxu0
        %v1739 = vadd.f32 %v1530, %v1738
        %v1740 = vpop.f32.mrb[0].mxu0
        %v1741 = vpop.f32.mrb[0].mxu0
        %v1742 = vadd.f32 %v1533, %v1741
        %v1743 = vpop.f32.mrb[0].mxu0
        %1744 = vmatprep.mubr.bf16.mxu0 0
        %1745 = vmatmul.mubr.bf16.gmra.mrb[0].mxu0 %v1172
        %v1746 = vpop.f32.mrb[0].mxu0
        %v1747 = vadd.f32 %v1538, %v1746
        %v1748 = vpop.f32.mrb[0].mxu0
        %v1749 = vpop.f32.mrb[0].mxu0
        %v1750 = vadd.f32 %v1541, %v1749
        %v1751 = vpop.f32.mrb[0].mxu0
        %1752 = vdwg.mxu0
        %v1753 = vld [vmem:[#allocation2 + $0x8] sm:$0x1f]
        %v1754 = vld [vmem:[#allocation2 + $0x18] sm:$0x1f]
        %v1755 = vld [vmem:[#allocation2 + $0x28] sm:$0x1f]
        %v1756 = vld [vmem:[#allocation2 + $0x38] sm:$0x1f]
        %v1757 = vld [vmem:[#allocation2 + $0x48] sm:$0x1f]
        %v1758 = vld [vmem:[#allocation2 + $0x58] sm:$0x1f]
        %v1759 = vld [vmem:[#allocation2 + $0x68] sm:$0x1f]
        %v1760 = vld [vmem:[#allocation2 + $0x78] sm:$0x1f]
        %v1761 = vld [vmem:[#allocation2 + $0x88] sm:$0x1f]
        %v1762 = vld [vmem:[#allocation2 + $0x98] sm:$0x1f]
        %v1763 = vld [vmem:[#allocation2 + $0xa8] sm:$0x1f]
        %v1764 = vld [vmem:[#allocation2 + $0xb8] sm:$0x1f]
        %v1765 = vld [vmem:[#allocation2 + $0xc8] sm:$0x1f]
        %v1766 = vld [vmem:[#allocation2 + $0xd8] sm:$0x1f]
        %v1767 = vld [vmem:[#allocation2 + $0xe8] sm:$0x1f]
        %v1768 = vld [vmem:[#allocation2 + $0xf8] sm:$0x1f]
        %vm1769 = vsmask.f32 3328
        %v1771 = vshrl.u32 %v1205, 16
        %v1773 = vrot.slane %v1771, 4
        %v1774 = vshll.u32 %v1205, 16
        %v1776 = vrot.slane %v1774, 5
        %v1777 = vor.u32 %v1773, %v1776
        %v1779 = vshrl.u32 %v1753, 16
        %v1781 = vrot.slane %v1779, 4
        %v1782 = vshll.u32 %v1753, 16
        %v1784 = vrot.slane %v1782, 5
        %v1785 = vor.u32 %v1781, %v1784
        %v1786 = vsel %vm1769, %v1777, %v1785
        %v1788 = vshrl.u32 %v1206, 16
        %v1790 = vrot.slane %v1788, 4
        %v1791 = vshll.u32 %v1206, 16
        %v1793 = vrot.slane %v1791, 5
        %v1794 = vor.u32 %v1790, %v1793
        %v1796 = vshrl.u32 %v1754, 16
        %v1798 = vrot.slane %v1796, 4
        %v1799 = vshll.u32 %v1754, 16
        %v1801 = vrot.slane %v1799, 5
        %v1802 = vor.u32 %v1798, %v1801
        %v1803 = vsel %vm1769, %v1794, %v1802
        %v1805 = vshrl.u32 %v1207, 16
        %v1807 = vrot.slane %v1805, 4
        %v1808 = vshll.u32 %v1207, 16
        %v1810 = vrot.slane %v1808, 5
        %v1811 = vor.u32 %v1807, %v1810
        %v1813 = vshrl.u32 %v1755, 16
        %v1815 = vrot.slane %v1813, 4
        %v1816 = vshll.u32 %v1755, 16
        %v1818 = vrot.slane %v1816, 5
        %v1819 = vor.u32 %v1815, %v1818
        %v1820 = vsel %vm1769, %v1811, %v1819
        %v1822 = vshrl.u32 %v1208, 16
        %v1824 = vrot.slane %v1822, 4
        %v1825 = vshll.u32 %v1208, 16
        %v1827 = vrot.slane %v1825, 5
        %v1828 = vor.u32 %v1824, %v1827
        %v1830 = vshrl.u32 %v1756, 16
        %v1832 = vrot.slane %v1830, 4
        %v1833 = vshll.u32 %v1756, 16
        %v1835 = vrot.slane %v1833, 5
        %v1836 = vor.u32 %v1832, %v1835
        %v1837 = vsel %vm1769, %v1828, %v1836
        %v1839 = vshrl.u32 %v1209, 16
        %v1841 = vrot.slane %v1839, 4
        %v1842 = vshll.u32 %v1209, 16
        %v1844 = vrot.slane %v1842, 5
        %v1845 = vor.u32 %v1841, %v1844
        %v1847 = vshrl.u32 %v1757, 16
        %v1849 = vrot.slane %v1847, 4
        %v1850 = vshll.u32 %v1757, 16
        %v1852 = vrot.slane %v1850, 5
        %v1853 = vor.u32 %v1849, %v1852
        %v1854 = vsel %vm1769, %v1845, %v1853
        %v1856 = vshrl.u32 %v1210, 16
        %v1858 = vrot.slane %v1856, 4
        %v1859 = vshll.u32 %v1210, 16
        %v1861 = vrot.slane %v1859, 5
        %v1862 = vor.u32 %v1858, %v1861
        %v1864 = vshrl.u32 %v1758, 16
        %v1866 = vrot.slane %v1864, 4
        %v1867 = vshll.u32 %v1758, 16
        %v1869 = vrot.slane %v1867, 5
        %v1870 = vor.u32 %v1866, %v1869
        %v1871 = vsel %vm1769, %v1862, %v1870
        %v1873 = vshrl.u32 %v1211, 16
        %v1875 = vrot.slane %v1873, 4
        %v1876 = vshll.u32 %v1211, 16
        %v1878 = vrot.slane %v1876, 5
        %v1879 = vor.u32 %v1875, %v1878
        %v1881 = vshrl.u32 %v1759, 16
        %v1883 = vrot.slane %v1881, 4
        %v1884 = vshll.u32 %v1759, 16
        %v1886 = vrot.slane %v1884, 5
        %v1887 = vor.u32 %v1883, %v1886
        %v1888 = vsel %vm1769, %v1879, %v1887
        %v1890 = vshrl.u32 %v1212, 16
        %v1892 = vrot.slane %v1890, 4
        %v1893 = vshll.u32 %v1212, 16
        %v1895 = vrot.slane %v1893, 5
        %v1896 = vor.u32 %v1892, %v1895
        %v1898 = vshrl.u32 %v1760, 16
        %v1900 = vrot.slane %v1898, 4
        %v1901 = vshll.u32 %v1760, 16
        %v1903 = vrot.slane %v1901, 5
        %v1904 = vor.u32 %v1900, %v1903
        %v1905 = vsel %vm1769, %v1896, %v1904
        %v1907 = vshrl.u32 %v1213, 16
        %v1909 = vrot.slane %v1907, 4
        %v1910 = vshll.u32 %v1213, 16
        %v1912 = vrot.slane %v1910, 5
        %v1913 = vor.u32 %v1909, %v1912
        %v1915 = vshrl.u32 %v1761, 16
        %v1917 = vrot.slane %v1915, 4
        %v1918 = vshll.u32 %v1761, 16
        %v1920 = vrot.slane %v1918, 5
        %v1921 = vor.u32 %v1917, %v1920
        %v1922 = vsel %vm1769, %v1913, %v1921
        %v1924 = vshrl.u32 %v1214, 16
        %v1926 = vrot.slane %v1924, 4
        %v1927 = vshll.u32 %v1214, 16
        %v1929 = vrot.slane %v1927, 5
        %v1930 = vor.u32 %v1926, %v1929
        %v1932 = vshrl.u32 %v1762, 16
        %v1934 = vrot.slane %v1932, 4
        %v1935 = vshll.u32 %v1762, 16
        %v1937 = vrot.slane %v1935, 5
        %v1938 = vor.u32 %v1934, %v1937
        %v1939 = vsel %vm1769, %v1930, %v1938
        %v1941 = vshrl.u32 %v1215, 16
        %v1943 = vrot.slane %v1941, 4
        %v1944 = vshll.u32 %v1215, 16
        %v1946 = vrot.slane %v1944, 5
        %v1947 = vor.u32 %v1943, %v1946
        %v1949 = vshrl.u32 %v1763, 16
        %v1951 = vrot.slane %v1949, 4
        %v1952 = vshll.u32 %v1763, 16
        %v1954 = vrot.slane %v1952, 5
        %v1955 = vor.u32 %v1951, %v1954
        %v1956 = vsel %vm1769, %v1947, %v1955
        %v1958 = vshrl.u32 %v1216, 16
        %v1960 = vrot.slane %v1958, 4
        %v1961 = vshll.u32 %v1216, 16
        %v1963 = vrot.slane %v1961, 5
        %v1964 = vor.u32 %v1960, %v1963
        %v1966 = vshrl.u32 %v1764, 16
        %v1968 = vrot.slane %v1966, 4
        %v1969 = vshll.u32 %v1764, 16
        %v1971 = vrot.slane %v1969, 5
        %v1972 = vor.u32 %v1968, %v1971
        %v1973 = vsel %vm1769, %v1964, %v1972
        %v1975 = vshrl.u32 %v1217, 16
        %v1977 = vrot.slane %v1975, 4
        %v1978 = vshll.u32 %v1217, 16
        %v1980 = vrot.slane %v1978, 5
        %v1981 = vor.u32 %v1977, %v1980
        %v1983 = vshrl.u32 %v1765, 16
        %v1985 = vrot.slane %v1983, 4
        %v1986 = vshll.u32 %v1765, 16
        %v1988 = vrot.slane %v1986, 5
        %v1989 = vor.u32 %v1985, %v1988
        %v1990 = vsel %vm1769, %v1981, %v1989
        %v1992 = vshrl.u32 %v1218, 16
        %v1994 = vrot.slane %v1992, 4
        %v1995 = vshll.u32 %v1218, 16
        %v1997 = vrot.slane %v1995, 5
        %v1998 = vor.u32 %v1994, %v1997
        %v2000 = vshrl.u32 %v1766, 16
        %v2002 = vrot.slane %v2000, 4
        %v2003 = vshll.u32 %v1766, 16
        %v2005 = vrot.slane %v2003, 5
        %v2006 = vor.u32 %v2002, %v2005
        %v2007 = vsel %vm1769, %v1998, %v2006
        %v2009 = vshrl.u32 %v1219, 16
        %v2011 = vrot.slane %v2009, 4
        %v2012 = vshll.u32 %v1219, 16
        %v2014 = vrot.slane %v2012, 5
        %v2015 = vor.u32 %v2011, %v2014
        %v2017 = vshrl.u32 %v1767, 16
        %v2019 = vrot.slane %v2017, 4
        %v2020 = vshll.u32 %v1767, 16
        %v2022 = vrot.slane %v2020, 5
        %v2023 = vor.u32 %v2019, %v2022
        %v2024 = vsel %vm1769, %v2015, %v2023
        %v2026 = vshrl.u32 %v1220, 16
        %v2028 = vrot.slane %v2026, 4
        %v2029 = vshll.u32 %v1220, 16
        %v2031 = vrot.slane %v2029, 5
        %v2032 = vor.u32 %v2028, %v2031
        %v2034 = vshrl.u32 %v1768, 16
        %v2036 = vrot.slane %v2034, 4
        %v2037 = vshll.u32 %v1768, 16
        %v2039 = vrot.slane %v2037, 5
        %v2040 = vor.u32 %v2036, %v2039
        %v2041 = vsel %vm1769, %v2032, %v2040
        %s2058 = scalar_lea.vmem [#allocation8], 128
        %v2059 = vld [vmem:[%s2058] sm:$0xf]
        %v2060 = vld [vmem:[%s2058 + $0x4] sm:$0xf]
        %v2061 = vld [vmem:[%s2058 + $0x8] sm:$0xf]
        %v2062 = vld [vmem:[%s2058 + $0xc] sm:$0xf]
        %v2063 = vld [vmem:[%s2058 + $0x10] sm:$0xf]
        %v2064 = vld [vmem:[%s2058 + $0x14] sm:$0xf]
        %v2065 = vld [vmem:[%s2058 + $0x18] sm:$0xf]
        %v2066 = vld [vmem:[%s2058 + $0x1c] sm:$0xf]
        %v2067 = vld [vmem:[%s2058 + $0x20] sm:$0xf]
        %v2068 = vld [vmem:[%s2058 + $0x24] sm:$0xf]
        %v2069 = vld [vmem:[%s2058 + $0x28] sm:$0xf]
        %v2070 = vld [vmem:[%s2058 + $0x2c] sm:$0xf]
        %v2071 = vld [vmem:[%s2058 + $0x30] sm:$0xf]
        %v2072 = vld [vmem:[%s2058 + $0x34] sm:$0xf]
        %v2073 = vld [vmem:[%s2058 + $0x38] sm:$0xf]
        %v2074 = vld [vmem:[%s2058 + $0x3c] sm:$0xf]
        %v2091 = vunpack.c.l.b16 %v2059
        %v2092 = vunpack.c.l.b16 %v2060
        %v2093 = vunpack.c.l.b16 %v2061
        %v2094 = vunpack.c.l.b16 %v2062
        %v2095 = vunpack.c.l.b16 %v2063
        %v2096 = vunpack.c.l.b16 %v2064
        %v2097 = vunpack.c.l.b16 %v2065
        %v2098 = vunpack.c.l.b16 %v2066
        %v2099 = vunpack.c.l.b16 %v2067
        %v2100 = vunpack.c.l.b16 %v2068
        %v2101 = vunpack.c.l.b16 %v2069
        %v2102 = vunpack.c.l.b16 %v2070
        %v2103 = vunpack.c.l.b16 %v2071
        %v2104 = vunpack.c.l.b16 %v2072
        %v2105 = vunpack.c.l.b16 %v2073
        %v2106 = vunpack.c.l.b16 %v2074
        %v2107 = vpack.c.b16 %v2092, %v2091
        %v2108 = vpack.c.b16 %v2094, %v2093
        %v2109 = vpack.c.b16 %v2096, %v2095
        %v2110 = vpack.c.b16 %v2098, %v2097
        %v2111 = vpack.c.b16 %v2100, %v2099
        %v2112 = vpack.c.b16 %v2102, %v2101
        %v2113 = vpack.c.b16 %v2104, %v2103
        %v2114 = vpack.c.b16 %v2106, %v2105
        %2123 = vmatprep.subr.bf16.mxu0 0
        %2124 = vmatpush1.bf16.msra.mxu0 %v2107
        %2125 = vmatprep.subr.bf16.mxu0 0
        %2126 = vmatpush1.bf16.msra.mxu0 %v2108
        %2127 = vmatprep.subr.bf16.mxu0 0
        %2128 = vmatpush1.bf16.msra.mxu0 %v2109
        %2129 = vmatprep.subr.bf16.mxu0 0
        %2130 = vmatpush1.bf16.msra.mxu0 %v2110
        %2131 = vmatprep.subr.bf16.mxu0 0
        %2132 = vmatpush1.bf16.msra.mxu0 %v2111
        %2133 = vmatprep.subr.bf16.mxu0 0
        %2134 = vmatpush1.bf16.msra.mxu0 %v2112
        %2135 = vmatprep.subr.bf16.mxu0 0
        %2136 = vmatpush1.bf16.msra.mxu0 %v2113
        %2137 = vmatprep.subr.bf16.mxu0 0
        %2138 = vmatpush1.bf16.msra.mxu0 %v2114
        %2139 = vmatprep.subr.bf16.mxu0 0
        %2140 = vmatpush1.bf16.msra.mxu0 0
        %2141 = vmatprep.subr.bf16.mxu0 0
        %2142 = vmatpush1.bf16.msra.mxu0 0
        %2143 = vmatprep.subr.bf16.mxu0 0
        %2144 = vmatpush1.bf16.msra.mxu0 0
        %2145 = vmatprep.subr.bf16.mxu0 0
        %2146 = vmatpush1.bf16.msra.mxu0 0
        %2147 = vmatprep.subr.bf16.mxu0 0
        %2148 = vmatpush1.bf16.msra.mxu0 0
        %2149 = vmatprep.subr.bf16.mxu0 0
        %2150 = vmatpush1.bf16.msra.mxu0 0
        %2151 = vmatprep.subr.bf16.mxu0 0
        %2152 = vmatpush1.bf16.msra.mxu0 0
        %2153 = vmatprep.subr.bf16.mxu0 0
        %2154 = vmatpush1.bf16.msra.mxu0 0
        %2155 = vmatprep.mubr.bf16.mxu0 0
        %2156 = vmatmul.mubr.bf16.gmra.mrb[0].mxu0 %v1786
        %v2157 = vpop.f32.mrb[0].mxu0
        %v2158 = vadd.f32 0.0, %v2157
        %v2159 = vpop.f32.mrb[0].mxu0
        %v2160 = vpop.f32.mrb[0].mxu0
        %v2161 = vadd.f32 0.0, %v2160
        %v2162 = vpop.f32.mrb[0].mxu0
        %2163 = vmatprep.mubr.bf16.mxu0 0
        %2164 = vmatmul.mubr.bf16.gmra.mrb[0].mxu0 %v1803
        %v2165 = vpop.f32.mrb[0].mxu0
        %v2166 = vadd.f32 0.0, %v2165
        %v2167 = vpop.f32.mrb[0].mxu0
        %v2168 = vpop.f32.mrb[0].mxu0
        %v2169 = vadd.f32 0.0, %v2168
        %v2170 = vpop.f32.mrb[0].mxu0
        %2171 = vmatprep.mubr.bf16.mxu0 0
        %2172 = vmatmul.mubr.bf16.gmra.mrb[0].mxu0 %v1820
        %v2173 = vpop.f32.mrb[0].mxu0
        %v2174 = vadd.f32 0.0, %v2173
        %v2175 = vpop.f32.mrb[0].mxu0
        %v2176 = vpop.f32.mrb[0].mxu0
        %v2177 = vadd.f32 0.0, %v2176
        %v2178 = vpop.f32.mrb[0].mxu0
        %2179 = vmatprep.mubr.bf16.mxu0 0
        %2180 = vmatmul.mubr.bf16.gmra.mrb[0].mxu0 %v1837
        %v2181 = vpop.f32.mrb[0].mxu0
        %v2182 = vadd.f32 0.0, %v2181
        %v2183 = vpop.f32.mrb[0].mxu0
        %v2184 = vpop.f32.mrb[0].mxu0
        %v2185 = vadd.f32 0.0, %v2184
        %v2186 = vpop.f32.mrb[0].mxu0
        %2187 = vmatprep.mubr.bf16.mxu0 0
        %2188 = vmatmul.mubr.bf16.gmra.mrb[0].mxu0 %v1854
        %v2189 = vpop.f32.mrb[0].mxu0
        %v2190 = vadd.f32 0.0, %v2189
        %v2191 = vpop.f32.mrb[0].mxu0
        %v2192 = vpop.f32.mrb[0].mxu0
        %v2193 = vadd.f32 0.0, %v2192
        %v2194 = vpop.f32.mrb[0].mxu0
        %2195 = vmatprep.mubr.bf16.mxu0 0
        %2196 = vmatmul.mubr.bf16.gmra.mrb[0].mxu0 %v1871
        %v2197 = vpop.f32.mrb[0].mxu0
        %v2198 = vadd.f32 0.0, %v2197
        %v2199 = vpop.f32.mrb[0].mxu0
        %v2200 = vpop.f32.mrb[0].mxu0
        %v2201 = vadd.f32 0.0, %v2200
        %v2202 = vpop.f32.mrb[0].mxu0
        %2203 = vmatprep.mubr.bf16.mxu0 0
        %2204 = vmatmul.mubr.bf16.gmra.mrb[0].mxu0 %v1888
        %v2205 = vpop.f32.mrb[0].mxu0
        %v2206 = vadd.f32 0.0, %v2205
        %v2207 = vpop.f32.mrb[0].mxu0
        %v2208 = vpop.f32.mrb[0].mxu0
        %v2209 = vadd.f32 0.0, %v2208
        %v2210 = vpop.f32.mrb[0].mxu0
        %2211 = vmatprep.mubr.bf16.mxu0 0
        %2212 = vmatmul.mubr.bf16.gmra.mrb[0].mxu0 %v1905
        %v2213 = vpop.f32.mrb[0].mxu0
        %v2214 = vadd.f32 0.0, %v2213
        %v2215 = vpop.f32.mrb[0].mxu0
        %v2216 = vpop.f32.mrb[0].mxu0
        %v2217 = vadd.f32 0.0, %v2216
        %v2218 = vpop.f32.mrb[0].mxu0
        %2219 = vmatprep.mubr.bf16.mxu0 0
        %2220 = vmatmul.mubr.bf16.gmra.mrb[0].mxu0 %v1922
        %v2221 = vpop.f32.mrb[0].mxu0
        %v2222 = vadd.f32 0.0, %v2221
        %v2223 = vpop.f32.mrb[0].mxu0
        %v2224 = vpop.f32.mrb[0].mxu0
        %v2225 = vadd.f32 0.0, %v2224
        %v2226 = vpop.f32.mrb[0].mxu0
        %2227 = vmatprep.mubr.bf16.mxu0 0
        %2228 = vmatmul.mubr.bf16.gmra.mrb[0].mxu0 %v1939
        %v2229 = vpop.f32.mrb[0].mxu0
        %v2230 = vadd.f32 0.0, %v2229
        %v2231 = vpop.f32.mrb[0].mxu0
        %v2232 = vpop.f32.mrb[0].mxu0
        %v2233 = vadd.f32 0.0, %v2232
        %v2234 = vpop.f32.mrb[0].mxu0
        %2235 = vmatprep.mubr.bf16.mxu0 0
        %2236 = vmatmul.mubr.bf16.gmra.mrb[0].mxu0 %v1956
        %v2237 = vpop.f32.mrb[0].mxu0
        %v2238 = vadd.f32 0.0, %v2237
        %v2239 = vpop.f32.mrb[0].mxu0
        %v2240 = vpop.f32.mrb[0].mxu0
        %v2241 = vadd.f32 0.0, %v2240
        %v2242 = vpop.f32.mrb[0].mxu0
        %2243 = vmatprep.mubr.bf16.mxu0 0
        %2244 = vmatmul.mubr.bf16.gmra.mrb[0].mxu0 %v1973
        %v2245 = vpop.f32.mrb[0].mxu0
        %v2246 = vadd.f32 0.0, %v2245
        %v2247 = vpop.f32.mrb[0].mxu0
        %v2248 = vpop.f32.mrb[0].mxu0
        %v2249 = vadd.f32 0.0, %v2248
        %v2250 = vpop.f32.mrb[0].mxu0
        %2251 = vmatprep.mubr.bf16.mxu0 0
        %2252 = vmatmul.mubr.bf16.gmra.mrb[0].mxu0 %v1990
        %v2253 = vpop.f32.mrb[0].mxu0
        %v2254 = vadd.f32 0.0, %v2253
        %v2255 = vpop.f32.mrb[0].mxu0
        %v2256 = vpop.f32.mrb[0].mxu0
        %v2257 = vadd.f32 0.0, %v2256
        %v2258 = vpop.f32.mrb[0].mxu0
        %2259 = vmatprep.mubr.bf16.mxu0 0
        %2260 = vmatmul.mubr.bf16.gmra.mrb[0].mxu0 %v2007
        %v2261 = vpop.f32.mrb[0].mxu0
        %v2262 = vadd.f32 0.0, %v2261
        %v2263 = vpop.f32.mrb[0].mxu0
        %v2264 = vpop.f32.mrb[0].mxu0
        %v2265 = vadd.f32 0.0, %v2264
        %v2266 = vpop.f32.mrb[0].mxu0
        %2267 = vmatprep.mubr.bf16.mxu0 0
        %2268 = vmatmul.mubr.bf16.gmra.mrb[0].mxu0 %v2024
        %v2269 = vpop.f32.mrb[0].mxu0
        %v2270 = vadd.f32 0.0, %v2269
        %v2271 = vpop.f32.mrb[0].mxu0
        %v2272 = vpop.f32.mrb[0].mxu0
        %v2273 = vadd.f32 0.0, %v2272
        %v2274 = vpop.f32.mrb[0].mxu0
        %2275 = vmatprep.mubr.bf16.mxu0 0
        %2276 = vmatmul.mubr.bf16.gmra.mrb[0].mxu0 %v2041
        %v2277 = vpop.f32.mrb[0].mxu0
        %v2278 = vadd.f32 0.0, %v2277
        %v2279 = vpop.f32.mrb[0].mxu0
        %v2280 = vpop.f32.mrb[0].mxu0
        %v2281 = vadd.f32 0.0, %v2280
        %v2282 = vpop.f32.mrb[0].mxu0
        %2283 = vdwg.mxu0
        %v2284 = vadd.f32 %v1627, %v2158
        %v2285 = vadd.f32 %v1630, %v2161
        %v2286 = vadd.f32 %v1635, %v2166
        %v2287 = vadd.f32 %v1638, %v2169
        %v2288 = vadd.f32 %v1643, %v2174
        %v2289 = vadd.f32 %v1646, %v2177
        %v2290 = vadd.f32 %v1651, %v2182
        %v2291 = vadd.f32 %v1654, %v2185
        %v2292 = vadd.f32 %v1659, %v2190
        %v2293 = vadd.f32 %v1662, %v2193
        %v2294 = vadd.f32 %v1667, %v2198
        %v2295 = vadd.f32 %v1670, %v2201
        %v2296 = vadd.f32 %v1675, %v2206
        %v2297 = vadd.f32 %v1678, %v2209
        %v2298 = vadd.f32 %v1683, %v2214
        %v2299 = vadd.f32 %v1686, %v2217
        %v2300 = vadd.f32 %v1691, %v2222
        %v2301 = vadd.f32 %v1694, %v2225
        %v2302 = vadd.f32 %v1699, %v2230
        %v2303 = vadd.f32 %v1702, %v2233
        %v2304 = vadd.f32 %v1707, %v2238
        %v2305 = vadd.f32 %v1710, %v2241
        %v2306 = vadd.f32 %v1715, %v2246
        %v2307 = vadd.f32 %v1718, %v2249
        %v2308 = vadd.f32 %v1723, %v2254
        %v2309 = vadd.f32 %v1726, %v2257
        %v2310 = vadd.f32 %v1731, %v2262
        %v2311 = vadd.f32 %v1734, %v2265
        %v2312 = vadd.f32 %v1739, %v2270
        %v2313 = vadd.f32 %v1742, %v2273
        %v2314 = vadd.f32 %v1747, %v2278
        %v2315 = vadd.f32 %v1750, %v2281
        %v2316 = vld [vmem:[%s755] sm:$0xf8]
        %v2317 = vld [vmem:[%s755 + $0x8] sm:$0xf]
        %v2318 = vld [vmem:[%s755 + $0x10] sm:$0xf8]
        %v2319 = vld [vmem:[%s755 + $0x18] sm:$0xf]
        %v2320 = vld [vmem:[%s755 + $0x20] sm:$0xf8]
        %v2321 = vld [vmem:[%s755 + $0x28] sm:$0xf]
        %v2322 = vld [vmem:[%s755 + $0x30] sm:$0xf8]
        %v2323 = vld [vmem:[%s755 + $0x38] sm:$0xf]
        %v2324 = vld [vmem:[%s755 + $0x40] sm:$0xf8]
        %v2325 = vld [vmem:[%s755 + $0x48] sm:$0xf]
        %v2326 = vld [vmem:[%s755 + $0x50] sm:$0xf8]
        %v2327 = vld [vmem:[%s755 + $0x58] sm:$0xf]
        %v2328 = vld [vmem:[%s755 + $0x60] sm:$0xf8]
        %v2329 = vld [vmem:[%s755 + $0x68] sm:$0xf]
        %v2330 = vld [vmem:[%s755 + $0x70] sm:$0xf8]
        %v2331 = vld [vmem:[%s755 + $0x78] sm:$0xf]
        %v2332 = vld [vmem:[%s755 + $0x80] sm:$0xf8]
        %v2333 = vld [vmem:[%s755 + $0x88] sm:$0xf]
        %v2334 = vld [vmem:[%s755 + $0x90] sm:$0xf8]
        %v2335 = vld [vmem:[%s755 + $0x98] sm:$0xf]
        %v2336 = vld [vmem:[%s755 + $0xa0] sm:$0xf8]
        %v2337 = vld [vmem:[%s755 + $0xa8] sm:$0xf]
        %v2338 = vld [vmem:[%s755 + $0xb0] sm:$0xf8]
        %v2339 = vld [vmem:[%s755 + $0xb8] sm:$0xf]
        %v2340 = vld [vmem:[%s755 + $0xc0] sm:$0xf8]
        %v2341 = vld [vmem:[%s755 + $0xc8] sm:$0xf]
        %v2342 = vld [vmem:[%s755 + $0xd0] sm:$0xf8]
        %v2343 = vld [vmem:[%s755 + $0xd8] sm:$0xf]
        %v2344 = vld [vmem:[%s755 + $0xe0] sm:$0xf8]
        %v2345 = vld [vmem:[%s755 + $0xe8] sm:$0xf]
        %v2346 = vld [vmem:[%s755 + $0xf0] sm:$0xf8]
        %v2347 = vld [vmem:[%s755 + $0xf8] sm:$0xf]
        %v2349 = vshrl.u32 %v2316, 16
        %v2351 = vrot.slane %v2349, 3
        %v2352 = vshll.u32 %v2316, 16
        %v2354 = vrot.slane %v2352, 4
        %v2355 = vor.u32 %v2351, %v2354
        %v2357 = vshrl.u32 %v2317, 16
        %v2359 = vrot.slane %v2357, 3
        %v2360 = vshll.u32 %v2317, 16
        %v2362 = vrot.slane %v2360, 4
        %v2363 = vor.u32 %v2359, %v2362
        %v2364 = vsel %vm900, %v2355, %v2363
        %v2366 = vshrl.u32 %v2318, 16
        %v2368 = vrot.slane %v2366, 3
        %v2369 = vshll.u32 %v2318, 16
        %v2371 = vrot.slane %v2369, 4
        %v2372 = vor.u32 %v2368, %v2371
        %v2374 = vshrl.u32 %v2319, 16
        %v2376 = vrot.slane %v2374, 3
        %v2377 = vshll.u32 %v2319, 16
        %v2379 = vrot.slane %v2377, 4
        %v2380 = vor.u32 %v2376, %v2379
        %v2381 = vsel %vm900, %v2372, %v2380
        %v2383 = vshrl.u32 %v2320, 16
        %v2385 = vrot.slane %v2383, 3
        %v2386 = vshll.u32 %v2320, 16
        %v2388 = vrot.slane %v2386, 4
        %v2389 = vor.u32 %v2385, %v2388
        %v2391 = vshrl.u32 %v2321, 16
        %v2393 = vrot.slane %v2391, 3
        %v2394 = vshll.u32 %v2321, 16
        %v2396 = vrot.slane %v2394, 4
        %v2397 = vor.u32 %v2393, %v2396
        %v2398 = vsel %vm900, %v2389, %v2397
        %v2400 = vshrl.u32 %v2322, 16
        %v2402 = vrot.slane %v2400, 3
        %v2403 = vshll.u32 %v2322, 16
        %v2405 = vrot.slane %v2403, 4
        %v2406 = vor.u32 %v2402, %v2405
        %v2408 = vshrl.u32 %v2323, 16
        %v2410 = vrot.slane %v2408, 3
        %v2411 = vshll.u32 %v2323, 16
        %v2413 = vrot.slane %v2411, 4
        %v2414 = vor.u32 %v2410, %v2413
        %v2415 = vsel %vm900, %v2406, %v2414
        %v2417 = vshrl.u32 %v2324, 16
        %v2419 = vrot.slane %v2417, 3
        %v2420 = vshll.u32 %v2324, 16
        %v2422 = vrot.slane %v2420, 4
        %v2423 = vor.u32 %v2419, %v2422
        %v2425 = vshrl.u32 %v2325, 16
        %v2427 = vrot.slane %v2425, 3
        %v2428 = vshll.u32 %v2325, 16
        %v2430 = vrot.slane %v2428, 4
        %v2431 = vor.u32 %v2427, %v2430
        %v2432 = vsel %vm900, %v2423, %v2431
        %v2434 = vshrl.u32 %v2326, 16
        %v2436 = vrot.slane %v2434, 3
        %v2437 = vshll.u32 %v2326, 16
        %v2439 = vrot.slane %v2437, 4
        %v2440 = vor.u32 %v2436, %v2439
        %v2442 = vshrl.u32 %v2327, 16
        %v2444 = vrot.slane %v2442, 3
        %v2445 = vshll.u32 %v2327, 16
        %v2447 = vrot.slane %v2445, 4
        %v2448 = vor.u32 %v2444, %v2447
        %v2449 = vsel %vm900, %v2440, %v2448
        %v2451 = vshrl.u32 %v2328, 16
        %v2453 = vrot.slane %v2451, 3
        %v2454 = vshll.u32 %v2328, 16
        %v2456 = vrot.slane %v2454, 4
        %v2457 = vor.u32 %v2453, %v2456
        %v2459 = vshrl.u32 %v2329, 16
        %v2461 = vrot.slane %v2459, 3
        %v2462 = vshll.u32 %v2329, 16
        %v2464 = vrot.slane %v2462, 4
        %v2465 = vor.u32 %v2461, %v2464
        %v2466 = vsel %vm900, %v2457, %v2465
        %v2468 = vshrl.u32 %v2330, 16
        %v2470 = vrot.slane %v2468, 3
        %v2471 = vshll.u32 %v2330, 16
        %v2473 = vrot.slane %v2471, 4
        %v2474 = vor.u32 %v2470, %v2473
        %v2476 = vshrl.u32 %v2331, 16
        %v2478 = vrot.slane %v2476, 3
        %v2479 = vshll.u32 %v2331, 16
        %v2481 = vrot.slane %v2479, 4
        %v2482 = vor.u32 %v2478, %v2481
        %v2483 = vsel %vm900, %v2474, %v2482
        %v2485 = vshrl.u32 %v2332, 16
        %v2487 = vrot.slane %v2485, 3
        %v2488 = vshll.u32 %v2332, 16
        %v2490 = vrot.slane %v2488, 4
        %v2491 = vor.u32 %v2487, %v2490
        %v2493 = vshrl.u32 %v2333, 16
        %v2495 = vrot.slane %v2493, 3
        %v2496 = vshll.u32 %v2333, 16
        %v2498 = vrot.slane %v2496, 4
        %v2499 = vor.u32 %v2495, %v2498
        %v2500 = vsel %vm900, %v2491, %v2499
        %v2502 = vshrl.u32 %v2334, 16
        %v2504 = vrot.slane %v2502, 3
        %v2505 = vshll.u32 %v2334, 16
        %v2507 = vrot.slane %v2505, 4
        %v2508 = vor.u32 %v2504, %v2507
        %v2510 = vshrl.u32 %v2335, 16
        %v2512 = vrot.slane %v2510, 3
        %v2513 = vshll.u32 %v2335, 16
        %v2515 = vrot.slane %v2513, 4
        %v2516 = vor.u32 %v2512, %v2515
        %v2517 = vsel %vm900, %v2508, %v2516
        %v2519 = vshrl.u32 %v2336, 16
        %v2521 = vrot.slane %v2519, 3
        %v2522 = vshll.u32 %v2336, 16
        %v2524 = vrot.slane %v2522, 4
        %v2525 = vor.u32 %v2521, %v2524
        %v2527 = vshrl.u32 %v2337, 16
        %v2529 = vrot.slane %v2527, 3
        %v2530 = vshll.u32 %v2337, 16
        %v2532 = vrot.slane %v2530, 4
        %v2533 = vor.u32 %v2529, %v2532
        %v2534 = vsel %vm900, %v2525, %v2533
        %v2536 = vshrl.u32 %v2338, 16
        %v2538 = vrot.slane %v2536, 3
        %v2539 = vshll.u32 %v2338, 16
        %v2541 = vrot.slane %v2539, 4
        %v2542 = vor.u32 %v2538, %v2541
        %v2544 = vshrl.u32 %v2339, 16
        %v2546 = vrot.slane %v2544, 3
        %v2547 = vshll.u32 %v2339, 16
        %v2549 = vrot.slane %v2547, 4
        %v2550 = vor.u32 %v2546, %v2549
        %v2551 = vsel %vm900, %v2542, %v2550
        %v2553 = vshrl.u32 %v2340, 16
        %v2555 = vrot.slane %v2553, 3
        %v2556 = vshll.u32 %v2340, 16
        %v2558 = vrot.slane %v2556, 4
        %v2559 = vor.u32 %v2555, %v2558
        %v2561 = vshrl.u32 %v2341, 16
        %v2563 = vrot.slane %v2561, 3
        %v2564 = vshll.u32 %v2341, 16
        %v2566 = vrot.slane %v2564, 4
        %v2567 = vor.u32 %v2563, %v2566
        %v2568 = vsel %vm900, %v2559, %v2567
        %v2570 = vshrl.u32 %v2342, 16
        %v2572 = vrot.slane %v2570, 3
        %v2573 = vshll.u32 %v2342, 16
        %v2575 = vrot.slane %v2573, 4
        %v2576 = vor.u32 %v2572, %v2575
        %v2578 = vshrl.u32 %v2343, 16
        %v2580 = vrot.slane %v2578, 3
        %v2581 = vshll.u32 %v2343, 16
        %v2583 = vrot.slane %v2581, 4
        %v2584 = vor.u32 %v2580, %v2583
        %v2585 = vsel %vm900, %v2576, %v2584
        %v2587 = vshrl.u32 %v2344, 16
        %v2589 = vrot.slane %v2587, 3
        %v2590 = vshll.u32 %v2344, 16
        %v2592 = vrot.slane %v2590, 4
        %v2593 = vor.u32 %v2589, %v2592
        %v2595 = vshrl.u32 %v2345, 16
        %v2597 = vrot.slane %v2595, 3
        %v2598 = vshll.u32 %v2345, 16
        %v2600 = vrot.slane %v2598, 4
        %v2601 = vor.u32 %v2597, %v2600
        %v2602 = vsel %vm900, %v2593, %v2601
        %v2604 = vshrl.u32 %v2346, 16
        %v2606 = vrot.slane %v2604, 3
        %v2607 = vshll.u32 %v2346, 16
        %v2609 = vrot.slane %v2607, 4
        %v2610 = vor.u32 %v2606, %v2609
        %v2612 = vshrl.u32 %v2347, 16
        %v2614 = vrot.slane %v2612, 3
        %v2615 = vshll.u32 %v2347, 16
        %v2617 = vrot.slane %v2615, 4
        %v2618 = vor.u32 %v2614, %v2617
        %v2619 = vsel %vm900, %v2610, %v2618
        %s2636 = scalar_lea.vmem [#allocation8], 192
        %v2637 = vld [vmem:[%s2636] sm:$0xf]
        %v2638 = vld [vmem:[%s2636 + $0x4] sm:$0xf]
        %v2639 = vld [vmem:[%s2636 + $0x8] sm:$0xf]
        %v2640 = vld [vmem:[%s2636 + $0xc] sm:$0xf]
        %v2641 = vld [vmem:[%s2636 + $0x10] sm:$0xf]
        %v2642 = vld [vmem:[%s2636 + $0x14] sm:$0xf]
        %v2643 = vld [vmem:[%s2636 + $0x18] sm:$0xf]
        %v2644 = vld [vmem:[%s2636 + $0x1c] sm:$0xf]
        %v2645 = vld [vmem:[%s2636 + $0x20] sm:$0xf]
        %v2646 = vld [vmem:[%s2636 + $0x24] sm:$0xf]
        %v2647 = vld [vmem:[%s2636 + $0x28] sm:$0xf]
        %v2648 = vld [vmem:[%s2636 + $0x2c] sm:$0xf]
        %v2649 = vld [vmem:[%s2636 + $0x30] sm:$0xf]
        %v2650 = vld [vmem:[%s2636 + $0x34] sm:$0xf]
        %v2651 = vld [vmem:[%s2636 + $0x38] sm:$0xf]
        %v2652 = vld [vmem:[%s2636 + $0x3c] sm:$0xf]
        %v2669 = vunpack.c.l.b16 %v2637
        %v2670 = vunpack.c.l.b16 %v2638
        %v2671 = vunpack.c.l.b16 %v2639
        %v2672 = vunpack.c.l.b16 %v2640
        %v2673 = vunpack.c.l.b16 %v2641
        %v2674 = vunpack.c.l.b16 %v2642
        %v2675 = vunpack.c.l.b16 %v2643
        %v2676 = vunpack.c.l.b16 %v2644
        %v2677 = vunpack.c.l.b16 %v2645
        %v2678 = vunpack.c.l.b16 %v2646
        %v2679 = vunpack.c.l.b16 %v2647
        %v2680 = vunpack.c.l.b16 %v2648
        %v2681 = vunpack.c.l.b16 %v2649
        %v2682 = vunpack.c.l.b16 %v2650
        %v2683 = vunpack.c.l.b16 %v2651
        %v2684 = vunpack.c.l.b16 %v2652
        %v2685 = vpack.c.b16 %v2670, %v2669
        %v2686 = vpack.c.b16 %v2672, %v2671
        %v2687 = vpack.c.b16 %v2674, %v2673
        %v2688 = vpack.c.b16 %v2676, %v2675
        %v2689 = vpack.c.b16 %v2678, %v2677
        %v2690 = vpack.c.b16 %v2680, %v2679
        %v2691 = vpack.c.b16 %v2682, %v2681
        %v2692 = vpack.c.b16 %v2684, %v2683
        %2701 = vmatprep.subr.bf16.mxu0 0
        %2702 = vmatpush1.bf16.msra.mxu0 %v2685
        %2703 = vmatprep.subr.bf16.mxu0 0
        %2704 = vmatpush1.bf16.msra.mxu0 %v2686
        %2705 = vmatprep.subr.bf16.mxu0 0
        %2706 = vmatpush1.bf16.msra.mxu0 %v2687
        %2707 = vmatprep.subr.bf16.mxu0 0
        %2708 = vmatpush1.bf16.msra.mxu0 %v2688
        %2709 = vmatprep.subr.bf16.mxu0 0
        %2710 = vmatpush1.bf16.msra.mxu0 %v2689
        %2711 = vmatprep.subr.bf16.mxu0 0
        %2712 = vmatpush1.bf16.msra.mxu0 %v2690
        %2713 = vmatprep.subr.bf16.mxu0 0
        %2714 = vmatpush1.bf16.msra.mxu0 %v2691
        %2715 = vmatprep.subr.bf16.mxu0 0
        %2716 = vmatpush1.bf16.msra.mxu0 %v2692
        %2717 = vmatprep.subr.bf16.mxu0 0
        %2718 = vmatpush1.bf16.msra.mxu0 0
        %2719 = vmatprep.subr.bf16.mxu0 0
        %2720 = vmatpush1.bf16.msra.mxu0 0
        %2721 = vmatprep.subr.bf16.mxu0 0
        %2722 = vmatpush1.bf16.msra.mxu0 0
        %2723 = vmatprep.subr.bf16.mxu0 0
        %2724 = vmatpush1.bf16.msra.mxu0 0
        %2725 = vmatprep.subr.bf16.mxu0 0
        %2726 = vmatpush1.bf16.msra.mxu0 0
        %2727 = vmatprep.subr.bf16.mxu0 0
        %2728 = vmatpush1.bf16.msra.mxu0 0
        %2729 = vmatprep.subr.bf16.mxu0 0
        %2730 = vmatpush1.bf16.msra.mxu0 0
        %2731 = vmatprep.subr.bf16.mxu0 0
        %2732 = vmatpush1.bf16.msra.mxu0 0
        %2733 = vmatprep.mubr.bf16.mxu0 0
        %2734 = vmatmul.mubr.bf16.gmra.mrb[0].mxu0 %v2364
        %v2735 = vpop.f32.mrb[0].mxu0
        %v2736 = vadd.f32 0.0, %v2735
        %v2737 = vpop.f32.mrb[0].mxu0
        %v2738 = vpop.f32.mrb[0].mxu0
        %v2739 = vadd.f32 0.0, %v2738
        %v2740 = vpop.f32.mrb[0].mxu0
        %2741 = vmatprep.mubr.bf16.mxu0 0
        %2742 = vmatmul.mubr.bf16.gmra.mrb[0].mxu0 %v2381
        %v2743 = vpop.f32.mrb[0].mxu0
        %v2744 = vadd.f32 0.0, %v2743
        %v2745 = vpop.f32.mrb[0].mxu0
        %v2746 = vpop.f32.mrb[0].mxu0
        %v2747 = vadd.f32 0.0, %v2746
        %v2748 = vpop.f32.mrb[0].mxu0
        %2749 = vmatprep.mubr.bf16.mxu0 0
        %2750 = vmatmul.mubr.bf16.gmra.mrb[0].mxu0 %v2398
        %v2751 = vpop.f32.mrb[0].mxu0
        %v2752 = vadd.f32 0.0, %v2751
        %v2753 = vpop.f32.mrb[0].mxu0
        %v2754 = vpop.f32.mrb[0].mxu0
        %v2755 = vadd.f32 0.0, %v2754
        %v2756 = vpop.f32.mrb[0].mxu0
        %2757 = vmatprep.mubr.bf16.mxu0 0
        %2758 = vmatmul.mubr.bf16.gmra.mrb[0].mxu0 %v2415
        %v2759 = vpop.f32.mrb[0].mxu0
        %v2760 = vadd.f32 0.0, %v2759
        %v2761 = vpop.f32.mrb[0].mxu0
        %v2762 = vpop.f32.mrb[0].mxu0
        %v2763 = vadd.f32 0.0, %v2762
        %v2764 = vpop.f32.mrb[0].mxu0
        %2765 = vmatprep.mubr.bf16.mxu0 0
        %2766 = vmatmul.mubr.bf16.gmra.mrb[0].mxu0 %v2432
        %v2767 = vpop.f32.mrb[0].mxu0
        %v2768 = vadd.f32 0.0, %v2767
        %v2769 = vpop.f32.mrb[0].mxu0
        %v2770 = vpop.f32.mrb[0].mxu0
        %v2771 = vadd.f32 0.0, %v2770
        %v2772 = vpop.f32.mrb[0].mxu0
        %2773 = vmatprep.mubr.bf16.mxu0 0
        %2774 = vmatmul.mubr.bf16.gmra.mrb[0].mxu0 %v2449
        %v2775 = vpop.f32.mrb[0].mxu0
        %v2776 = vadd.f32 0.0, %v2775
        %v2777 = vpop.f32.mrb[0].mxu0
        %v2778 = vpop.f32.mrb[0].mxu0
        %v2779 = vadd.f32 0.0, %v2778
        %v2780 = vpop.f32.mrb[0].mxu0
        %2781 = vmatprep.mubr.bf16.mxu0 0
        %2782 = vmatmul.mubr.bf16.gmra.mrb[0].mxu0 %v2466
        %v2783 = vpop.f32.mrb[0].mxu0
        %v2784 = vadd.f32 0.0, %v2783
        %v2785 = vpop.f32.mrb[0].mxu0
        %v2786 = vpop.f32.mrb[0].mxu0
        %v2787 = vadd.f32 0.0, %v2786
        %v2788 = vpop.f32.mrb[0].mxu0
        %2789 = vmatprep.mubr.bf16.mxu0 0
        %2790 = vmatmul.mubr.bf16.gmra.mrb[0].mxu0 %v2483
        %v2791 = vpop.f32.mrb[0].mxu0
        %v2792 = vadd.f32 0.0, %v2791
        %v2793 = vpop.f32.mrb[0].mxu0
        %v2794 = vpop.f32.mrb[0].mxu0
        %v2795 = vadd.f32 0.0, %v2794
        %v2796 = vpop.f32.mrb[0].mxu0
        %2797 = vmatprep.mubr.bf16.mxu0 0
        %2798 = vmatmul.mubr.bf16.gmra.mrb[0].mxu0 %v2500
        %v2799 = vpop.f32.mrb[0].mxu0
        %v2800 = vadd.f32 0.0, %v2799
        %v2801 = vpop.f32.mrb[0].mxu0
        %v2802 = vpop.f32.mrb[0].mxu0
        %v2803 = vadd.f32 0.0, %v2802
        %v2804 = vpop.f32.mrb[0].mxu0
        %2805 = vmatprep.mubr.bf16.mxu0 0
        %2806 = vmatmul.mubr.bf16.gmra.mrb[0].mxu0 %v2517
        %v2807 = vpop.f32.mrb[0].mxu0
        %v2808 = vadd.f32 0.0, %v2807
        %v2809 = vpop.f32.mrb[0].mxu0
        %v2810 = vpop.f32.mrb[0].mxu0
        %v2811 = vadd.f32 0.0, %v2810
        %v2812 = vpop.f32.mrb[0].mxu0
        %2813 = vmatprep.mubr.bf16.mxu0 0
        %2814 = vmatmul.mubr.bf16.gmra.mrb[0].mxu0 %v2534
        %v2815 = vpop.f32.mrb[0].mxu0
        %v2816 = vadd.f32 0.0, %v2815
        %v2817 = vpop.f32.mrb[0].mxu0
        %v2818 = vpop.f32.mrb[0].mxu0
        %v2819 = vadd.f32 0.0, %v2818
        %v2820 = vpop.f32.mrb[0].mxu0
        %2821 = vmatprep.mubr.bf16.mxu0 0
        %2822 = vmatmul.mubr.bf16.gmra.mrb[0].mxu0 %v2551
        %v2823 = vpop.f32.mrb[0].mxu0
        %v2824 = vadd.f32 0.0, %v2823
        %v2825 = vpop.f32.mrb[0].mxu0
        %v2826 = vpop.f32.mrb[0].mxu0
        %v2827 = vadd.f32 0.0, %v2826
        %v2828 = vpop.f32.mrb[0].mxu0
        %2829 = vmatprep.mubr.bf16.mxu0 0
        %2830 = vmatmul.mubr.bf16.gmra.mrb[0].mxu0 %v2568
        %v2831 = vpop.f32.mrb[0].mxu0
        %v2832 = vadd.f32 0.0, %v2831
        %v2833 = vpop.f32.mrb[0].mxu0
        %v2834 = vpop.f32.mrb[0].mxu0
        %v2835 = vadd.f32 0.0, %v2834
        %v2836 = vpop.f32.mrb[0].mxu0
        %2837 = vmatprep.mubr.bf16.mxu0 0
        %2838 = vmatmul.mubr.bf16.gmra.mrb[0].mxu0 %v2585
        %v2839 = vpop.f32.mrb[0].mxu0
        %v2840 = vadd.f32 0.0, %v2839
        %v2841 = vpop.f32.mrb[0].mxu0
        %v2842 = vpop.f32.mrb[0].mxu0
        %v2843 = vadd.f32 0.0, %v2842
        %v2844 = vpop.f32.mrb[0].mxu0
        %2845 = vmatprep.mubr.bf16.mxu0 0
        %2846 = vmatmul.mubr.bf16.gmra.mrb[0].mxu0 %v2602
        %v2847 = vpop.f32.mrb[0].mxu0
        %v2848 = vadd.f32 0.0, %v2847
        %v2849 = vpop.f32.mrb[0].mxu0
        %v2850 = vpop.f32.mrb[0].mxu0
        %v2851 = vadd.f32 0.0, %v2850
        %v2852 = vpop.f32.mrb[0].mxu0
        %2853 = vmatprep.mubr.bf16.mxu0 0
        %2854 = vmatmul.mubr.bf16.gmra.mrb[0].mxu0 %v2619
        %v2855 = vpop.f32.mrb[0].mxu0
        %v2856 = vadd.f32 0.0, %v2855
        %v2857 = vpop.f32.mrb[0].mxu0
        %v2858 = vpop.f32.mrb[0].mxu0
        %v2859 = vadd.f32 0.0, %v2858
        %v2860 = vpop.f32.mrb[0].mxu0
        %2861 = vdwg.mxu0
        %v2862 = vadd.f32 %v2284, %v2736
        %v2863 = vadd.f32 %v2285, %v2739
        %v2864 = vadd.f32 %v2286, %v2744
        %v2865 = vadd.f32 %v2287, %v2747
        %v2866 = vadd.f32 %v2288, %v2752
        %v2867 = vadd.f32 %v2289, %v2755
        %v2868 = vadd.f32 %v2290, %v2760
        %v2869 = vadd.f32 %v2291, %v2763
        %v2870 = vadd.f32 %v2292, %v2768
        %v2871 = vadd.f32 %v2293, %v2771
        %v2872 = vadd.f32 %v2294, %v2776
        %v2873 = vadd.f32 %v2295, %v2779
        %v2874 = vadd.f32 %v2296, %v2784
        %v2875 = vadd.f32 %v2297, %v2787
        %v2876 = vadd.f32 %v2298, %v2792
        %v2877 = vadd.f32 %v2299, %v2795
        %v2878 = vadd.f32 %v2300, %v2800
        %v2879 = vadd.f32 %v2301, %v2803
        %v2880 = vadd.f32 %v2302, %v2808
        %v2881 = vadd.f32 %v2303, %v2811
        %v2882 = vadd.f32 %v2304, %v2816
        %v2883 = vadd.f32 %v2305, %v2819
        %v2884 = vadd.f32 %v2306, %v2824
        %v2885 = vadd.f32 %v2307, %v2827
        %v2886 = vadd.f32 %v2308, %v2832
        %v2887 = vadd.f32 %v2309, %v2835
        %v2888 = vadd.f32 %v2310, %v2840
        %v2889 = vadd.f32 %v2311, %v2843
        %v2890 = vadd.f32 %v2312, %v2848
        %v2891 = vadd.f32 %v2313, %v2851
        %v2892 = vadd.f32 %v2314, %v2856
        %v2893 = vadd.f32 %v2315, %v2859
        %v2894 = vld [vmem:[%s755] sm:$0xf0]
        %v2895 = vld [vmem:[%s755 + $0x10] sm:$0xf0]
        %v2896 = vld [vmem:[%s755 + $0x20] sm:$0xf0]
        %v2897 = vld [vmem:[%s755 + $0x30] sm:$0xf0]
        %v2898 = vld [vmem:[%s755 + $0x40] sm:$0xf0]
        %v2899 = vld [vmem:[%s755 + $0x50] sm:$0xf0]
        %v2900 = vld [vmem:[%s755 + $0x60] sm:$0xf0]
        %v2901 = vld [vmem:[%s755 + $0x70] sm:$0xf0]
        %v2902 = vld [vmem:[%s755 + $0x80] sm:$0xf0]
        %v2903 = vld [vmem:[%s755 + $0x90] sm:$0xf0]
        %v2904 = vld [vmem:[%s755 + $0xa0] sm:$0xf0]
        %v2905 = vld [vmem:[%s755 + $0xb0] sm:$0xf0]
        %v2906 = vld [vmem:[%s755 + $0xc0] sm:$0xf0]
        %v2907 = vld [vmem:[%s755 + $0xd0] sm:$0xf0]
        %v2908 = vld [vmem:[%s755 + $0xe0] sm:$0xf0]
        %v2909 = vld [vmem:[%s755 + $0xf0] sm:$0xf0]
        %v2942 = vrot.slane %v2894, 4
        %v2943 = vrot.slane %v2317, 4
        %v2944 = vsel %vm1253, %v2942, %v2943
        %v2945 = vrot.slane %v2895, 4
        %v2946 = vrot.slane %v2319, 4
        %v2947 = vsel %vm1253, %v2945, %v2946
        %v2948 = vrot.slane %v2896, 4
        %v2949 = vrot.slane %v2321, 4
        %v2950 = vsel %vm1253, %v2948, %v2949
        %v2951 = vrot.slane %v2897, 4
        %v2952 = vrot.slane %v2323, 4
        %v2953 = vsel %vm1253, %v2951, %v2952
        %v2954 = vrot.slane %v2898, 4
        %v2955 = vrot.slane %v2325, 4
        %v2956 = vsel %vm1253, %v2954, %v2955
        %v2957 = vrot.slane %v2899, 4
        %v2958 = vrot.slane %v2327, 4
        %v2959 = vsel %vm1253, %v2957, %v2958
        %v2960 = vrot.slane %v2900, 4
        %v2961 = vrot.slane %v2329, 4
        %v2962 = vsel %vm1253, %v2960, %v2961
        %v2963 = vrot.slane %v2901, 4
        %v2964 = vrot.slane %v2331, 4
        %v2965 = vsel %vm1253, %v2963, %v2964
        %v2966 = vrot.slane %v2902, 4
        %v2967 = vrot.slane %v2333, 4
        %v2968 = vsel %vm1253, %v2966, %v2967
        %v2969 = vrot.slane %v2903, 4
        %v2970 = vrot.slane %v2335, 4
        %v2971 = vsel %vm1253, %v2969, %v2970
        %v2972 = vrot.slane %v2904, 4
        %v2973 = vrot.slane %v2337, 4
        %v2974 = vsel %vm1253, %v2972, %v2973
        %v2975 = vrot.slane %v2905, 4
        %v2976 = vrot.slane %v2339, 4
        %v2977 = vsel %vm1253, %v2975, %v2976
        %v2978 = vrot.slane %v2906, 4
        %v2979 = vrot.slane %v2341, 4
        %v2980 = vsel %vm1253, %v2978, %v2979
        %v2981 = vrot.slane %v2907, 4
        %v2982 = vrot.slane %v2343, 4
        %v2983 = vsel %vm1253, %v2981, %v2982
        %v2984 = vrot.slane %v2908, 4
        %v2985 = vrot.slane %v2345, 4
        %v2986 = vsel %vm1253, %v2984, %v2985
        %v2987 = vrot.slane %v2909, 4
        %v2988 = vrot.slane %v2347, 4
        %v2989 = vsel %vm1253, %v2987, %v2988
        %s3006 = scalar_lea.vmem [#allocation8], 256
        %v3007 = vld [vmem:[%s3006] sm:$0xf]
        %v3008 = vld [vmem:[%s3006 + $0x4] sm:$0xf]
        %v3009 = vld [vmem:[%s3006 + $0x8] sm:$0xf]
        %v3010 = vld [vmem:[%s3006 + $0xc] sm:$0xf]
        %v3011 = vld [vmem:[%s3006 + $0x10] sm:$0xf]
        %v3012 = vld [vmem:[%s3006 + $0x14] sm:$0xf]
        %v3013 = vld [vmem:[%s3006 + $0x18] sm:$0xf]
        %v3014 = vld [vmem:[%s3006 + $0x1c] sm:$0xf]
        %v3015 = vld [vmem:[%s3006 + $0x20] sm:$0xf]
        %v3016 = vld [vmem:[%s3006 + $0x24] sm:$0xf]
        %v3017 = vld [vmem:[%s3006 + $0x28] sm:$0xf]
        %v3018 = vld [vmem:[%s3006 + $0x2c] sm:$0xf]
        %v3019 = vld [vmem:[%s3006 + $0x30] sm:$0xf]
        %v3020 = vld [vmem:[%s3006 + $0x34] sm:$0xf]
        %v3021 = vld [vmem:[%s3006 + $0x38] sm:$0xf]
        %v3022 = vld [vmem:[%s3006 + $0x3c] sm:$0xf]
        %v3039 = vunpack.c.l.b16 %v3007
        %v3040 = vunpack.c.l.b16 %v3008
        %v3041 = vunpack.c.l.b16 %v3009
        %v3042 = vunpack.c.l.b16 %v3010
        %v3043 = vunpack.c.l.b16 %v3011
        %v3044 = vunpack.c.l.b16 %v3012
        %v3045 = vunpack.c.l.b16 %v3013
        %v3046 = vunpack.c.l.b16 %v3014
        %v3047 = vunpack.c.l.b16 %v3015
        %v3048 = vunpack.c.l.b16 %v3016
        %v3049 = vunpack.c.l.b16 %v3017
        %v3050 = vunpack.c.l.b16 %v3018
        %v3051 = vunpack.c.l.b16 %v3019
        %v3052 = vunpack.c.l.b16 %v3020
        %v3053 = vunpack.c.l.b16 %v3021
        %v3054 = vunpack.c.l.b16 %v3022
        %v3055 = vpack.c.b16 %v3040, %v3039
        %v3056 = vpack.c.b16 %v3042, %v3041
        %v3057 = vpack.c.b16 %v3044, %v3043
        %v3058 = vpack.c.b16 %v3046, %v3045
        %v3059 = vpack.c.b16 %v3048, %v3047
        %v3060 = vpack.c.b16 %v3050, %v3049
        %v3061 = vpack.c.b16 %v3052, %v3051
        %v3062 = vpack.c.b16 %v3054, %v3053
        %3071 = vmatprep.subr.bf16.mxu0 0
        %3072 = vmatpush1.bf16.msra.mxu0 %v3055
        %3073 = vmatprep.subr.bf16.mxu0 0
        %3074 = vmatpush1.bf16.msra.mxu0 %v3056
        %3075 = vmatprep.subr.bf16.mxu0 0
        %3076 = vmatpush1.bf16.msra.mxu0 %v3057
        %3077 = vmatprep.subr.bf16.mxu0 0
        %3078 = vmatpush1.bf16.msra.mxu0 %v3058
        %3079 = vmatprep.subr.bf16.mxu0 0
        %3080 = vmatpush1.bf16.msra.mxu0 %v3059
        %3081 = vmatprep.subr.bf16.mxu0 0
        %3082 = vmatpush1.bf16.msra.mxu0 %v3060
        %3083 = vmatprep.subr.bf16.mxu0 0
        %3084 = vmatpush1.bf16.msra.mxu0 %v3061
        %3085 = vmatprep.subr.bf16.mxu0 0
        %3086 = vmatpush1.bf16.msra.mxu0 %v3062
        %3087 = vmatprep.subr.bf16.mxu0 0
        %3088 = vmatpush1.bf16.msra.mxu0 0
        %3089 = vmatprep.subr.bf16.mxu0 0
        %3090 = vmatpush1.bf16.msra.mxu0 0
        %3091 = vmatprep.subr.bf16.mxu0 0
        %3092 = vmatpush1.bf16.msra.mxu0 0
        %3093 = vmatprep.subr.bf16.mxu0 0
        %3094 = vmatpush1.bf16.msra.mxu0 0
        %3095 = vmatprep.subr.bf16.mxu0 0
        %3096 = vmatpush1.bf16.msra.mxu0 0
        %3097 = vmatprep.subr.bf16.mxu0 0
        %3098 = vmatpush1.bf16.msra.mxu0 0
        %3099 = vmatprep.subr.bf16.mxu0 0
        %3100 = vmatpush1.bf16.msra.mxu0 0
        %3101 = vmatprep.subr.bf16.mxu0 0
        %3102 = vmatpush1.bf16.msra.mxu0 0
        %3103 = vmatprep.mubr.bf16.mxu0 0
        %3104 = vmatmul.mubr.bf16.gmra.mrb[0].mxu0 %v2944
        %v3105 = vpop.f32.mrb[0].mxu0
        %v3106 = vadd.f32 0.0, %v3105
        %v3107 = vpop.f32.mrb[0].mxu0
        %v3108 = vpop.f32.mrb[0].mxu0
        %v3109 = vadd.f32 0.0, %v3108
        %v3110 = vpop.f32.mrb[0].mxu0
        %3111 = vmatprep.mubr.bf16.mxu0 0
        %3112 = vmatmul.mubr.bf16.gmra.mrb[0].mxu0 %v2947
        %v3113 = vpop.f32.mrb[0].mxu0
        %v3114 = vadd.f32 0.0, %v3113
        %v3115 = vpop.f32.mrb[0].mxu0
        %v3116 = vpop.f32.mrb[0].mxu0
        %v3117 = vadd.f32 0.0, %v3116
        %v3118 = vpop.f32.mrb[0].mxu0
        %3119 = vmatprep.mubr.bf16.mxu0 0
        %3120 = vmatmul.mubr.bf16.gmra.mrb[0].mxu0 %v2950
        %v3121 = vpop.f32.mrb[0].mxu0
        %v3122 = vadd.f32 0.0, %v3121
        %v3123 = vpop.f32.mrb[0].mxu0
        %v3124 = vpop.f32.mrb[0].mxu0
        %v3125 = vadd.f32 0.0, %v3124
        %v3126 = vpop.f32.mrb[0].mxu0
        %3127 = vmatprep.mubr.bf16.mxu0 0
        %3128 = vmatmul.mubr.bf16.gmra.mrb[0].mxu0 %v2953
        %v3129 = vpop.f32.mrb[0].mxu0
        %v3130 = vadd.f32 0.0, %v3129
        %v3131 = vpop.f32.mrb[0].mxu0
        %v3132 = vpop.f32.mrb[0].mxu0
        %v3133 = vadd.f32 0.0, %v3132
        %v3134 = vpop.f32.mrb[0].mxu0
        %3135 = vmatprep.mubr.bf16.mxu0 0
        %3136 = vmatmul.mubr.bf16.gmra.mrb[0].mxu0 %v2956
        %v3137 = vpop.f32.mrb[0].mxu0
        %v3138 = vadd.f32 0.0, %v3137
        %v3139 = vpop.f32.mrb[0].mxu0
        %v3140 = vpop.f32.mrb[0].mxu0
        %v3141 = vadd.f32 0.0, %v3140
        %v3142 = vpop.f32.mrb[0].mxu0
        %3143 = vmatprep.mubr.bf16.mxu0 0
        %3144 = vmatmul.mubr.bf16.gmra.mrb[0].mxu0 %v2959
        %v3145 = vpop.f32.mrb[0].mxu0
        %v3146 = vadd.f32 0.0, %v3145
        %v3147 = vpop.f32.mrb[0].mxu0
        %v3148 = vpop.f32.mrb[0].mxu0
        %v3149 = vadd.f32 0.0, %v3148
        %v3150 = vpop.f32.mrb[0].mxu0
        %3151 = vmatprep.mubr.bf16.mxu0 0
        %3152 = vmatmul.mubr.bf16.gmra.mrb[0].mxu0 %v2962
        %v3153 = vpop.f32.mrb[0].mxu0
        %v3154 = vadd.f32 0.0, %v3153
        %v3155 = vpop.f32.mrb[0].mxu0
        %v3156 = vpop.f32.mrb[0].mxu0
        %v3157 = vadd.f32 0.0, %v3156
        %v3158 = vpop.f32.mrb[0].mxu0
        %3159 = vmatprep.mubr.bf16.mxu0 0
        %3160 = vmatmul.mubr.bf16.gmra.mrb[0].mxu0 %v2965
        %v3161 = vpop.f32.mrb[0].mxu0
        %v3162 = vadd.f32 0.0, %v3161
        %v3163 = vpop.f32.mrb[0].mxu0
        %v3164 = vpop.f32.mrb[0].mxu0
        %v3165 = vadd.f32 0.0, %v3164
        %v3166 = vpop.f32.mrb[0].mxu0
        %3167 = vmatprep.mubr.bf16.mxu0 0
        %3168 = vmatmul.mubr.bf16.gmra.mrb[0].mxu0 %v2968
        %v3169 = vpop.f32.mrb[0].mxu0
        %v3170 = vadd.f32 0.0, %v3169
        %v3171 = vpop.f32.mrb[0].mxu0
        %v3172 = vpop.f32.mrb[0].mxu0
        %v3173 = vadd.f32 0.0, %v3172
        %v3174 = vpop.f32.mrb[0].mxu0
        %3175 = vmatprep.mubr.bf16.mxu0 0
        %3176 = vmatmul.mubr.bf16.gmra.mrb[0].mxu0 %v2971
        %v3177 = vpop.f32.mrb[0].mxu0
        %v3178 = vadd.f32 0.0, %v3177
        %v3179 = vpop.f32.mrb[0].mxu0
        %v3180 = vpop.f32.mrb[0].mxu0
        %v3181 = vadd.f32 0.0, %v3180
        %v3182 = vpop.f32.mrb[0].mxu0
        %3183 = vmatprep.mubr.bf16.mxu0 0
        %3184 = vmatmul.mubr.bf16.gmra.mrb[0].mxu0 %v2974
        %v3185 = vpop.f32.mrb[0].mxu0
        %v3186 = vadd.f32 0.0, %v3185
        %v3187 = vpop.f32.mrb[0].mxu0
        %v3188 = vpop.f32.mrb[0].mxu0
        %v3189 = vadd.f32 0.0, %v3188
        %v3190 = vpop.f32.mrb[0].mxu0
        %3191 = vmatprep.mubr.bf16.mxu0 0
        %3192 = vmatmul.mubr.bf16.gmra.mrb[0].mxu0 %v2977
        %v3193 = vpop.f32.mrb[0].mxu0
        %v3194 = vadd.f32 0.0, %v3193
        %v3195 = vpop.f32.mrb[0].mxu0
        %v3196 = vpop.f32.mrb[0].mxu0
        %v3197 = vadd.f32 0.0, %v3196
        %v3198 = vpop.f32.mrb[0].mxu0
        %3199 = vmatprep.mubr.bf16.mxu0 0
        %3200 = vmatmul.mubr.bf16.gmra.mrb[0].mxu0 %v2980
        %v3201 = vpop.f32.mrb[0].mxu0
        %v3202 = vadd.f32 0.0, %v3201
        %v3203 = vpop.f32.mrb[0].mxu0
        %v3204 = vpop.f32.mrb[0].mxu0
        %v3205 = vadd.f32 0.0, %v3204
        %v3206 = vpop.f32.mrb[0].mxu0
        %3207 = vmatprep.mubr.bf16.mxu0 0
        %3208 = vmatmul.mubr.bf16.gmra.mrb[0].mxu0 %v2983
        %v3209 = vpop.f32.mrb[0].mxu0
        %v3210 = vadd.f32 0.0, %v3209
        %v3211 = vpop.f32.mrb[0].mxu0
        %v3212 = vpop.f32.mrb[0].mxu0
        %v3213 = vadd.f32 0.0, %v3212
        %v3214 = vpop.f32.mrb[0].mxu0
        %3215 = vmatprep.mubr.bf16.mxu0 0
        %3216 = vmatmul.mubr.bf16.gmra.mrb[0].mxu0 %v2986
        %v3217 = vpop.f32.mrb[0].mxu0
        %v3218 = vadd.f32 0.0, %v3217
        %v3219 = vpop.f32.mrb[0].mxu0
        %v3220 = vpop.f32.mrb[0].mxu0
        %v3221 = vadd.f32 0.0, %v3220
        %v3222 = vpop.f32.mrb[0].mxu0
        %3223 = vmatprep.mubr.bf16.mxu0 0
        %3224 = vmatmul.mubr.bf16.gmra.mrb[0].mxu0 %v2989
        %v3225 = vpop.f32.mrb[0].mxu0
        %v3226 = vadd.f32 0.0, %v3225
        %v3227 = vpop.f32.mrb[0].mxu0
        %v3228 = vpop.f32.mrb[0].mxu0
        %v3229 = vadd.f32 0.0, %v3228
        %v3230 = vpop.f32.mrb[0].mxu0
        %3231 = vdwg.mxu0
        %v3232 = vadd.f32 %v2862, %v3106
        %v3233 = vadd.f32 %v2863, %v3109
        %v3234 = vadd.f32 %v2864, %v3114
        %v3235 = vadd.f32 %v2865, %v3117
        %v3236 = vadd.f32 %v2866, %v3122
        %v3237 = vadd.f32 %v2867, %v3125
        %v3238 = vadd.f32 %v2868, %v3130
        %v3239 = vadd.f32 %v2869, %v3133
        %v3240 = vadd.f32 %v2870, %v3138
        %v3241 = vadd.f32 %v2871, %v3141
        %v3242 = vadd.f32 %v2872, %v3146
        %v3243 = vadd.f32 %v2873, %v3149
        %v3244 = vadd.f32 %v2874, %v3154
        %v3245 = vadd.f32 %v2875, %v3157
        %v3246 = vadd.f32 %v2876, %v3162
        %v3247 = vadd.f32 %v2877, %v3165
        %v3248 = vadd.f32 %v2878, %v3170
        %v3249 = vadd.f32 %v2879, %v3173
        %v3250 = vadd.f32 %v2880, %v3178
        %v3251 = vadd.f32 %v2881, %v3181
        %v3252 = vadd.f32 %v2882, %v3186
        %v3253 = vadd.f32 %v2883, %v3189
        %v3254 = vadd.f32 %v2884, %v3194
        %v3255 = vadd.f32 %v2885, %v3197
        %v3256 = vadd.f32 %v2886, %v3202
        %v3257 = vadd.f32 %v2887, %v3205
        %v3258 = vadd.f32 %v2888, %v3210
        %v3259 = vadd.f32 %v2889, %v3213
        %v3260 = vadd.f32 %v2890, %v3218
        %v3261 = vadd.f32 %v2891, %v3221
        %v3262 = vadd.f32 %v2892, %v3226
        %v3263 = vadd.f32 %v2893, %v3229
        %v3264 = vld [vmem:[%s755 + $0x8] sm:$0x1f]
        %v3265 = vld [vmem:[%s755 + $0x18] sm:$0x1f]
        %v3266 = vld [vmem:[%s755 + $0x28] sm:$0x1f]
        %v3267 = vld [vmem:[%s755 + $0x38] sm:$0x1f]
        %v3268 = vld [vmem:[%s755 + $0x48] sm:$0x1f]
        %v3269 = vld [vmem:[%s755 + $0x58] sm:$0x1f]
        %v3270 = vld [vmem:[%s755 + $0x68] sm:$0x1f]
        %v3271 = vld [vmem:[%s755 + $0x78] sm:$0x1f]
        %v3272 = vld [vmem:[%s755 + $0x88] sm:$0x1f]
        %v3273 = vld [vmem:[%s755 + $0x98] sm:$0x1f]
        %v3274 = vld [vmem:[%s755 + $0xa8] sm:$0x1f]
        %v3275 = vld [vmem:[%s755 + $0xb8] sm:$0x1f]
        %v3276 = vld [vmem:[%s755 + $0xc8] sm:$0x1f]
        %v3277 = vld [vmem:[%s755 + $0xd8] sm:$0x1f]
        %v3278 = vld [vmem:[%s755 + $0xe8] sm:$0x1f]
        %v3279 = vld [vmem:[%s755 + $0xf8] sm:$0x1f]
        %v3281 = vshrl.u32 %v2894, 16
        %v3283 = vrot.slane %v3281, 4
        %v3284 = vshll.u32 %v2894, 16
        %v3286 = vrot.slane %v3284, 5
        %v3287 = vor.u32 %v3283, %v3286
        %v3289 = vshrl.u32 %v3264, 16
        %v3291 = vrot.slane %v3289, 4
        %v3292 = vshll.u32 %v3264, 16
        %v3294 = vrot.slane %v3292, 5
        %v3295 = vor.u32 %v3291, %v3294
        %v3296 = vsel %vm1769, %v3287, %v3295
        %v3298 = vshrl.u32 %v2895, 16
        %v3300 = vrot.slane %v3298, 4
        %v3301 = vshll.u32 %v2895, 16
        %v3303 = vrot.slane %v3301, 5
        %v3304 = vor.u32 %v3300, %v3303
        %v3306 = vshrl.u32 %v3265, 16
        %v3308 = vrot.slane %v3306, 4
        %v3309 = vshll.u32 %v3265, 16
        %v3311 = vrot.slane %v3309, 5
        %v3312 = vor.u32 %v3308, %v3311
        %v3313 = vsel %vm1769, %v3304, %v3312
        %v3315 = vshrl.u32 %v2896, 16
        %v3317 = vrot.slane %v3315, 4
        %v3318 = vshll.u32 %v2896, 16
        %v3320 = vrot.slane %v3318, 5
        %v3321 = vor.u32 %v3317, %v3320
        %v3323 = vshrl.u32 %v3266, 16
        %v3325 = vrot.slane %v3323, 4
        %v3326 = vshll.u32 %v3266, 16
        %v3328 = vrot.slane %v3326, 5
        %v3329 = vor.u32 %v3325, %v3328
        %v3330 = vsel %vm1769, %v3321, %v3329
        %v3332 = vshrl.u32 %v2897, 16
        %v3334 = vrot.slane %v3332, 4
        %v3335 = vshll.u32 %v2897, 16
        %v3337 = vrot.slane %v3335, 5
        %v3338 = vor.u32 %v3334, %v3337
        %v3340 = vshrl.u32 %v3267, 16
        %v3342 = vrot.slane %v3340, 4
        %v3343 = vshll.u32 %v3267, 16
        %v3345 = vrot.slane %v3343, 5
        %v3346 = vor.u32 %v3342, %v3345
        %v3347 = vsel %vm1769, %v3338, %v3346
        %v3349 = vshrl.u32 %v2898, 16
        %v3351 = vrot.slane %v3349, 4
        %v3352 = vshll.u32 %v2898, 16
        %v3354 = vrot.slane %v3352, 5
        %v3355 = vor.u32 %v3351, %v3354
        %v3357 = vshrl.u32 %v3268, 16
        %v3359 = vrot.slane %v3357, 4
        %v3360 = vshll.u32 %v3268, 16
        %v3362 = vrot.slane %v3360, 5
        %v3363 = vor.u32 %v3359, %v3362
        %v3364 = vsel %vm1769, %v3355, %v3363
        %v3366 = vshrl.u32 %v2899, 16
        %v3368 = vrot.slane %v3366, 4
        %v3369 = vshll.u32 %v2899, 16
        %v3371 = vrot.slane %v3369, 5
        %v3372 = vor.u32 %v3368, %v3371
        %v3374 = vshrl.u32 %v3269, 16
        %v3376 = vrot.slane %v3374, 4
        %v3377 = vshll.u32 %v3269, 16
        %v3379 = vrot.slane %v3377, 5
        %v3380 = vor.u32 %v3376, %v3379
        %v3381 = vsel %vm1769, %v3372, %v3380
        %v3383 = vshrl.u32 %v2900, 16
        %v3385 = vrot.slane %v3383, 4
        %v3386 = vshll.u32 %v2900, 16
        %v3388 = vrot.slane %v3386, 5
        %v3389 = vor.u32 %v3385, %v3388
        %v3391 = vshrl.u32 %v3270, 16
        %v3393 = vrot.slane %v3391, 4
        %v3394 = vshll.u32 %v3270, 16
        %v3396 = vrot.slane %v3394, 5
        %v3397 = vor.u32 %v3393, %v3396
        %v3398 = vsel %vm1769, %v3389, %v3397
        %v3400 = vshrl.u32 %v2901, 16
        %v3402 = vrot.slane %v3400, 4
        %v3403 = vshll.u32 %v2901, 16
        %v3405 = vrot.slane %v3403, 5
        %v3406 = vor.u32 %v3402, %v3405
        %v3408 = vshrl.u32 %v3271, 16
        %v3410 = vrot.slane %v3408, 4
        %v3411 = vshll.u32 %v3271, 16
        %v3413 = vrot.slane %v3411, 5
        %v3414 = vor.u32 %v3410, %v3413
        %v3415 = vsel %vm1769, %v3406, %v3414
        %v3417 = vshrl.u32 %v2902, 16
        %v3419 = vrot.slane %v3417, 4
        %v3420 = vshll.u32 %v2902, 16
        %v3422 = vrot.slane %v3420, 5
        %v3423 = vor.u32 %v3419, %v3422
        %v3425 = vshrl.u32 %v3272, 16
        %v3427 = vrot.slane %v3425, 4
        %v3428 = vshll.u32 %v3272, 16
        %v3430 = vrot.slane %v3428, 5
        %v3431 = vor.u32 %v3427, %v3430
        %v3432 = vsel %vm1769, %v3423, %v3431
        %v3434 = vshrl.u32 %v2903, 16
        %v3436 = vrot.slane %v3434, 4
        %v3437 = vshll.u32 %v2903, 16
        %v3439 = vrot.slane %v3437, 5
        %v3440 = vor.u32 %v3436, %v3439
        %v3442 = vshrl.u32 %v3273, 16
        %v3444 = vrot.slane %v3442, 4
        %v3445 = vshll.u32 %v3273, 16
        %v3447 = vrot.slane %v3445, 5
        %v3448 = vor.u32 %v3444, %v3447
        %v3449 = vsel %vm1769, %v3440, %v3448
        %v3451 = vshrl.u32 %v2904, 16
        %v3453 = vrot.slane %v3451, 4
        %v3454 = vshll.u32 %v2904, 16
        %v3456 = vrot.slane %v3454, 5
        %v3457 = vor.u32 %v3453, %v3456
        %v3459 = vshrl.u32 %v3274, 16
        %v3461 = vrot.slane %v3459, 4
        %v3462 = vshll.u32 %v3274, 16
        %v3464 = vrot.slane %v3462, 5
        %v3465 = vor.u32 %v3461, %v3464
        %v3466 = vsel %vm1769, %v3457, %v3465
        %v3468 = vshrl.u32 %v2905, 16
        %v3470 = vrot.slane %v3468, 4
        %v3471 = vshll.u32 %v2905, 16
        %v3473 = vrot.slane %v3471, 5
        %v3474 = vor.u32 %v3470, %v3473
        %v3476 = vshrl.u32 %v3275, 16
        %v3478 = vrot.slane %v3476, 4
        %v3479 = vshll.u32 %v3275, 16
        %v3481 = vrot.slane %v3479, 5
        %v3482 = vor.u32 %v3478, %v3481
        %v3483 = vsel %vm1769, %v3474, %v3482
        %v3485 = vshrl.u32 %v2906, 16
        %v3487 = vrot.slane %v3485, 4
        %v3488 = vshll.u32 %v2906, 16
        %v3490 = vrot.slane %v3488, 5
        %v3491 = vor.u32 %v3487, %v3490
        %v3493 = vshrl.u32 %v3276, 16
        %v3495 = vrot.slane %v3493, 4
        %v3496 = vshll.u32 %v3276, 16
        %v3498 = vrot.slane %v3496, 5
        %v3499 = vor.u32 %v3495, %v3498
        %v3500 = vsel %vm1769, %v3491, %v3499
        %v3502 = vshrl.u32 %v2907, 16
        %v3504 = vrot.slane %v3502, 4
        %v3505 = vshll.u32 %v2907, 16
        %v3507 = vrot.slane %v3505, 5
        %v3508 = vor.u32 %v3504, %v3507
        %v3510 = vshrl.u32 %v3277, 16
        %v3512 = vrot.slane %v3510, 4
        %v3513 = vshll.u32 %v3277, 16
        %v3515 = vrot.slane %v3513, 5
        %v3516 = vor.u32 %v3512, %v3515
        %v3517 = vsel %vm1769, %v3508, %v3516
        %v3519 = vshrl.u32 %v2908, 16
        %v3521 = vrot.slane %v3519, 4
        %v3522 = vshll.u32 %v2908, 16
        %v3524 = vrot.slane %v3522, 5
        %v3525 = vor.u32 %v3521, %v3524
        %v3527 = vshrl.u32 %v3278, 16
        %v3529 = vrot.slane %v3527, 4
        %v3530 = vshll.u32 %v3278, 16
        %v3532 = vrot.slane %v3530, 5
        %v3533 = vor.u32 %v3529, %v3532
        %v3534 = vsel %vm1769, %v3525, %v3533
        %v3536 = vshrl.u32 %v2909, 16
        %v3538 = vrot.slane %v3536, 4
        %v3539 = vshll.u32 %v2909, 16
        %v3541 = vrot.slane %v3539, 5
        %v3542 = vor.u32 %v3538, %v3541
        %v3544 = vshrl.u32 %v3279, 16
        %v3546 = vrot.slane %v3544, 4
        %v3547 = vshll.u32 %v3279, 16
        %v3549 = vrot.slane %v3547, 5
        %v3550 = vor.u32 %v3546, %v3549
        %v3551 = vsel %vm1769, %v3542, %v3550
        %s3568 = scalar_lea.vmem [#allocation8], 320
        %v3569 = vld [vmem:[%s3568] sm:$0xf]
        %v3570 = vld [vmem:[%s3568 + $0x4] sm:$0xf]
        %v3571 = vld [vmem:[%s3568 + $0x8] sm:$0xf]
        %v3572 = vld [vmem:[%s3568 + $0xc] sm:$0xf]
        %v3573 = vld [vmem:[%s3568 + $0x10] sm:$0xf]
        %v3574 = vld [vmem:[%s3568 + $0x14] sm:$0xf]
        %v3575 = vld [vmem:[%s3568 + $0x18] sm:$0xf]
        %v3576 = vld [vmem:[%s3568 + $0x1c] sm:$0xf]
        %v3577 = vld [vmem:[%s3568 + $0x20] sm:$0xf]
        %v3578 = vld [vmem:[%s3568 + $0x24] sm:$0xf]
        %v3579 = vld [vmem:[%s3568 + $0x28] sm:$0xf]
        %v3580 = vld [vmem:[%s3568 + $0x2c] sm:$0xf]
        %v3581 = vld [vmem:[%s3568 + $0x30] sm:$0xf]
        %v3582 = vld [vmem:[%s3568 + $0x34] sm:$0xf]
        %v3583 = vld [vmem:[%s3568 + $0x38] sm:$0xf]
        %v3584 = vld [vmem:[%s3568 + $0x3c] sm:$0xf]
        %v3601 = vunpack.c.l.b16 %v3569
        %v3602 = vunpack.c.l.b16 %v3570
        %v3603 = vunpack.c.l.b16 %v3571
        %v3604 = vunpack.c.l.b16 %v3572
        %v3605 = vunpack.c.l.b16 %v3573
        %v3606 = vunpack.c.l.b16 %v3574
        %v3607 = vunpack.c.l.b16 %v3575
        %v3608 = vunpack.c.l.b16 %v3576
        %v3609 = vunpack.c.l.b16 %v3577
        %v3610 = vunpack.c.l.b16 %v3578
        %v3611 = vunpack.c.l.b16 %v3579
        %v3612 = vunpack.c.l.b16 %v3580
        %v3613 = vunpack.c.l.b16 %v3581
        %v3614 = vunpack.c.l.b16 %v3582
        %v3615 = vunpack.c.l.b16 %v3583
        %v3616 = vunpack.c.l.b16 %v3584
        %v3617 = vpack.c.b16 %v3602, %v3601
        %v3618 = vpack.c.b16 %v3604, %v3603
        %v3619 = vpack.c.b16 %v3606, %v3605
        %v3620 = vpack.c.b16 %v3608, %v3607
        %v3621 = vpack.c.b16 %v3610, %v3609
        %v3622 = vpack.c.b16 %v3612, %v3611
        %v3623 = vpack.c.b16 %v3614, %v3613
        %v3624 = vpack.c.b16 %v3616, %v3615
        %3633 = vmatprep.subr.bf16.mxu0 0
        %3634 = vmatpush1.bf16.msra.mxu0 %v3617
        %3635 = vmatprep.subr.bf16.mxu0 0
        %3636 = vmatpush1.bf16.msra.mxu0 %v3618
        %3637 = vmatprep.subr.bf16.mxu0 0
        %3638 = vmatpush1.bf16.msra.mxu0 %v3619
        %3639 = vmatprep.subr.bf16.mxu0 0
        %3640 = vmatpush1.bf16.msra.mxu0 %v3620
        %3641 = vmatprep.subr.bf16.mxu0 0
        %3642 = vmatpush1.bf16.msra.mxu0 %v3621
        %3643 = vmatprep.subr.bf16.mxu0 0
        %3644 = vmatpush1.bf16.msra.mxu0 %v3622
        %3645 = vmatprep.subr.bf16.mxu0 0
        %3646 = vmatpush1.bf16.msra.mxu0 %v3623
        %3647 = vmatprep.subr.bf16.mxu0 0
        %3648 = vmatpush1.bf16.msra.mxu0 %v3624
        %3649 = vmatprep.subr.bf16.mxu0 0
        %3650 = vmatpush1.bf16.msra.mxu0 0
        %3651 = vmatprep.subr.bf16.mxu0 0
        %3652 = vmatpush1.bf16.msra.mxu0 0
        %3653 = vmatprep.subr.bf16.mxu0 0
        %3654 = vmatpush1.bf16.msra.mxu0 0
        %3655 = vmatprep.subr.bf16.mxu0 0
        %3656 = vmatpush1.bf16.msra.mxu0 0
        %3657 = vmatprep.subr.bf16.mxu0 0
        %3658 = vmatpush1.bf16.msra.mxu0 0
        %3659 = vmatprep.subr.bf16.mxu0 0
        %3660 = vmatpush1.bf16.msra.mxu0 0
        %3661 = vmatprep.subr.bf16.mxu0 0
        %3662 = vmatpush1.bf16.msra.mxu0 0
        %3663 = vmatprep.subr.bf16.mxu0 0
        %3664 = vmatpush1.bf16.msra.mxu0 0
        %3665 = vmatprep.mubr.bf16.mxu0 0
        %3666 = vmatmul.mubr.bf16.gmra.mrb[0].mxu0 %v3296
        %v3667 = vpop.f32.mrb[0].mxu0
        %v3668 = vadd.f32 0.0, %v3667
        %v3669 = vpop.f32.mrb[0].mxu0
        %v3670 = vpop.f32.mrb[0].mxu0
        %v3671 = vadd.f32 0.0, %v3670
        %v3672 = vpop.f32.mrb[0].mxu0
        %3673 = vmatprep.mubr.bf16.mxu0 0
        %3674 = vmatmul.mubr.bf16.gmra.mrb[0].mxu0 %v3313
        %v3675 = vpop.f32.mrb[0].mxu0
        %v3676 = vadd.f32 0.0, %v3675
        %v3677 = vpop.f32.mrb[0].mxu0
        %v3678 = vpop.f32.mrb[0].mxu0
        %v3679 = vadd.f32 0.0, %v3678
        %v3680 = vpop.f32.mrb[0].mxu0
        %3681 = vmatprep.mubr.bf16.mxu0 0
        %3682 = vmatmul.mubr.bf16.gmra.mrb[0].mxu0 %v3330
        %v3683 = vpop.f32.mrb[0].mxu0
        %v3684 = vadd.f32 0.0, %v3683
        %v3685 = vpop.f32.mrb[0].mxu0
        %v3686 = vpop.f32.mrb[0].mxu0
        %v3687 = vadd.f32 0.0, %v3686
        %v3688 = vpop.f32.mrb[0].mxu0
        %3689 = vmatprep.mubr.bf16.mxu0 0
        %3690 = vmatmul.mubr.bf16.gmra.mrb[0].mxu0 %v3347
        %v3691 = vpop.f32.mrb[0].mxu0
        %v3692 = vadd.f32 0.0, %v3691
        %v3693 = vpop.f32.mrb[0].mxu0
        %v3694 = vpop.f32.mrb[0].mxu0
        %v3695 = vadd.f32 0.0, %v3694
        %v3696 = vpop.f32.mrb[0].mxu0
        %3697 = vmatprep.mubr.bf16.mxu0 0
        %3698 = vmatmul.mubr.bf16.gmra.mrb[0].mxu0 %v3364
        %v3699 = vpop.f32.mrb[0].mxu0
        %v3700 = vadd.f32 0.0, %v3699
        %v3701 = vpop.f32.mrb[0].mxu0
        %v3702 = vpop.f32.mrb[0].mxu0
        %v3703 = vadd.f32 0.0, %v3702
        %v3704 = vpop.f32.mrb[0].mxu0
        %3705 = vmatprep.mubr.bf16.mxu0 0
        %3706 = vmatmul.mubr.bf16.gmra.mrb[0].mxu0 %v3381
        %v3707 = vpop.f32.mrb[0].mxu0
        %v3708 = vadd.f32 0.0, %v3707
        %v3709 = vpop.f32.mrb[0].mxu0
        %v3710 = vpop.f32.mrb[0].mxu0
        %v3711 = vadd.f32 0.0, %v3710
        %v3712 = vpop.f32.mrb[0].mxu0
        %3713 = vmatprep.mubr.bf16.mxu0 0
        %3714 = vmatmul.mubr.bf16.gmra.mrb[0].mxu0 %v3398
        %v3715 = vpop.f32.mrb[0].mxu0
        %v3716 = vadd.f32 0.0, %v3715
        %v3717 = vpop.f32.mrb[0].mxu0
        %v3718 = vpop.f32.mrb[0].mxu0
        %v3719 = vadd.f32 0.0, %v3718
        %v3720 = vpop.f32.mrb[0].mxu0
        %3721 = vmatprep.mubr.bf16.mxu0 0
        %3722 = vmatmul.mubr.bf16.gmra.mrb[0].mxu0 %v3415
        %v3723 = vpop.f32.mrb[0].mxu0
        %v3724 = vadd.f32 0.0, %v3723
        %v3725 = vpop.f32.mrb[0].mxu0
        %v3726 = vpop.f32.mrb[0].mxu0
        %v3727 = vadd.f32 0.0, %v3726
        %v3728 = vpop.f32.mrb[0].mxu0
        %3729 = vmatprep.mubr.bf16.mxu0 0
        %3730 = vmatmul.mubr.bf16.gmra.mrb[0].mxu0 %v3432
        %v3731 = vpop.f32.mrb[0].mxu0
        %v3732 = vadd.f32 0.0, %v3731
        %v3733 = vpop.f32.mrb[0].mxu0
        %v3734 = vpop.f32.mrb[0].mxu0
        %v3735 = vadd.f32 0.0, %v3734
        %v3736 = vpop.f32.mrb[0].mxu0
        %3737 = vmatprep.mubr.bf16.mxu0 0
        %3738 = vmatmul.mubr.bf16.gmra.mrb[0].mxu0 %v3449
        %v3739 = vpop.f32.mrb[0].mxu0
        %v3740 = vadd.f32 0.0, %v3739
        %v3741 = vpop.f32.mrb[0].mxu0
        %v3742 = vpop.f32.mrb[0].mxu0
        %v3743 = vadd.f32 0.0, %v3742
        %v3744 = vpop.f32.mrb[0].mxu0
        %3745 = vmatprep.mubr.bf16.mxu0 0
        %3746 = vmatmul.mubr.bf16.gmra.mrb[0].mxu0 %v3466
        %v3747 = vpop.f32.mrb[0].mxu0
        %v3748 = vadd.f32 0.0, %v3747
        %v3749 = vpop.f32.mrb[0].mxu0
        %v3750 = vpop.f32.mrb[0].mxu0
        %v3751 = vadd.f32 0.0, %v3750
        %v3752 = vpop.f32.mrb[0].mxu0
        %3753 = vmatprep.mubr.bf16.mxu0 0
        %3754 = vmatmul.mubr.bf16.gmra.mrb[0].mxu0 %v3483
        %v3755 = vpop.f32.mrb[0].mxu0
        %v3756 = vadd.f32 0.0, %v3755
        %v3757 = vpop.f32.mrb[0].mxu0
        %v3758 = vpop.f32.mrb[0].mxu0
        %v3759 = vadd.f32 0.0, %v3758
        %v3760 = vpop.f32.mrb[0].mxu0
        %3761 = vmatprep.mubr.bf16.mxu0 0
        %3762 = vmatmul.mubr.bf16.gmra.mrb[0].mxu0 %v3500
        %v3763 = vpop.f32.mrb[0].mxu0
        %v3764 = vadd.f32 0.0, %v3763
        %v3765 = vpop.f32.mrb[0].mxu0
        %v3766 = vpop.f32.mrb[0].mxu0
        %v3767 = vadd.f32 0.0, %v3766
        %v3768 = vpop.f32.mrb[0].mxu0
        %3769 = vmatprep.mubr.bf16.mxu0 0
        %3770 = vmatmul.mubr.bf16.gmra.mrb[0].mxu0 %v3517
        %v3771 = vpop.f32.mrb[0].mxu0
        %v3772 = vadd.f32 0.0, %v3771
        %v3773 = vpop.f32.mrb[0].mxu0
        %v3774 = vpop.f32.mrb[0].mxu0
        %v3775 = vadd.f32 0.0, %v3774
        %v3776 = vpop.f32.mrb[0].mxu0
        %3777 = vmatprep.mubr.bf16.mxu0 0
        %3778 = vmatmul.mubr.bf16.gmra.mrb[0].mxu0 %v3534
        %v3779 = vpop.f32.mrb[0].mxu0
        %v3780 = vadd.f32 0.0, %v3779
        %v3781 = vpop.f32.mrb[0].mxu0
        %v3782 = vpop.f32.mrb[0].mxu0
        %v3783 = vadd.f32 0.0, %v3782
        %v3784 = vpop.f32.mrb[0].mxu0
        %3785 = vmatprep.mubr.bf16.mxu0 0
        %3786 = vmatmul.mubr.bf16.gmra.mrb[0].mxu0 %v3551
        %v3787 = vpop.f32.mrb[0].mxu0
        %v3788 = vadd.f32 0.0, %v3787
        %v3789 = vpop.f32.mrb[0].mxu0
        %v3790 = vpop.f32.mrb[0].mxu0
        %v3791 = vadd.f32 0.0, %v3790
        %v3792 = vpop.f32.mrb[0].mxu0
        %3793 = vdwg.mxu0
        %v3794 = vadd.f32 %v3232, %v3668
        %v3795 = vadd.f32 %v3233, %v3671
        %v3796 = vadd.f32 %v3234, %v3676
        %v3797 = vadd.f32 %v3235, %v3679
        %v3798 = vadd.f32 %v3236, %v3684
        %v3799 = vadd.f32 %v3237, %v3687
        %v3800 = vadd.f32 %v3238, %v3692
        %v3801 = vadd.f32 %v3239, %v3695
        %v3802 = vadd.f32 %v3240, %v3700
        %v3803 = vadd.f32 %v3241, %v3703
        %v3804 = vadd.f32 %v3242, %v3708
        %v3805 = vadd.f32 %v3243, %v3711
        %v3806 = vadd.f32 %v3244, %v3716
        %v3807 = vadd.f32 %v3245, %v3719
        %v3808 = vadd.f32 %v3246, %v3724
        %v3809 = vadd.f32 %v3247, %v3727
        %v3810 = vadd.f32 %v3248, %v3732
        %v3811 = vadd.f32 %v3249, %v3735
        %v3812 = vadd.f32 %v3250, %v3740
        %v3813 = vadd.f32 %v3251, %v3743
        %v3814 = vadd.f32 %v3252, %v3748
        %v3815 = vadd.f32 %v3253, %v3751
        %v3816 = vadd.f32 %v3254, %v3756
        %v3817 = vadd.f32 %v3255, %v3759
        %v3818 = vadd.f32 %v3256, %v3764
        %v3819 = vadd.f32 %v3257, %v3767
        %v3820 = vadd.f32 %v3258, %v3772
        %v3821 = vadd.f32 %v3259, %v3775
        %v3822 = vadd.f32 %v3260, %v3780
        %v3823 = vadd.f32 %v3261, %v3783
        %v3824 = vadd.f32 %v3262, %v3788
        %v3825 = vadd.f32 %v3263, %v3791
        %s3826 = scalar_lea.vmem [#allocation2], 32
        %v3827 = vld [vmem:[%s3826] sm:$0xf8]
        %v3828 = vld [vmem:[%s3826 + $0x8] sm:$0xf]
        %v3829 = vld [vmem:[%s3826 + $0x10] sm:$0xf8]
        %v3830 = vld [vmem:[%s3826 + $0x18] sm:$0xf]
        %v3831 = vld [vmem:[%s3826 + $0x20] sm:$0xf8]
        %v3832 = vld [vmem:[%s3826 + $0x28] sm:$0xf]
        %v3833 = vld [vmem:[%s3826 + $0x30] sm:$0xf8]
        %v3834 = vld [vmem:[%s3826 + $0x38] sm:$0xf]
        %v3835 = vld [vmem:[%s3826 + $0x40] sm:$0xf8]
        %v3836 = vld [vmem:[%s3826 + $0x48] sm:$0xf]
        %v3837 = vld [vmem:[%s3826 + $0x50] sm:$0xf8]
        %v3838 = vld [vmem:[%s3826 + $0x58] sm:$0xf]
        %v3839 = vld [vmem:[%s3826 + $0x60] sm:$0xf8]
        %v3840 = vld [vmem:[%s3826 + $0x68] sm:$0xf]
        %v3841 = vld [vmem:[%s3826 + $0x70] sm:$0xf8]
        %v3842 = vld [vmem:[%s3826 + $0x78] sm:$0xf]
        %v3843 = vld [vmem:[%s3826 + $0x80] sm:$0xf8]
        %v3844 = vld [vmem:[%s3826 + $0x88] sm:$0xf]
        %v3845 = vld [vmem:[%s3826 + $0x90] sm:$0xf8]
        %v3846 = vld [vmem:[%s3826 + $0x98] sm:$0xf]
        %v3847 = vld [vmem:[%s3826 + $0xa0] sm:$0xf8]
        %v3848 = vld [vmem:[%s3826 + $0xa8] sm:$0xf]
        %v3849 = vld [vmem:[%s3826 + $0xb0] sm:$0xf8]
        %v3850 = vld [vmem:[%s3826 + $0xb8] sm:$0xf]
        %v3851 = vld [vmem:[%s3826 + $0xc0] sm:$0xf8]
        %v3852 = vld [vmem:[%s3826 + $0xc8] sm:$0xf]
        %v3853 = vld [vmem:[%s3826 + $0xd0] sm:$0xf8]
        %v3854 = vld [vmem:[%s3826 + $0xd8] sm:$0xf]
        %v3855 = vld [vmem:[%s3826 + $0xe0] sm:$0xf8]
        %v3856 = vld [vmem:[%s3826 + $0xe8] sm:$0xf]
        %v3857 = vld [vmem:[%s3826 + $0xf0] sm:$0xf8]
        %v3858 = vld [vmem:[%s3826 + $0xf8] sm:$0xf]
        %v3860 = vshrl.u32 %v3827, 16
        %v3862 = vrot.slane %v3860, 3
        %v3863 = vshll.u32 %v3827, 16
        %v3865 = vrot.slane %v3863, 4
        %v3866 = vor.u32 %v3862, %v3865
        %v3868 = vshrl.u32 %v3828, 16
        %v3870 = vrot.slane %v3868, 3
        %v3871 = vshll.u32 %v3828, 16
        %v3873 = vrot.slane %v3871, 4
        %v3874 = vor.u32 %v3870, %v3873
        %v3875 = vsel %vm900, %v3866, %v3874
        %v3877 = vshrl.u32 %v3829, 16
        %v3879 = vrot.slane %v3877, 3
        %v3880 = vshll.u32 %v3829, 16
        %v3882 = vrot.slane %v3880, 4
        %v3883 = vor.u32 %v3879, %v3882
        %v3885 = vshrl.u32 %v3830, 16
        %v3887 = vrot.slane %v3885, 3
        %v3888 = vshll.u32 %v3830, 16
        %v3890 = vrot.slane %v3888, 4
        %v3891 = vor.u32 %v3887, %v3890
        %v3892 = vsel %vm900, %v3883, %v3891
        %v3894 = vshrl.u32 %v3831, 16
        %v3896 = vrot.slane %v3894, 3
        %v3897 = vshll.u32 %v3831, 16
        %v3899 = vrot.slane %v3897, 4
        %v3900 = vor.u32 %v3896, %v3899
        %v3902 = vshrl.u32 %v3832, 16
        %v3904 = vrot.slane %v3902, 3
        %v3905 = vshll.u32 %v3832, 16
        %v3907 = vrot.slane %v3905, 4
        %v3908 = vor.u32 %v3904, %v3907
        %v3909 = vsel %vm900, %v3900, %v3908
        %v3911 = vshrl.u32 %v3833, 16
        %v3913 = vrot.slane %v3911, 3
        %v3914 = vshll.u32 %v3833, 16
        %v3916 = vrot.slane %v3914, 4
        %v3917 = vor.u32 %v3913, %v3916
        %v3919 = vshrl.u32 %v3834, 16
        %v3921 = vrot.slane %v3919, 3
        %v3922 = vshll.u32 %v3834, 16
        %v3924 = vrot.slane %v3922, 4
        %v3925 = vor.u32 %v3921, %v3924
        %v3926 = vsel %vm900, %v3917, %v3925
        %v3928 = vshrl.u32 %v3835, 16
        %v3930 = vrot.slane %v3928, 3
        %v3931 = vshll.u32 %v3835, 16
        %v3933 = vrot.slane %v3931, 4
        %v3934 = vor.u32 %v3930, %v3933
        %v3936 = vshrl.u32 %v3836, 16
        %v3938 = vrot.slane %v3936, 3
        %v3939 = vshll.u32 %v3836, 16
        %v3941 = vrot.slane %v3939, 4
        %v3942 = vor.u32 %v3938, %v3941
        %v3943 = vsel %vm900, %v3934, %v3942
        %v3945 = vshrl.u32 %v3837, 16
        %v3947 = vrot.slane %v3945, 3
        %v3948 = vshll.u32 %v3837, 16
        %v3950 = vrot.slane %v3948, 4
        %v3951 = vor.u32 %v3947, %v3950
        %v3953 = vshrl.u32 %v3838, 16
        %v3955 = vrot.slane %v3953, 3
        %v3956 = vshll.u32 %v3838, 16
        %v3958 = vrot.slane %v3956, 4
        %v3959 = vor.u32 %v3955, %v3958
        %v3960 = vsel %vm900, %v3951, %v3959
        %v3962 = vshrl.u32 %v3839, 16
        %v3964 = vrot.slane %v3962, 3
        %v3965 = vshll.u32 %v3839, 16
        %v3967 = vrot.slane %v3965, 4
        %v3968 = vor.u32 %v3964, %v3967
        %v3970 = vshrl.u32 %v3840, 16
        %v3972 = vrot.slane %v3970, 3
        %v3973 = vshll.u32 %v3840, 16
        %v3975 = vrot.slane %v3973, 4
        %v3976 = vor.u32 %v3972, %v3975
        %v3977 = vsel %vm900, %v3968, %v3976
        %v3979 = vshrl.u32 %v3841, 16
        %v3981 = vrot.slane %v3979, 3
        %v3982 = vshll.u32 %v3841, 16
        %v3984 = vrot.slane %v3982, 4
        %v3985 = vor.u32 %v3981, %v3984
        %v3987 = vshrl.u32 %v3842, 16
        %v3989 = vrot.slane %v3987, 3
        %v3990 = vshll.u32 %v3842, 16
        %v3992 = vrot.slane %v3990, 4
        %v3993 = vor.u32 %v3989, %v3992
        %v3994 = vsel %vm900, %v3985, %v3993
        %v3996 = vshrl.u32 %v3843, 16
        %v3998 = vrot.slane %v3996, 3
        %v3999 = vshll.u32 %v3843, 16
        %v4001 = vrot.slane %v3999, 4
        %v4002 = vor.u32 %v3998, %v4001
        %v4004 = vshrl.u32 %v3844, 16
        %v4006 = vrot.slane %v4004, 3
        %v4007 = vshll.u32 %v3844, 16
        %v4009 = vrot.slane %v4007, 4
        %v4010 = vor.u32 %v4006, %v4009
        %v4011 = vsel %vm900, %v4002, %v4010
        %v4013 = vshrl.u32 %v3845, 16
        %v4015 = vrot.slane %v4013, 3
        %v4016 = vshll.u32 %v3845, 16
        %v4018 = vrot.slane %v4016, 4
        %v4019 = vor.u32 %v4015, %v4018
        %v4021 = vshrl.u32 %v3846, 16
        %v4023 = vrot.slane %v4021, 3
        %v4024 = vshll.u32 %v3846, 16
        %v4026 = vrot.slane %v4024, 4
        %v4027 = vor.u32 %v4023, %v4026
        %v4028 = vsel %vm900, %v4019, %v4027
        %v4030 = vshrl.u32 %v3847, 16
        %v4032 = vrot.slane %v4030, 3
        %v4033 = vshll.u32 %v3847, 16
        %v4035 = vrot.slane %v4033, 4
        %v4036 = vor.u32 %v4032, %v4035
        %v4038 = vshrl.u32 %v3848, 16
        %v4040 = vrot.slane %v4038, 3
        %v4041 = vshll.u32 %v3848, 16
        %v4043 = vrot.slane %v4041, 4
        %v4044 = vor.u32 %v4040, %v4043
        %v4045 = vsel %vm900, %v4036, %v4044
        %v4047 = vshrl.u32 %v3849, 16
        %v4049 = vrot.slane %v4047, 3
        %v4050 = vshll.u32 %v3849, 16
        %v4052 = vrot.slane %v4050, 4
        %v4053 = vor.u32 %v4049, %v4052
        %v4055 = vshrl.u32 %v3850, 16
        %v4057 = vrot.slane %v4055, 3
        %v4058 = vshll.u32 %v3850, 16
        %v4060 = vrot.slane %v4058, 4
        %v4061 = vor.u32 %v4057, %v4060
        %v4062 = vsel %vm900, %v4053, %v4061
        %v4064 = vshrl.u32 %v3851, 16
        %v4066 = vrot.slane %v4064, 3
        %v4067 = vshll.u32 %v3851, 16
        %v4069 = vrot.slane %v4067, 4
        %v4070 = vor.u32 %v4066, %v4069
        %v4072 = vshrl.u32 %v3852, 16
        %v4074 = vrot.slane %v4072, 3
        %v4075 = vshll.u32 %v3852, 16
        %v4077 = vrot.slane %v4075, 4
        %v4078 = vor.u32 %v4074, %v4077
        %v4079 = vsel %vm900, %v4070, %v4078
        %v4081 = vshrl.u32 %v3853, 16
        %v4083 = vrot.slane %v4081, 3
        %v4084 = vshll.u32 %v3853, 16
        %v4086 = vrot.slane %v4084, 4
        %v4087 = vor.u32 %v4083, %v4086
        %v4089 = vshrl.u32 %v3854, 16
        %v4091 = vrot.slane %v4089, 3
        %v4092 = vshll.u32 %v3854, 16
        %v4094 = vrot.slane %v4092, 4
        %v4095 = vor.u32 %v4091, %v4094
        %v4096 = vsel %vm900, %v4087, %v4095
        %v4098 = vshrl.u32 %v3855, 16
        %v4100 = vrot.slane %v4098, 3
        %v4101 = vshll.u32 %v3855, 16
        %v4103 = vrot.slane %v4101, 4
        %v4104 = vor.u32 %v4100, %v4103
        %v4106 = vshrl.u32 %v3856, 16
        %v4108 = vrot.slane %v4106, 3
        %v4109 = vshll.u32 %v3856, 16
        %v4111 = vrot.slane %v4109, 4
        %v4112 = vor.u32 %v4108, %v4111
        %v4113 = vsel %vm900, %v4104, %v4112
        %v4115 = vshrl.u32 %v3857, 16
        %v4117 = vrot.slane %v4115, 3
        %v4118 = vshll.u32 %v3857, 16
        %v4120 = vrot.slane %v4118, 4
        %v4121 = vor.u32 %v4117, %v4120
        %v4123 = vshrl.u32 %v3858, 16
        %v4125 = vrot.slane %v4123, 3
        %v4126 = vshll.u32 %v3858, 16
        %v4128 = vrot.slane %v4126, 4
        %v4129 = vor.u32 %v4125, %v4128
        %v4130 = vsel %vm900, %v4121, %v4129
        %s4147 = scalar_lea.vmem [#allocation8], 384
        %v4148 = vld [vmem:[%s4147] sm:$0xf]
        %v4149 = vld [vmem:[%s4147 + $0x4] sm:$0xf]
        %v4150 = vld [vmem:[%s4147 + $0x8] sm:$0xf]
        %v4151 = vld [vmem:[%s4147 + $0xc] sm:$0xf]
        %v4152 = vld [vmem:[%s4147 + $0x10] sm:$0xf]
        %v4153 = vld [vmem:[%s4147 + $0x14] sm:$0xf]
        %v4154 = vld [vmem:[%s4147 + $0x18] sm:$0xf]
        %v4155 = vld [vmem:[%s4147 + $0x1c] sm:$0xf]
        %v4156 = vld [vmem:[%s4147 + $0x20] sm:$0xf]
        %v4157 = vld [vmem:[%s4147 + $0x24] sm:$0xf]
        %v4158 = vld [vmem:[%s4147 + $0x28] sm:$0xf]
        %v4159 = vld [vmem:[%s4147 + $0x2c] sm:$0xf]
        %v4160 = vld [vmem:[%s4147 + $0x30] sm:$0xf]
        %v4161 = vld [vmem:[%s4147 + $0x34] sm:$0xf]
        %v4162 = vld [vmem:[%s4147 + $0x38] sm:$0xf]
        %v4163 = vld [vmem:[%s4147 + $0x3c] sm:$0xf]
        %v4180 = vunpack.c.l.b16 %v4148
        %v4181 = vunpack.c.l.b16 %v4149
        %v4182 = vunpack.c.l.b16 %v4150
        %v4183 = vunpack.c.l.b16 %v4151
        %v4184 = vunpack.c.l.b16 %v4152
        %v4185 = vunpack.c.l.b16 %v4153
        %v4186 = vunpack.c.l.b16 %v4154
        %v4187 = vunpack.c.l.b16 %v4155
        %v4188 = vunpack.c.l.b16 %v4156
        %v4189 = vunpack.c.l.b16 %v4157
        %v4190 = vunpack.c.l.b16 %v4158
        %v4191 = vunpack.c.l.b16 %v4159
        %v4192 = vunpack.c.l.b16 %v4160
        %v4193 = vunpack.c.l.b16 %v4161
        %v4194 = vunpack.c.l.b16 %v4162
        %v4195 = vunpack.c.l.b16 %v4163
        %v4196 = vpack.c.b16 %v4181, %v4180
        %v4197 = vpack.c.b16 %v4183, %v4182
        %v4198 = vpack.c.b16 %v4185, %v4184
        %v4199 = vpack.c.b16 %v4187, %v4186
        %v4200 = vpack.c.b16 %v4189, %v4188
        %v4201 = vpack.c.b16 %v4191, %v4190
        %v4202 = vpack.c.b16 %v4193, %v4192
        %v4203 = vpack.c.b16 %v4195, %v4194
        %4212 = vmatprep.subr.bf16.mxu0 0
        %4213 = vmatpush1.bf16.msra.mxu0 %v4196
        %4214 = vmatprep.subr.bf16.mxu0 0
        %4215 = vmatpush1.bf16.msra.mxu0 %v4197
        %4216 = vmatprep.subr.bf16.mxu0 0
        %4217 = vmatpush1.bf16.msra.mxu0 %v4198
        %4218 = vmatprep.subr.bf16.mxu0 0
        %4219 = vmatpush1.bf16.msra.mxu0 %v4199
        %4220 = vmatprep.subr.bf16.mxu0 0
        %4221 = vmatpush1.bf16.msra.mxu0 %v4200
        %4222 = vmatprep.subr.bf16.mxu0 0
        %4223 = vmatpush1.bf16.msra.mxu0 %v4201
        %4224 = vmatprep.subr.bf16.mxu0 0
        %4225 = vmatpush1.bf16.msra.mxu0 %v4202
        %4226 = vmatprep.subr.bf16.mxu0 0
        %4227 = vmatpush1.bf16.msra.mxu0 %v4203
        %4228 = vmatprep.subr.bf16.mxu0 0
        %4229 = vmatpush1.bf16.msra.mxu0 0
        %4230 = vmatprep.subr.bf16.mxu0 0
        %4231 = vmatpush1.bf16.msra.mxu0 0
        %4232 = vmatprep.subr.bf16.mxu0 0
        %4233 = vmatpush1.bf16.msra.mxu0 0
        %4234 = vmatprep.subr.bf16.mxu0 0
        %4235 = vmatpush1.bf16.msra.mxu0 0
        %4236 = vmatprep.subr.bf16.mxu0 0
        %4237 = vmatpush1.bf16.msra.mxu0 0
        %4238 = vmatprep.subr.bf16.mxu0 0
        %4239 = vmatpush1.bf16.msra.mxu0 0
        %4240 = vmatprep.subr.bf16.mxu0 0
        %4241 = vmatpush1.bf16.msra.mxu0 0
        %4242 = vmatprep.subr.bf16.mxu0 0
        %4243 = vmatpush1.bf16.msra.mxu0 0
        %4244 = vmatprep.mubr.bf16.mxu0 0
        %4245 = vmatmul.mubr.bf16.gmra.mrb[0].mxu0 %v3875
        %v4246 = vpop.f32.mrb[0].mxu0
        %v4247 = vadd.f32 0.0, %v4246
        %v4248 = vpop.f32.mrb[0].mxu0
        %v4249 = vpop.f32.mrb[0].mxu0
        %v4250 = vadd.f32 0.0, %v4249
        %v4251 = vpop.f32.mrb[0].mxu0
        %4252 = vmatprep.mubr.bf16.mxu0 0
        %4253 = vmatmul.mubr.bf16.gmra.mrb[0].mxu0 %v3892
        %v4254 = vpop.f32.mrb[0].mxu0
        %v4255 = vadd.f32 0.0, %v4254
        %v4256 = vpop.f32.mrb[0].mxu0
        %v4257 = vpop.f32.mrb[0].mxu0
        %v4258 = vadd.f32 0.0, %v4257
        %v4259 = vpop.f32.mrb[0].mxu0
        %4260 = vmatprep.mubr.bf16.mxu0 0
        %4261 = vmatmul.mubr.bf16.gmra.mrb[0].mxu0 %v3909
        %v4262 = vpop.f32.mrb[0].mxu0
        %v4263 = vadd.f32 0.0, %v4262
        %v4264 = vpop.f32.mrb[0].mxu0
        %v4265 = vpop.f32.mrb[0].mxu0
        %v4266 = vadd.f32 0.0, %v4265
        %v4267 = vpop.f32.mrb[0].mxu0
        %4268 = vmatprep.mubr.bf16.mxu0 0
        %4269 = vmatmul.mubr.bf16.gmra.mrb[0].mxu0 %v3926
        %v4270 = vpop.f32.mrb[0].mxu0
        %v4271 = vadd.f32 0.0, %v4270
        %v4272 = vpop.f32.mrb[0].mxu0
        %v4273 = vpop.f32.mrb[0].mxu0
        %v4274 = vadd.f32 0.0, %v4273
        %v4275 = vpop.f32.mrb[0].mxu0
        %4276 = vmatprep.mubr.bf16.mxu0 0
        %4277 = vmatmul.mubr.bf16.gmra.mrb[0].mxu0 %v3943
        %v4278 = vpop.f32.mrb[0].mxu0
        %v4279 = vadd.f32 0.0, %v4278
        %v4280 = vpop.f32.mrb[0].mxu0
        %v4281 = vpop.f32.mrb[0].mxu0
        %v4282 = vadd.f32 0.0, %v4281
        %v4283 = vpop.f32.mrb[0].mxu0
        %4284 = vmatprep.mubr.bf16.mxu0 0
        %4285 = vmatmul.mubr.bf16.gmra.mrb[0].mxu0 %v3960
        %v4286 = vpop.f32.mrb[0].mxu0
        %v4287 = vadd.f32 0.0, %v4286
        %v4288 = vpop.f32.mrb[0].mxu0
        %v4289 = vpop.f32.mrb[0].mxu0
        %v4290 = vadd.f32 0.0, %v4289
        %v4291 = vpop.f32.mrb[0].mxu0
        %4292 = vmatprep.mubr.bf16.mxu0 0
        %4293 = vmatmul.mubr.bf16.gmra.mrb[0].mxu0 %v3977
        %v4294 = vpop.f32.mrb[0].mxu0
        %v4295 = vadd.f32 0.0, %v4294
        %v4296 = vpop.f32.mrb[0].mxu0
        %v4297 = vpop.f32.mrb[0].mxu0
        %v4298 = vadd.f32 0.0, %v4297
        %v4299 = vpop.f32.mrb[0].mxu0
        %4300 = vmatprep.mubr.bf16.mxu0 0
        %4301 = vmatmul.mubr.bf16.gmra.mrb[0].mxu0 %v3994
        %v4302 = vpop.f32.mrb[0].mxu0
        %v4303 = vadd.f32 0.0, %v4302
        %v4304 = vpop.f32.mrb[0].mxu0
        %v4305 = vpop.f32.mrb[0].mxu0
        %v4306 = vadd.f32 0.0, %v4305
        %v4307 = vpop.f32.mrb[0].mxu0
        %4308 = vmatprep.mubr.bf16.mxu0 0
        %4309 = vmatmul.mubr.bf16.gmra.mrb[0].mxu0 %v4011
        %v4310 = vpop.f32.mrb[0].mxu0
        %v4311 = vadd.f32 0.0, %v4310
        %v4312 = vpop.f32.mrb[0].mxu0
        %v4313 = vpop.f32.mrb[0].mxu0
        %v4314 = vadd.f32 0.0, %v4313
        %v4315 = vpop.f32.mrb[0].mxu0
        %4316 = vmatprep.mubr.bf16.mxu0 0
        %4317 = vmatmul.mubr.bf16.gmra.mrb[0].mxu0 %v4028
        %v4318 = vpop.f32.mrb[0].mxu0
        %v4319 = vadd.f32 0.0, %v4318
        %v4320 = vpop.f32.mrb[0].mxu0
        %v4321 = vpop.f32.mrb[0].mxu0
        %v4322 = vadd.f32 0.0, %v4321
        %v4323 = vpop.f32.mrb[0].mxu0
        %4324 = vmatprep.mubr.bf16.mxu0 0
        %4325 = vmatmul.mubr.bf16.gmra.mrb[0].mxu0 %v4045
        %v4326 = vpop.f32.mrb[0].mxu0
        %v4327 = vadd.f32 0.0, %v4326
        %v4328 = vpop.f32.mrb[0].mxu0
        %v4329 = vpop.f32.mrb[0].mxu0
        %v4330 = vadd.f32 0.0, %v4329
        %v4331 = vpop.f32.mrb[0].mxu0
        %4332 = vmatprep.mubr.bf16.mxu0 0
        %4333 = vmatmul.mubr.bf16.gmra.mrb[0].mxu0 %v4062
        %v4334 = vpop.f32.mrb[0].mxu0
        %v4335 = vadd.f32 0.0, %v4334
        %v4336 = vpop.f32.mrb[0].mxu0
        %v4337 = vpop.f32.mrb[0].mxu0
        %v4338 = vadd.f32 0.0, %v4337
        %v4339 = vpop.f32.mrb[0].mxu0
        %4340 = vmatprep.mubr.bf16.mxu0 0
        %4341 = vmatmul.mubr.bf16.gmra.mrb[0].mxu0 %v4079
        %v4342 = vpop.f32.mrb[0].mxu0
        %v4343 = vadd.f32 0.0, %v4342
        %v4344 = vpop.f32.mrb[0].mxu0
        %v4345 = vpop.f32.mrb[0].mxu0
        %v4346 = vadd.f32 0.0, %v4345
        %v4347 = vpop.f32.mrb[0].mxu0
        %4348 = vmatprep.mubr.bf16.mxu0 0
        %4349 = vmatmul.mubr.bf16.gmra.mrb[0].mxu0 %v4096
        %v4350 = vpop.f32.mrb[0].mxu0
        %v4351 = vadd.f32 0.0, %v4350
        %v4352 = vpop.f32.mrb[0].mxu0
        %v4353 = vpop.f32.mrb[0].mxu0
        %v4354 = vadd.f32 0.0, %v4353
        %v4355 = vpop.f32.mrb[0].mxu0
        %4356 = vmatprep.mubr.bf16.mxu0 0
        %4357 = vmatmul.mubr.bf16.gmra.mrb[0].mxu0 %v4113
        %v4358 = vpop.f32.mrb[0].mxu0
        %v4359 = vadd.f32 0.0, %v4358
        %v4360 = vpop.f32.mrb[0].mxu0
        %v4361 = vpop.f32.mrb[0].mxu0
        %v4362 = vadd.f32 0.0, %v4361
        %v4363 = vpop.f32.mrb[0].mxu0
        %4364 = vmatprep.mubr.bf16.mxu0 0
        %4365 = vmatmul.mubr.bf16.gmra.mrb[0].mxu0 %v4130
        %v4366 = vpop.f32.mrb[0].mxu0
        %v4367 = vadd.f32 0.0, %v4366
        %v4368 = vpop.f32.mrb[0].mxu0
        %v4369 = vpop.f32.mrb[0].mxu0
        %v4370 = vadd.f32 0.0, %v4369
        %v4371 = vpop.f32.mrb[0].mxu0
        %4372 = vdwg.mxu0
        %v4373 = vadd.f32 %v3794, %v4247
        %v4374 = vadd.f32 %v3795, %v4250
        %v4375 = vadd.f32 %v3796, %v4255
        %v4376 = vadd.f32 %v3797, %v4258
        %v4377 = vadd.f32 %v3798, %v4263
        %v4378 = vadd.f32 %v3799, %v4266
        %v4379 = vadd.f32 %v3800, %v4271
        %v4380 = vadd.f32 %v3801, %v4274
        %v4381 = vadd.f32 %v3802, %v4279
        %v4382 = vadd.f32 %v3803, %v4282
        %v4383 = vadd.f32 %v3804, %v4287
        %v4384 = vadd.f32 %v3805, %v4290
        %v4385 = vadd.f32 %v3806, %v4295
        %v4386 = vadd.f32 %v3807, %v4298
        %v4387 = vadd.f32 %v3808, %v4303
        %v4388 = vadd.f32 %v3809, %v4306
        %v4389 = vadd.f32 %v3810, %v4311
        %v4390 = vadd.f32 %v3811, %v4314
        %v4391 = vadd.f32 %v3812, %v4319
        %v4392 = vadd.f32 %v3813, %v4322
        %v4393 = vadd.f32 %v3814, %v4327
        %v4394 = vadd.f32 %v3815, %v4330
        %v4395 = vadd.f32 %v3816, %v4335
        %v4396 = vadd.f32 %v3817, %v4338
        %v4397 = vadd.f32 %v3818, %v4343
        %v4398 = vadd.f32 %v3819, %v4346
        %v4399 = vadd.f32 %v3820, %v4351
        %v4400 = vadd.f32 %v3821, %v4354
        %v4401 = vadd.f32 %v3822, %v4359
        %v4402 = vadd.f32 %v3823, %v4362
        %v4403 = vadd.f32 %v3824, %v4367
        %v4404 = vadd.f32 %v3825, %v4370
        %v4405 = vld [vmem:[%s3826] sm:$0xf0]
        %v4406 = vld [vmem:[%s3826 + $0x10] sm:$0xf0]
        %v4407 = vld [vmem:[%s3826 + $0x20] sm:$0xf0]
        %v4408 = vld [vmem:[%s3826 + $0x30] sm:$0xf0]
        %v4409 = vld [vmem:[%s3826 + $0x40] sm:$0xf0]
        %v4410 = vld [vmem:[%s3826 + $0x50] sm:$0xf0]
        %v4411 = vld [vmem:[%s3826 + $0x60] sm:$0xf0]
        %v4412 = vld [vmem:[%s3826 + $0x70] sm:$0xf0]
        %v4413 = vld [vmem:[%s3826 + $0x80] sm:$0xf0]
        %v4414 = vld [vmem:[%s3826 + $0x90] sm:$0xf0]
        %v4415 = vld [vmem:[%s3826 + $0xa0] sm:$0xf0]
        %v4416 = vld [vmem:[%s3826 + $0xb0] sm:$0xf0]
        %v4417 = vld [vmem:[%s3826 + $0xc0] sm:$0xf0]
        %v4418 = vld [vmem:[%s3826 + $0xd0] sm:$0xf0]
        %v4419 = vld [vmem:[%s3826 + $0xe0] sm:$0xf0]
        %v4420 = vld [vmem:[%s3826 + $0xf0] sm:$0xf0]
        %v4453 = vrot.slane %v4405, 4
        %v4454 = vrot.slane %v3828, 4
        %v4455 = vsel %vm1253, %v4453, %v4454
        %v4456 = vrot.slane %v4406, 4
        %v4457 = vrot.slane %v3830, 4
        %v4458 = vsel %vm1253, %v4456, %v4457
        %v4459 = vrot.slane %v4407, 4
        %v4460 = vrot.slane %v3832, 4
        %v4461 = vsel %vm1253, %v4459, %v4460
        %v4462 = vrot.slane %v4408, 4
        %v4463 = vrot.slane %v3834, 4
        %v4464 = vsel %vm1253, %v4462, %v4463
        %v4465 = vrot.slane %v4409, 4
        %v4466 = vrot.slane %v3836, 4
        %v4467 = vsel %vm1253, %v4465, %v4466
        %v4468 = vrot.slane %v4410, 4
        %v4469 = vrot.slane %v3838, 4
        %v4470 = vsel %vm1253, %v4468, %v4469
        %v4471 = vrot.slane %v4411, 4
        %v4472 = vrot.slane %v3840, 4
        %v4473 = vsel %vm1253, %v4471, %v4472
        %v4474 = vrot.slane %v4412, 4
        %v4475 = vrot.slane %v3842, 4
        %v4476 = vsel %vm1253, %v4474, %v4475
        %v4477 = vrot.slane %v4413, 4
        %v4478 = vrot.slane %v3844, 4
        %v4479 = vsel %vm1253, %v4477, %v4478
        %v4480 = vrot.slane %v4414, 4
        %v4481 = vrot.slane %v3846, 4
        %v4482 = vsel %vm1253, %v4480, %v4481
        %v4483 = vrot.slane %v4415, 4
        %v4484 = vrot.slane %v3848, 4
        %v4485 = vsel %vm1253, %v4483, %v4484
        %v4486 = vrot.slane %v4416, 4
        %v4487 = vrot.slane %v3850, 4
        %v4488 = vsel %vm1253, %v4486, %v4487
        %v4489 = vrot.slane %v4417, 4
        %v4490 = vrot.slane %v3852, 4
        %v4491 = vsel %vm1253, %v4489, %v4490
        %v4492 = vrot.slane %v4418, 4
        %v4493 = vrot.slane %v3854, 4
        %v4494 = vsel %vm1253, %v4492, %v4493
        %v4495 = vrot.slane %v4419, 4
        %v4496 = vrot.slane %v3856, 4
        %v4497 = vsel %vm1253, %v4495, %v4496
        %v4498 = vrot.slane %v4420, 4
        %v4499 = vrot.slane %v3858, 4
        %v4500 = vsel %vm1253, %v4498, %v4499
        %s4517 = scalar_lea.vmem [#allocation8], 448
        %v4518 = vld [vmem:[%s4517] sm:$0xf]
        %v4519 = vld [vmem:[%s4517 + $0x4] sm:$0xf]
        %v4520 = vld [vmem:[%s4517 + $0x8] sm:$0xf]
        %v4521 = vld [vmem:[%s4517 + $0xc] sm:$0xf]
        %v4522 = vld [vmem:[%s4517 + $0x10] sm:$0xf]
        %v4523 = vld [vmem:[%s4517 + $0x14] sm:$0xf]
        %v4524 = vld [vmem:[%s4517 + $0x18] sm:$0xf]
        %v4525 = vld [vmem:[%s4517 + $0x1c] sm:$0xf]
        %v4526 = vld [vmem:[%s4517 + $0x20] sm:$0xf]
        %v4527 = vld [vmem:[%s4517 + $0x24] sm:$0xf]
        %v4528 = vld [vmem:[%s4517 + $0x28] sm:$0xf]
        %v4529 = vld [vmem:[%s4517 + $0x2c] sm:$0xf]
        %v4530 = vld [vmem:[%s4517 + $0x30] sm:$0xf]
        %v4531 = vld [vmem:[%s4517 + $0x34] sm:$0xf]
        %v4532 = vld [vmem:[%s4517 + $0x38] sm:$0xf]
        %v4533 = vld [vmem:[%s4517 + $0x3c] sm:$0xf]
        %v4550 = vunpack.c.l.b16 %v4518
        %v4551 = vunpack.c.l.b16 %v4519
        %v4552 = vunpack.c.l.b16 %v4520
        %v4553 = vunpack.c.l.b16 %v4521
        %v4554 = vunpack.c.l.b16 %v4522
        %v4555 = vunpack.c.l.b16 %v4523
        %v4556 = vunpack.c.l.b16 %v4524
        %v4557 = vunpack.c.l.b16 %v4525
        %v4558 = vunpack.c.l.b16 %v4526
        %v4559 = vunpack.c.l.b16 %v4527
        %v4560 = vunpack.c.l.b16 %v4528
        %v4561 = vunpack.c.l.b16 %v4529
        %v4562 = vunpack.c.l.b16 %v4530
        %v4563 = vunpack.c.l.b16 %v4531
        %v4564 = vunpack.c.l.b16 %v4532
        %v4565 = vunpack.c.l.b16 %v4533
        %v4566 = vpack.c.b16 %v4551, %v4550
        %v4567 = vpack.c.b16 %v4553, %v4552
        %v4568 = vpack.c.b16 %v4555, %v4554
        %v4569 = vpack.c.b16 %v4557, %v4556
        %v4570 = vpack.c.b16 %v4559, %v4558
        %v4571 = vpack.c.b16 %v4561, %v4560
        %v4572 = vpack.c.b16 %v4563, %v4562
        %v4573 = vpack.c.b16 %v4565, %v4564
        %4582 = vmatprep.subr.bf16.mxu0 0
        %4583 = vmatpush1.bf16.msra.mxu0 %v4566
        %4584 = vmatprep.subr.bf16.mxu0 0
        %4585 = vmatpush1.bf16.msra.mxu0 %v4567
        %4586 = vmatprep.subr.bf16.mxu0 0
        %4587 = vmatpush1.bf16.msra.mxu0 %v4568
        %4588 = vmatprep.subr.bf16.mxu0 0
        %4589 = vmatpush1.bf16.msra.mxu0 %v4569
        %4590 = vmatprep.subr.bf16.mxu0 0
        %4591 = vmatpush1.bf16.msra.mxu0 %v4570
        %4592 = vmatprep.subr.bf16.mxu0 0
        %4593 = vmatpush1.bf16.msra.mxu0 %v4571
        %4594 = vmatprep.subr.bf16.mxu0 0
        %4595 = vmatpush1.bf16.msra.mxu0 %v4572
        %4596 = vmatprep.subr.bf16.mxu0 0
        %4597 = vmatpush1.bf16.msra.mxu0 %v4573
        %4598 = vmatprep.subr.bf16.mxu0 0
        %4599 = vmatpush1.bf16.msra.mxu0 0
        %4600 = vmatprep.subr.bf16.mxu0 0
        %4601 = vmatpush1.bf16.msra.mxu0 0
        %4602 = vmatprep.subr.bf16.mxu0 0
        %4603 = vmatpush1.bf16.msra.mxu0 0
        %4604 = vmatprep.subr.bf16.mxu0 0
        %4605 = vmatpush1.bf16.msra.mxu0 0
        %4606 = vmatprep.subr.bf16.mxu0 0
        %4607 = vmatpush1.bf16.msra.mxu0 0
        %4608 = vmatprep.subr.bf16.mxu0 0
        %4609 = vmatpush1.bf16.msra.mxu0 0
        %4610 = vmatprep.subr.bf16.mxu0 0
        %4611 = vmatpush1.bf16.msra.mxu0 0
        %4612 = vmatprep.subr.bf16.mxu0 0
        %4613 = vmatpush1.bf16.msra.mxu0 0
        %4614 = vmatprep.mubr.bf16.mxu0 0
        %4615 = vmatmul.mubr.bf16.gmra.mrb[0].mxu0 %v4455
        %v4616 = vpop.f32.mrb[0].mxu0
        %v4617 = vadd.f32 0.0, %v4616
        %v4618 = vpop.f32.mrb[0].mxu0
        %v4619 = vpop.f32.mrb[0].mxu0
        %v4620 = vadd.f32 0.0, %v4619
        %v4621 = vpop.f32.mrb[0].mxu0
        %4622 = vmatprep.mubr.bf16.mxu0 0
        %4623 = vmatmul.mubr.bf16.gmra.mrb[0].mxu0 %v4458
        %v4624 = vpop.f32.mrb[0].mxu0
        %v4625 = vadd.f32 0.0, %v4624
        %v4626 = vpop.f32.mrb[0].mxu0
        %v4627 = vpop.f32.mrb[0].mxu0
        %v4628 = vadd.f32 0.0, %v4627
        %v4629 = vpop.f32.mrb[0].mxu0
        %4630 = vmatprep.mubr.bf16.mxu0 0
        %4631 = vmatmul.mubr.bf16.gmra.mrb[0].mxu0 %v4461
        %v4632 = vpop.f32.mrb[0].mxu0
        %v4633 = vadd.f32 0.0, %v4632
        %v4634 = vpop.f32.mrb[0].mxu0
        %v4635 = vpop.f32.mrb[0].mxu0
        %v4636 = vadd.f32 0.0, %v4635
        %v4637 = vpop.f32.mrb[0].mxu0
        %4638 = vmatprep.mubr.bf16.mxu0 0
        %4639 = vmatmul.mubr.bf16.gmra.mrb[0].mxu0 %v4464
        %v4640 = vpop.f32.mrb[0].mxu0
        %v4641 = vadd.f32 0.0, %v4640
        %v4642 = vpop.f32.mrb[0].mxu0
        %v4643 = vpop.f32.mrb[0].mxu0
        %v4644 = vadd.f32 0.0, %v4643
        %v4645 = vpop.f32.mrb[0].mxu0
        %4646 = vmatprep.mubr.bf16.mxu0 0
        %4647 = vmatmul.mubr.bf16.gmra.mrb[0].mxu0 %v4467
        %v4648 = vpop.f32.mrb[0].mxu0
        %v4649 = vadd.f32 0.0, %v4648
        %v4650 = vpop.f32.mrb[0].mxu0
        %v4651 = vpop.f32.mrb[0].mxu0
        %v4652 = vadd.f32 0.0, %v4651
        %v4653 = vpop.f32.mrb[0].mxu0
        %4654 = vmatprep.mubr.bf16.mxu0 0
        %4655 = vmatmul.mubr.bf16.gmra.mrb[0].mxu0 %v4470
        %v4656 = vpop.f32.mrb[0].mxu0
        %v4657 = vadd.f32 0.0, %v4656
        %v4658 = vpop.f32.mrb[0].mxu0
        %v4659 = vpop.f32.mrb[0].mxu0
        %v4660 = vadd.f32 0.0, %v4659
        %v4661 = vpop.f32.mrb[0].mxu0
        %4662 = vmatprep.mubr.bf16.mxu0 0
        %4663 = vmatmul.mubr.bf16.gmra.mrb[0].mxu0 %v4473
        %v4664 = vpop.f32.mrb[0].mxu0
        %v4665 = vadd.f32 0.0, %v4664
        %v4666 = vpop.f32.mrb[0].mxu0
        %v4667 = vpop.f32.mrb[0].mxu0
        %v4668 = vadd.f32 0.0, %v4667
        %v4669 = vpop.f32.mrb[0].mxu0
        %4670 = vmatprep.mubr.bf16.mxu0 0
        %4671 = vmatmul.mubr.bf16.gmra.mrb[0].mxu0 %v4476
        %v4672 = vpop.f32.mrb[0].mxu0
        %v4673 = vadd.f32 0.0, %v4672
        %v4674 = vpop.f32.mrb[0].mxu0
        %v4675 = vpop.f32.mrb[0].mxu0
        %v4676 = vadd.f32 0.0, %v4675
        %v4677 = vpop.f32.mrb[0].mxu0
        %4678 = vmatprep.mubr.bf16.mxu0 0
        %4679 = vmatmul.mubr.bf16.gmra.mrb[0].mxu0 %v4479
        %v4680 = vpop.f32.mrb[0].mxu0
        %v4681 = vadd.f32 0.0, %v4680
        %v4682 = vpop.f32.mrb[0].mxu0
        %v4683 = vpop.f32.mrb[0].mxu0
        %v4684 = vadd.f32 0.0, %v4683
        %v4685 = vpop.f32.mrb[0].mxu0
        %4686 = vmatprep.mubr.bf16.mxu0 0
        %4687 = vmatmul.mubr.bf16.gmra.mrb[0].mxu0 %v4482
        %v4688 = vpop.f32.mrb[0].mxu0
        %v4689 = vadd.f32 0.0, %v4688
        %v4690 = vpop.f32.mrb[0].mxu0
        %v4691 = vpop.f32.mrb[0].mxu0
        %v4692 = vadd.f32 0.0, %v4691
        %v4693 = vpop.f32.mrb[0].mxu0
        %4694 = vmatprep.mubr.bf16.mxu0 0
        %4695 = vmatmul.mubr.bf16.gmra.mrb[0].mxu0 %v4485
        %v4696 = vpop.f32.mrb[0].mxu0
        %v4697 = vadd.f32 0.0, %v4696
        %v4698 = vpop.f32.mrb[0].mxu0
        %v4699 = vpop.f32.mrb[0].mxu0
        %v4700 = vadd.f32 0.0, %v4699
        %v4701 = vpop.f32.mrb[0].mxu0
        %4702 = vmatprep.mubr.bf16.mxu0 0
        %4703 = vmatmul.mubr.bf16.gmra.mrb[0].mxu0 %v4488
        %v4704 = vpop.f32.mrb[0].mxu0
        %v4705 = vadd.f32 0.0, %v4704
        %v4706 = vpop.f32.mrb[0].mxu0
        %v4707 = vpop.f32.mrb[0].mxu0
        %v4708 = vadd.f32 0.0, %v4707
        %v4709 = vpop.f32.mrb[0].mxu0
        %4710 = vmatprep.mubr.bf16.mxu0 0
        %4711 = vmatmul.mubr.bf16.gmra.mrb[0].mxu0 %v4491
        %v4712 = vpop.f32.mrb[0].mxu0
        %v4713 = vadd.f32 0.0, %v4712
        %v4714 = vpop.f32.mrb[0].mxu0
        %v4715 = vpop.f32.mrb[0].mxu0
        %v4716 = vadd.f32 0.0, %v4715
        %v4717 = vpop.f32.mrb[0].mxu0
        %4718 = vmatprep.mubr.bf16.mxu0 0
        %4719 = vmatmul.mubr.bf16.gmra.mrb[0].mxu0 %v4494
        %v4720 = vpop.f32.mrb[0].mxu0
        %v4721 = vadd.f32 0.0, %v4720
        %v4722 = vpop.f32.mrb[0].mxu0
        %v4723 = vpop.f32.mrb[0].mxu0
        %v4724 = vadd.f32 0.0, %v4723
        %v4725 = vpop.f32.mrb[0].mxu0
        %4726 = vmatprep.mubr.bf16.mxu0 0
        %4727 = vmatmul.mubr.bf16.gmra.mrb[0].mxu0 %v4497
        %v4728 = vpop.f32.mrb[0].mxu0
        %v4729 = vadd.f32 0.0, %v4728
        %v4730 = vpop.f32.mrb[0].mxu0
        %v4731 = vpop.f32.mrb[0].mxu0
        %v4732 = vadd.f32 0.0, %v4731
        %v4733 = vpop.f32.mrb[0].mxu0
        %4734 = vmatprep.mubr.bf16.mxu0 0
        %4735 = vmatmul.mubr.bf16.gmra.mrb[0].mxu0 %v4500
        %v4736 = vpop.f32.mrb[0].mxu0
        %v4737 = vadd.f32 0.0, %v4736
        %v4738 = vpop.f32.mrb[0].mxu0
        %v4739 = vpop.f32.mrb[0].mxu0
        %v4740 = vadd.f32 0.0, %v4739
        %v4741 = vpop.f32.mrb[0].mxu0
        %4742 = vdwg.mxu0
        %v4743 = vadd.f32 %v4373, %v4617
        %v4744 = vadd.f32 %v4374, %v4620
        %v4745 = vadd.f32 %v4375, %v4625
        %v4746 = vadd.f32 %v4376, %v4628
        %v4747 = vadd.f32 %v4377, %v4633
        %v4748 = vadd.f32 %v4378, %v4636
        %v4749 = vadd.f32 %v4379, %v4641
        %v4750 = vadd.f32 %v4380, %v4644
        %v4751 = vadd.f32 %v4381, %v4649
        %v4752 = vadd.f32 %v4382, %v4652
        %v4753 = vadd.f32 %v4383, %v4657
        %v4754 = vadd.f32 %v4384, %v4660
        %v4755 = vadd.f32 %v4385, %v4665
        %v4756 = vadd.f32 %v4386, %v4668
        %v4757 = vadd.f32 %v4387, %v4673
        %v4758 = vadd.f32 %v4388, %v4676
        %v4759 = vadd.f32 %v4389, %v4681
        %v4760 = vadd.f32 %v4390, %v4684
        %v4761 = vadd.f32 %v4391, %v4689
        %v4762 = vadd.f32 %v4392, %v4692
        %v4763 = vadd.f32 %v4393, %v4697
        %v4764 = vadd.f32 %v4394, %v4700
        %v4765 = vadd.f32 %v4395, %v4705
        %v4766 = vadd.f32 %v4396, %v4708
        %v4767 = vadd.f32 %v4397, %v4713
        %v4768 = vadd.f32 %v4398, %v4716
        %v4769 = vadd.f32 %v4399, %v4721
        %v4770 = vadd.f32 %v4400, %v4724
        %v4771 = vadd.f32 %v4401, %v4729
        %v4772 = vadd.f32 %v4402, %v4732
        %v4773 = vadd.f32 %v4403, %v4737
        %v4774 = vadd.f32 %v4404, %v4740
        %v4775 = vld [vmem:[%s3826 + $0x8] sm:$0x1f]
        %v4776 = vld [vmem:[%s3826 + $0x18] sm:$0x1f]
        %v4777 = vld [vmem:[%s3826 + $0x28] sm:$0x1f]
        %v4778 = vld [vmem:[%s3826 + $0x38] sm:$0x1f]
        %v4779 = vld [vmem:[%s3826 + $0x48] sm:$0x1f]
        %v4780 = vld [vmem:[%s3826 + $0x58] sm:$0x1f]
        %v4781 = vld [vmem:[%s3826 + $0x68] sm:$0x1f]
        %v4782 = vld [vmem:[%s3826 + $0x78] sm:$0x1f]
        %v4783 = vld [vmem:[%s3826 + $0x88] sm:$0x1f]
        %v4784 = vld [vmem:[%s3826 + $0x98] sm:$0x1f]
        %v4785 = vld [vmem:[%s3826 + $0xa8] sm:$0x1f]
        %v4786 = vld [vmem:[%s3826 + $0xb8] sm:$0x1f]
        %v4787 = vld [vmem:[%s3826 + $0xc8] sm:$0x1f]
        %v4788 = vld [vmem:[%s3826 + $0xd8] sm:$0x1f]
        %v4789 = vld [vmem:[%s3826 + $0xe8] sm:$0x1f]
        %v4790 = vld [vmem:[%s3826 + $0xf8] sm:$0x1f]
        %v4792 = vshrl.u32 %v4405, 16
        %v4794 = vrot.slane %v4792, 4
        %v4795 = vshll.u32 %v4405, 16
        %v4797 = vrot.slane %v4795, 5
        %v4798 = vor.u32 %v4794, %v4797
        %v4800 = vshrl.u32 %v4775, 16
        %v4802 = vrot.slane %v4800, 4
        %v4803 = vshll.u32 %v4775, 16
        %v4805 = vrot.slane %v4803, 5
        %v4806 = vor.u32 %v4802, %v4805
        %v4807 = vsel %vm1769, %v4798, %v4806
        %v4809 = vshrl.u32 %v4406, 16
        %v4811 = vrot.slane %v4809, 4
        %v4812 = vshll.u32 %v4406, 16
        %v4814 = vrot.slane %v4812, 5
        %v4815 = vor.u32 %v4811, %v4814
        %v4817 = vshrl.u32 %v4776, 16
        %v4819 = vrot.slane %v4817, 4
        %v4820 = vshll.u32 %v4776, 16
        %v4822 = vrot.slane %v4820, 5
        %v4823 = vor.u32 %v4819, %v4822
        %v4824 = vsel %vm1769, %v4815, %v4823
        %v4826 = vshrl.u32 %v4407, 16
        %v4828 = vrot.slane %v4826, 4
        %v4829 = vshll.u32 %v4407, 16
        %v4831 = vrot.slane %v4829, 5
        %v4832 = vor.u32 %v4828, %v4831
        %v4834 = vshrl.u32 %v4777, 16
        %v4836 = vrot.slane %v4834, 4
        %v4837 = vshll.u32 %v4777, 16
        %v4839 = vrot.slane %v4837, 5
        %v4840 = vor.u32 %v4836, %v4839
        %v4841 = vsel %vm1769, %v4832, %v4840
        %v4843 = vshrl.u32 %v4408, 16
        %v4845 = vrot.slane %v4843, 4
        %v4846 = vshll.u32 %v4408, 16
        %v4848 = vrot.slane %v4846, 5
        %v4849 = vor.u32 %v4845, %v4848
        %v4851 = vshrl.u32 %v4778, 16
        %v4853 = vrot.slane %v4851, 4
        %v4854 = vshll.u32 %v4778, 16
        %v4856 = vrot.slane %v4854, 5
        %v4857 = vor.u32 %v4853, %v4856
        %v4858 = vsel %vm1769, %v4849, %v4857
        %v4860 = vshrl.u32 %v4409, 16
        %v4862 = vrot.slane %v4860, 4
        %v4863 = vshll.u32 %v4409, 16
        %v4865 = vrot.slane %v4863, 5
        %v4866 = vor.u32 %v4862, %v4865
        %v4868 = vshrl.u32 %v4779, 16
        %v4870 = vrot.slane %v4868, 4
        %v4871 = vshll.u32 %v4779, 16
        %v4873 = vrot.slane %v4871, 5
        %v4874 = vor.u32 %v4870, %v4873
        %v4875 = vsel %vm1769, %v4866, %v4874
        %v4877 = vshrl.u32 %v4410, 16
        %v4879 = vrot.slane %v4877, 4
        %v4880 = vshll.u32 %v4410, 16
        %v4882 = vrot.slane %v4880, 5
        %v4883 = vor.u32 %v4879, %v4882
        %v4885 = vshrl.u32 %v4780, 16
        %v4887 = vrot.slane %v4885, 4
        %v4888 = vshll.u32 %v4780, 16
        %v4890 = vrot.slane %v4888, 5
        %v4891 = vor.u32 %v4887, %v4890
        %v4892 = vsel %vm1769, %v4883, %v4891
        %v4894 = vshrl.u32 %v4411, 16
        %v4896 = vrot.slane %v4894, 4
        %v4897 = vshll.u32 %v4411, 16
        %v4899 = vrot.slane %v4897, 5
        %v4900 = vor.u32 %v4896, %v4899
        %v4902 = vshrl.u32 %v4781, 16
        %v4904 = vrot.slane %v4902, 4
        %v4905 = vshll.u32 %v4781, 16
        %v4907 = vrot.slane %v4905, 5
        %v4908 = vor.u32 %v4904, %v4907
        %v4909 = vsel %vm1769, %v4900, %v4908
        %v4911 = vshrl.u32 %v4412, 16
        %v4913 = vrot.slane %v4911, 4
        %v4914 = vshll.u32 %v4412, 16
        %v4916 = vrot.slane %v4914, 5
        %v4917 = vor.u32 %v4913, %v4916
        %v4919 = vshrl.u32 %v4782, 16
        %v4921 = vrot.slane %v4919, 4
        %v4922 = vshll.u32 %v4782, 16
        %v4924 = vrot.slane %v4922, 5
        %v4925 = vor.u32 %v4921, %v4924
        %v4926 = vsel %vm1769, %v4917, %v4925
        %v4928 = vshrl.u32 %v4413, 16
        %v4930 = vrot.slane %v4928, 4
        %v4931 = vshll.u32 %v4413, 16
        %v4933 = vrot.slane %v4931, 5
        %v4934 = vor.u32 %v4930, %v4933
        %v4936 = vshrl.u32 %v4783, 16
        %v4938 = vrot.slane %v4936, 4
        %v4939 = vshll.u32 %v4783, 16
        %v4941 = vrot.slane %v4939, 5
        %v4942 = vor.u32 %v4938, %v4941
        %v4943 = vsel %vm1769, %v4934, %v4942
        %v4945 = vshrl.u32 %v4414, 16
        %v4947 = vrot.slane %v4945, 4
        %v4948 = vshll.u32 %v4414, 16
        %v4950 = vrot.slane %v4948, 5
        %v4951 = vor.u32 %v4947, %v4950
        %v4953 = vshrl.u32 %v4784, 16
        %v4955 = vrot.slane %v4953, 4
        %v4956 = vshll.u32 %v4784, 16
        %v4958 = vrot.slane %v4956, 5
        %v4959 = vor.u32 %v4955, %v4958
        %v4960 = vsel %vm1769, %v4951, %v4959
        %v4962 = vshrl.u32 %v4415, 16
        %v4964 = vrot.slane %v4962, 4
        %v4965 = vshll.u32 %v4415, 16
        %v4967 = vrot.slane %v4965, 5
        %v4968 = vor.u32 %v4964, %v4967
        %v4970 = vshrl.u32 %v4785, 16
        %v4972 = vrot.slane %v4970, 4
        %v4973 = vshll.u32 %v4785, 16
        %v4975 = vrot.slane %v4973, 5
        %v4976 = vor.u32 %v4972, %v4975
        %v4977 = vsel %vm1769, %v4968, %v4976
        %v4979 = vshrl.u32 %v4416, 16
        %v4981 = vrot.slane %v4979, 4
        %v4982 = vshll.u32 %v4416, 16
        %v4984 = vrot.slane %v4982, 5
        %v4985 = vor.u32 %v4981, %v4984
        %v4987 = vshrl.u32 %v4786, 16
        %v4989 = vrot.slane %v4987, 4
        %v4990 = vshll.u32 %v4786, 16
        %v4992 = vrot.slane %v4990, 5
        %v4993 = vor.u32 %v4989, %v4992
        %v4994 = vsel %vm1769, %v4985, %v4993
        %v4996 = vshrl.u32 %v4417, 16
        %v4998 = vrot.slane %v4996, 4
        %v4999 = vshll.u32 %v4417, 16
        %v5001 = vrot.slane %v4999, 5
        %v5002 = vor.u32 %v4998, %v5001
        %v5004 = vshrl.u32 %v4787, 16
        %v5006 = vrot.slane %v5004, 4
        %v5007 = vshll.u32 %v4787, 16
        %v5009 = vrot.slane %v5007, 5
        %v5010 = vor.u32 %v5006, %v5009
        %v5011 = vsel %vm1769, %v5002, %v5010
        %v5013 = vshrl.u32 %v4418, 16
        %v5015 = vrot.slane %v5013, 4
        %v5016 = vshll.u32 %v4418, 16
        %v5018 = vrot.slane %v5016, 5
        %v5019 = vor.u32 %v5015, %v5018
        %v5021 = vshrl.u32 %v4788, 16
        %v5023 = vrot.slane %v5021, 4
        %v5024 = vshll.u32 %v4788, 16
        %v5026 = vrot.slane %v5024, 5
        %v5027 = vor.u32 %v5023, %v5026
        %v5028 = vsel %vm1769, %v5019, %v5027
        %v5030 = vshrl.u32 %v4419, 16
        %v5032 = vrot.slane %v5030, 4
        %v5033 = vshll.u32 %v4419, 16
        %v5035 = vrot.slane %v5033, 5
        %v5036 = vor.u32 %v5032, %v5035
        %v5038 = vshrl.u32 %v4789, 16
        %v5040 = vrot.slane %v5038, 4
        %v5041 = vshll.u32 %v4789, 16
        %v5043 = vrot.slane %v5041, 5
        %v5044 = vor.u32 %v5040, %v5043
        %v5045 = vsel %vm1769, %v5036, %v5044
        %v5047 = vshrl.u32 %v4420, 16
        %v5049 = vrot.slane %v5047, 4
        %v5050 = vshll.u32 %v4420, 16
        %v5052 = vrot.slane %v5050, 5
        %v5053 = vor.u32 %v5049, %v5052
        %v5055 = vshrl.u32 %v4790, 16
        %v5057 = vrot.slane %v5055, 4
        %v5058 = vshll.u32 %v4790, 16
        %v5060 = vrot.slane %v5058, 5
        %v5061 = vor.u32 %v5057, %v5060
        %v5062 = vsel %vm1769, %v5053, %v5061
        %s5079 = scalar_lea.vmem [#allocation8], 512
        %v5080 = vld [vmem:[%s5079] sm:$0xf]
        %v5081 = vld [vmem:[%s5079 + $0x4] sm:$0xf]
        %v5082 = vld [vmem:[%s5079 + $0x8] sm:$0xf]
        %v5083 = vld [vmem:[%s5079 + $0xc] sm:$0xf]
        %v5084 = vld [vmem:[%s5079 + $0x10] sm:$0xf]
        %v5085 = vld [vmem:[%s5079 + $0x14] sm:$0xf]
        %v5086 = vld [vmem:[%s5079 + $0x18] sm:$0xf]
        %v5087 = vld [vmem:[%s5079 + $0x1c] sm:$0xf]
        %v5088 = vld [vmem:[%s5079 + $0x20] sm:$0xf]
        %v5089 = vld [vmem:[%s5079 + $0x24] sm:$0xf]
        %v5090 = vld [vmem:[%s5079 + $0x28] sm:$0xf]
        %v5091 = vld [vmem:[%s5079 + $0x2c] sm:$0xf]
        %v5092 = vld [vmem:[%s5079 + $0x30] sm:$0xf]
        %v5093 = vld [vmem:[%s5079 + $0x34] sm:$0xf]
        %v5094 = vld [vmem:[%s5079 + $0x38] sm:$0xf]
        %v5095 = vld [vmem:[%s5079 + $0x3c] sm:$0xf]
        %v5112 = vunpack.c.l.b16 %v5080
        %v5113 = vunpack.c.l.b16 %v5081
        %v5114 = vunpack.c.l.b16 %v5082
        %v5115 = vunpack.c.l.b16 %v5083
        %v5116 = vunpack.c.l.b16 %v5084
        %v5117 = vunpack.c.l.b16 %v5085
        %v5118 = vunpack.c.l.b16 %v5086
        %v5119 = vunpack.c.l.b16 %v5087
        %v5120 = vunpack.c.l.b16 %v5088
        %v5121 = vunpack.c.l.b16 %v5089
        %v5122 = vunpack.c.l.b16 %v5090
        %v5123 = vunpack.c.l.b16 %v5091
        %v5124 = vunpack.c.l.b16 %v5092
        %v5125 = vunpack.c.l.b16 %v5093
        %v5126 = vunpack.c.l.b16 %v5094
        %v5127 = vunpack.c.l.b16 %v5095
        %v5128 = vpack.c.b16 %v5113, %v5112
        %v5129 = vpack.c.b16 %v5115, %v5114
        %v5130 = vpack.c.b16 %v5117, %v5116
        %v5131 = vpack.c.b16 %v5119, %v5118
        %v5132 = vpack.c.b16 %v5121, %v5120
        %v5133 = vpack.c.b16 %v5123, %v5122
        %v5134 = vpack.c.b16 %v5125, %v5124
        %v5135 = vpack.c.b16 %v5127, %v5126
        %5144 = vmatprep.subr.bf16.mxu0 0
        %5145 = vmatpush1.bf16.msra.mxu0 %v5128
        %5146 = vmatprep.subr.bf16.mxu0 0
        %5147 = vmatpush1.bf16.msra.mxu0 %v5129
        %5148 = vmatprep.subr.bf16.mxu0 0
        %5149 = vmatpush1.bf16.msra.mxu0 %v5130
        %5150 = vmatprep.subr.bf16.mxu0 0
        %5151 = vmatpush1.bf16.msra.mxu0 %v5131
        %5152 = vmatprep.subr.bf16.mxu0 0
        %5153 = vmatpush1.bf16.msra.mxu0 %v5132
        %5154 = vmatprep.subr.bf16.mxu0 0
        %5155 = vmatpush1.bf16.msra.mxu0 %v5133
        %5156 = vmatprep.subr.bf16.mxu0 0
        %5157 = vmatpush1.bf16.msra.mxu0 %v5134
        %5158 = vmatprep.subr.bf16.mxu0 0
        %5159 = vmatpush1.bf16.msra.mxu0 %v5135
        %5160 = vmatprep.subr.bf16.mxu0 0
        %5161 = vmatpush1.bf16.msra.mxu0 0
        %5162 = vmatprep.subr.bf16.mxu0 0
        %5163 = vmatpush1.bf16.msra.mxu0 0
        %5164 = vmatprep.subr.bf16.mxu0 0
        %5165 = vmatpush1.bf16.msra.mxu0 0
        %5166 = vmatprep.subr.bf16.mxu0 0
        %5167 = vmatpush1.bf16.msra.mxu0 0
        %5168 = vmatprep.subr.bf16.mxu0 0
        %5169 = vmatpush1.bf16.msra.mxu0 0
        %5170 = vmatprep.subr.bf16.mxu0 0
        %5171 = vmatpush1.bf16.msra.mxu0 0
        %5172 = vmatprep.subr.bf16.mxu0 0
        %5173 = vmatpush1.bf16.msra.mxu0 0
        %5174 = vmatprep.subr.bf16.mxu0 0
        %5175 = vmatpush1.bf16.msra.mxu0 0
        %5176 = vmatprep.mubr.bf16.mxu0 0
        %5177 = vmatmul.mubr.bf16.gmra.mrb[0].mxu0 %v4807
        %v5178 = vpop.f32.mrb[0].mxu0
        %v5179 = vadd.f32 0.0, %v5178
        %v5180 = vpop.f32.mrb[0].mxu0
        %v5181 = vpop.f32.mrb[0].mxu0
        %v5182 = vadd.f32 0.0, %v5181
        %v5183 = vpop.f32.mrb[0].mxu0
        %5184 = vmatprep.mubr.bf16.mxu0 0
        %5185 = vmatmul.mubr.bf16.gmra.mrb[0].mxu0 %v4824
        %v5186 = vpop.f32.mrb[0].mxu0
        %v5187 = vadd.f32 0.0, %v5186
        %v5188 = vpop.f32.mrb[0].mxu0
        %v5189 = vpop.f32.mrb[0].mxu0
        %v5190 = vadd.f32 0.0, %v5189
        %v5191 = vpop.f32.mrb[0].mxu0
        %5192 = vmatprep.mubr.bf16.mxu0 0
        %5193 = vmatmul.mubr.bf16.gmra.mrb[0].mxu0 %v4841
        %v5194 = vpop.f32.mrb[0].mxu0
        %v5195 = vadd.f32 0.0, %v5194
        %v5196 = vpop.f32.mrb[0].mxu0
        %v5197 = vpop.f32.mrb[0].mxu0
        %v5198 = vadd.f32 0.0, %v5197
        %v5199 = vpop.f32.mrb[0].mxu0
        %5200 = vmatprep.mubr.bf16.mxu0 0
        %5201 = vmatmul.mubr.bf16.gmra.mrb[0].mxu0 %v4858
        %v5202 = vpop.f32.mrb[0].mxu0
        %v5203 = vadd.f32 0.0, %v5202
        %v5204 = vpop.f32.mrb[0].mxu0
        %v5205 = vpop.f32.mrb[0].mxu0
        %v5206 = vadd.f32 0.0, %v5205
        %v5207 = vpop.f32.mrb[0].mxu0
        %5208 = vmatprep.mubr.bf16.mxu0 0
        %5209 = vmatmul.mubr.bf16.gmra.mrb[0].mxu0 %v4875
        %v5210 = vpop.f32.mrb[0].mxu0
        %v5211 = vadd.f32 0.0, %v5210
        %v5212 = vpop.f32.mrb[0].mxu0
        %v5213 = vpop.f32.mrb[0].mxu0
        %v5214 = vadd.f32 0.0, %v5213
        %v5215 = vpop.f32.mrb[0].mxu0
        %5216 = vmatprep.mubr.bf16.mxu0 0
        %5217 = vmatmul.mubr.bf16.gmra.mrb[0].mxu0 %v4892
        %v5218 = vpop.f32.mrb[0].mxu0
        %v5219 = vadd.f32 0.0, %v5218
        %v5220 = vpop.f32.mrb[0].mxu0
        %v5221 = vpop.f32.mrb[0].mxu0
        %v5222 = vadd.f32 0.0, %v5221
        %v5223 = vpop.f32.mrb[0].mxu0
        %5224 = vmatprep.mubr.bf16.mxu0 0
        %5225 = vmatmul.mubr.bf16.gmra.mrb[0].mxu0 %v4909
        %v5226 = vpop.f32.mrb[0].mxu0
        %v5227 = vadd.f32 0.0, %v5226
        %v5228 = vpop.f32.mrb[0].mxu0
        %v5229 = vpop.f32.mrb[0].mxu0
        %v5230 = vadd.f32 0.0, %v5229
        %v5231 = vpop.f32.mrb[0].mxu0
        %5232 = vmatprep.mubr.bf16.mxu0 0
        %5233 = vmatmul.mubr.bf16.gmra.mrb[0].mxu0 %v4926
        %v5234 = vpop.f32.mrb[0].mxu0
        %v5235 = vadd.f32 0.0, %v5234
        %v5236 = vpop.f32.mrb[0].mxu0
        %v5237 = vpop.f32.mrb[0].mxu0
        %v5238 = vadd.f32 0.0, %v5237
        %v5239 = vpop.f32.mrb[0].mxu0
        %5240 = vmatprep.mubr.bf16.mxu0 0
        %5241 = vmatmul.mubr.bf16.gmra.mrb[0].mxu0 %v4943
        %v5242 = vpop.f32.mrb[0].mxu0
        %v5243 = vadd.f32 0.0, %v5242
        %v5244 = vpop.f32.mrb[0].mxu0
        %v5245 = vpop.f32.mrb[0].mxu0
        %v5246 = vadd.f32 0.0, %v5245
        %v5247 = vpop.f32.mrb[0].mxu0
        %5248 = vmatprep.mubr.bf16.mxu0 0
        %5249 = vmatmul.mubr.bf16.gmra.mrb[0].mxu0 %v4960
        %v5250 = vpop.f32.mrb[0].mxu0
        %v5251 = vadd.f32 0.0, %v5250
        %v5252 = vpop.f32.mrb[0].mxu0
        %v5253 = vpop.f32.mrb[0].mxu0
        %v5254 = vadd.f32 0.0, %v5253
        %v5255 = vpop.f32.mrb[0].mxu0
        %5256 = vmatprep.mubr.bf16.mxu0 0
        %5257 = vmatmul.mubr.bf16.gmra.mrb[0].mxu0 %v4977
        %v5258 = vpop.f32.mrb[0].mxu0
        %v5259 = vadd.f32 0.0, %v5258
        %v5260 = vpop.f32.mrb[0].mxu0
        %v5261 = vpop.f32.mrb[0].mxu0
        %v5262 = vadd.f32 0.0, %v5261
        %v5263 = vpop.f32.mrb[0].mxu0
        %5264 = vmatprep.mubr.bf16.mxu0 0
        %5265 = vmatmul.mubr.bf16.gmra.mrb[0].mxu0 %v4994
        %v5266 = vpop.f32.mrb[0].mxu0
        %v5267 = vadd.f32 0.0, %v5266
        %v5268 = vpop.f32.mrb[0].mxu0
        %v5269 = vpop.f32.mrb[0].mxu0
        %v5270 = vadd.f32 0.0, %v5269
        %v5271 = vpop.f32.mrb[0].mxu0
        %5272 = vmatprep.mubr.bf16.mxu0 0
        %5273 = vmatmul.mubr.bf16.gmra.mrb[0].mxu0 %v5011
        %v5274 = vpop.f32.mrb[0].mxu0
        %v5275 = vadd.f32 0.0, %v5274
        %v5276 = vpop.f32.mrb[0].mxu0
        %v5277 = vpop.f32.mrb[0].mxu0
        %v5278 = vadd.f32 0.0, %v5277
        %v5279 = vpop.f32.mrb[0].mxu0
        %5280 = vmatprep.mubr.bf16.mxu0 0
        %5281 = vmatmul.mubr.bf16.gmra.mrb[0].mxu0 %v5028
        %v5282 = vpop.f32.mrb[0].mxu0
        %v5283 = vadd.f32 0.0, %v5282
        %v5284 = vpop.f32.mrb[0].mxu0
        %v5285 = vpop.f32.mrb[0].mxu0
        %v5286 = vadd.f32 0.0, %v5285
        %v5287 = vpop.f32.mrb[0].mxu0
        %5288 = vmatprep.mubr.bf16.mxu0 0
        %5289 = vmatmul.mubr.bf16.gmra.mrb[0].mxu0 %v5045
        %v5290 = vpop.f32.mrb[0].mxu0
        %v5291 = vadd.f32 0.0, %v5290
        %v5292 = vpop.f32.mrb[0].mxu0
        %v5293 = vpop.f32.mrb[0].mxu0
        %v5294 = vadd.f32 0.0, %v5293
        %v5295 = vpop.f32.mrb[0].mxu0
        %5296 = vmatprep.mubr.bf16.mxu0 0
        %5297 = vmatmul.mubr.bf16.gmra.mrb[0].mxu0 %v5062
        %v5298 = vpop.f32.mrb[0].mxu0
        %v5299 = vadd.f32 0.0, %v5298
        %v5300 = vpop.f32.mrb[0].mxu0
        %v5301 = vpop.f32.mrb[0].mxu0
        %v5302 = vadd.f32 0.0, %v5301
        %v5303 = vpop.f32.mrb[0].mxu0
        %5304 = vdwg.mxu0
        %v5305 = vadd.f32 %v4743, %v5179
        %v5306 = vadd.f32 %v4744, %v5182
        %v5307 = vadd.f32 %v4745, %v5187
        %v5308 = vadd.f32 %v4746, %v5190
        %v5309 = vadd.f32 %v4747, %v5195
        %v5310 = vadd.f32 %v4748, %v5198
        %v5311 = vadd.f32 %v4749, %v5203
        %v5312 = vadd.f32 %v4750, %v5206
        %v5313 = vadd.f32 %v4751, %v5211
        %v5314 = vadd.f32 %v4752, %v5214
        %v5315 = vadd.f32 %v4753, %v5219
        %v5316 = vadd.f32 %v4754, %v5222
        %v5317 = vadd.f32 %v4755, %v5227
        %v5318 = vadd.f32 %v4756, %v5230
        %v5319 = vadd.f32 %v4757, %v5235
        %v5320 = vadd.f32 %v4758, %v5238
        %v5321 = vadd.f32 %v4759, %v5243
        %v5322 = vadd.f32 %v4760, %v5246
        %v5323 = vadd.f32 %v4761, %v5251
        %v5324 = vadd.f32 %v4762, %v5254
        %v5325 = vadd.f32 %v4763, %v5259
        %v5326 = vadd.f32 %v4764, %v5262
        %v5327 = vadd.f32 %v4765, %v5267
        %v5328 = vadd.f32 %v4766, %v5270
        %v5329 = vadd.f32 %v4767, %v5275
        %v5330 = vadd.f32 %v4768, %v5278
        %v5331 = vadd.f32 %v4769, %v5283
        %v5332 = vadd.f32 %v4770, %v5286
        %v5333 = vadd.f32 %v4771, %v5291
        %v5334 = vadd.f32 %v4772, %v5294
        %v5335 = vadd.f32 %v4773, %v5299
        %v5336 = vadd.f32 %v4774, %v5302
        %v5337 = vld [vmem:[%s4] sm:$0x1]
        %v5339 = vlaneseq
        %v5340 = vshrl.u32 %v5339, 7
        %v5341 = vsub.s32 0, %v5340
        %v5342 = vrot.slane %v5337, %v5341
        %v5344 = vadd.f32 %v5305, %v5342
        %v5345 = vadd.f32 %v5306, %v5342
        %v5346 = vadd.f32 %v5307, %v5342
        %v5347 = vadd.f32 %v5308, %v5342
        %v5348 = vadd.f32 %v5309, %v5342
        %v5349 = vadd.f32 %v5310, %v5342
        %v5350 = vadd.f32 %v5311, %v5342
        %v5351 = vadd.f32 %v5312, %v5342
        %v5352 = vadd.f32 %v5313, %v5342
        %v5353 = vadd.f32 %v5314, %v5342
        %v5354 = vadd.f32 %v5315, %v5342
        %v5355 = vadd.f32 %v5316, %v5342
        %v5356 = vadd.f32 %v5317, %v5342
        %v5357 = vadd.f32 %v5318, %v5342
        %v5358 = vadd.f32 %v5319, %v5342
        %v5359 = vadd.f32 %v5320, %v5342
        %v5360 = vadd.f32 %v5321, %v5342
        %v5361 = vadd.f32 %v5322, %v5342
        %v5362 = vadd.f32 %v5323, %v5342
        %v5363 = vadd.f32 %v5324, %v5342
        %v5364 = vadd.f32 %v5325, %v5342
        %v5365 = vadd.f32 %v5326, %v5342
        %v5366 = vadd.f32 %v5327, %v5342
        %v5367 = vadd.f32 %v5328, %v5342
        %v5368 = vadd.f32 %v5329, %v5342
        %v5369 = vadd.f32 %v5330, %v5342
        %v5370 = vadd.f32 %v5331, %v5342
        %v5371 = vadd.f32 %v5332, %v5342
        %v5372 = vadd.f32 %v5333, %v5342
        %v5373 = vadd.f32 %v5334, %v5342
        %v5374 = vadd.f32 %v5335, %v5342
        %v5375 = vadd.f32 %v5336, %v5342
        %v5376 = vmax.f32 %v5344, 0.0
        %v5377 = vmax.f32 %v5345, 0.0
        %v5378 = vmax.f32 %v5346, 0.0
        %v5379 = vmax.f32 %v5347, 0.0
        %v5380 = vmax.f32 %v5348, 0.0
        %v5381 = vmax.f32 %v5349, 0.0
        %v5382 = vmax.f32 %v5350, 0.0
        %v5383 = vmax.f32 %v5351, 0.0
        %v5384 = vmax.f32 %v5352, 0.0
        %v5385 = vmax.f32 %v5353, 0.0
        %v5386 = vmax.f32 %v5354, 0.0
        %v5387 = vmax.f32 %v5355, 0.0
        %v5388 = vmax.f32 %v5356, 0.0
        %v5389 = vmax.f32 %v5357, 0.0
        %v5390 = vmax.f32 %v5358, 0.0
        %v5391 = vmax.f32 %v5359, 0.0
        %v5392 = vmax.f32 %v5360, 0.0
        %v5393 = vmax.f32 %v5361, 0.0
        %v5394 = vmax.f32 %v5362, 0.0
        %v5395 = vmax.f32 %v5363, 0.0
        %v5396 = vmax.f32 %v5364, 0.0
        %v5397 = vmax.f32 %v5365, 0.0
        %v5398 = vmax.f32 %v5366, 0.0
        %v5399 = vmax.f32 %v5367, 0.0
        %v5400 = vmax.f32 %v5368, 0.0
        %v5401 = vmax.f32 %v5369, 0.0
        %v5402 = vmax.f32 %v5370, 0.0
        %v5403 = vmax.f32 %v5371, 0.0
        %v5404 = vmax.f32 %v5372, 0.0
        %v5405 = vmax.f32 %v5373, 0.0
        %v5406 = vmax.f32 %v5374, 0.0
        %v5407 = vmax.f32 %v5375, 0.0
        %v5408 = vpack.c.bf16 %v5377, %v5376
        %v5409 = vpack.c.bf16 %v5379, %v5378
        %v5410 = vpack.c.bf16 %v5381, %v5380
        %v5411 = vpack.c.bf16 %v5383, %v5382
        %v5412 = vpack.c.bf16 %v5385, %v5384
        %v5413 = vpack.c.bf16 %v5387, %v5386
        %v5414 = vpack.c.bf16 %v5389, %v5388
        %v5415 = vpack.c.bf16 %v5391, %v5390
        %v5416 = vpack.c.bf16 %v5393, %v5392
        %v5417 = vpack.c.bf16 %v5395, %v5394
        %v5418 = vpack.c.bf16 %v5397, %v5396
        %v5419 = vpack.c.bf16 %v5399, %v5398
        %v5420 = vpack.c.bf16 %v5401, %v5400
        %v5421 = vpack.c.bf16 %v5403, %v5402
        %v5422 = vpack.c.bf16 %v5405, %v5404
        %v5423 = vpack.c.bf16 %v5407, %v5406
        %v5424 = vld [vmem:[#allocation9] sm:$0xf]
        %v5425 = vld [vmem:[#allocation9 + $0x4] sm:$0xf]
        %v5426 = vld [vmem:[#allocation9 + $0x8] sm:$0xf]
        %v5427 = vld [vmem:[#allocation9 + $0xc] sm:$0xf]
        %v5428 = vld [vmem:[#allocation9 + $0x10] sm:$0xf]
        %v5429 = vld [vmem:[#allocation9 + $0x14] sm:$0xf]
        %v5430 = vld [vmem:[#allocation9 + $0x18] sm:$0xf]
        %v5431 = vld [vmem:[#allocation9 + $0x1c] sm:$0xf]
        %v5432 = vld [vmem:[#allocation9 + $0x20] sm:$0xf]
        %v5433 = vld [vmem:[#allocation9 + $0x24] sm:$0xf]
        %v5434 = vld [vmem:[#allocation9 + $0x28] sm:$0xf]
        %v5435 = vld [vmem:[#allocation9 + $0x2c] sm:$0xf]
        %v5436 = vld [vmem:[#allocation9 + $0x30] sm:$0xf]
        %v5437 = vld [vmem:[#allocation9 + $0x34] sm:$0xf]
        %v5438 = vld [vmem:[#allocation9 + $0x38] sm:$0xf]
        %v5439 = vld [vmem:[#allocation9 + $0x3c] sm:$0xf]
        %v5440 = vld [vmem:[%s6] sm:$0x1]
        %v5442 = vlaneseq
        %v5443 = vshrl.u32 %v5442, 7
        %v5444 = vsub.s32 0, %v5443
        %v5445 = vrot.slane %v5440, %v5444
        %v5463 = vunpack.c.l.b16 %v5424
        %v5464 = vunpack.c.l.b16 %v5425
        %v5465 = vunpack.c.l.b16 %v5426
        %v5466 = vunpack.c.l.b16 %v5427
        %v5467 = vunpack.c.l.b16 %v5428
        %v5468 = vunpack.c.l.b16 %v5429
        %v5469 = vunpack.c.l.b16 %v5430
        %v5470 = vunpack.c.l.b16 %v5431
        %v5471 = vunpack.c.l.b16 %v5432
        %v5472 = vunpack.c.l.b16 %v5433
        %v5473 = vunpack.c.l.b16 %v5434
        %v5474 = vunpack.c.l.b16 %v5435
        %v5475 = vunpack.c.l.b16 %v5436
        %v5476 = vunpack.c.l.b16 %v5437
        %v5477 = vunpack.c.l.b16 %v5438
        %v5478 = vunpack.c.l.b16 %v5439
        %v5479 = vpack.c.b16 %v5464, %v5463
        %v5480 = vpack.c.b16 %v5466, %v5465
        %v5481 = vpack.c.b16 %v5468, %v5467
        %v5482 = vpack.c.b16 %v5470, %v5469
        %v5483 = vpack.c.b16 %v5472, %v5471
        %v5484 = vpack.c.b16 %v5474, %v5473
        %v5485 = vpack.c.b16 %v5476, %v5475
        %v5486 = vpack.c.b16 %v5478, %v5477
        %5495 = vmatprep.subr.bf16.mxu0 0
        %5496 = vmatpush1.bf16.msra.mxu0 %v5479
        %5497 = vmatprep.subr.bf16.mxu0 0
        %5498 = vmatpush1.bf16.msra.mxu0 %v5480
        %5499 = vmatprep.subr.bf16.mxu0 0
        %5500 = vmatpush1.bf16.msra.mxu0 %v5481
        %5501 = vmatprep.subr.bf16.mxu0 0
        %5502 = vmatpush1.bf16.msra.mxu0 %v5482
        %5503 = vmatprep.subr.bf16.mxu0 0
        %5504 = vmatpush1.bf16.msra.mxu0 %v5483
        %5505 = vmatprep.subr.bf16.mxu0 0
        %5506 = vmatpush1.bf16.msra.mxu0 %v5484
        %5507 = vmatprep.subr.bf16.mxu0 0
        %5508 = vmatpush1.bf16.msra.mxu0 %v5485
        %5509 = vmatprep.subr.bf16.mxu0 0
        %5510 = vmatpush1.bf16.msra.mxu0 %v5486
        %5511 = vmatprep.subr.bf16.mxu0 0
        %5512 = vmatpush1.bf16.msra.mxu0 0
        %5513 = vmatprep.subr.bf16.mxu0 0
        %5514 = vmatpush1.bf16.msra.mxu0 0
        %5515 = vmatprep.subr.bf16.mxu0 0
        %5516 = vmatpush1.bf16.msra.mxu0 0
        %5517 = vmatprep.subr.bf16.mxu0 0
        %5518 = vmatpush1.bf16.msra.mxu0 0
        %5519 = vmatprep.subr.bf16.mxu0 0
        %5520 = vmatpush1.bf16.msra.mxu0 0
        %5521 = vmatprep.subr.bf16.mxu0 0
        %5522 = vmatpush1.bf16.msra.mxu0 0
        %5523 = vmatprep.subr.bf16.mxu0 0
        %5524 = vmatpush1.bf16.msra.mxu0 0
        %5525 = vmatprep.subr.bf16.mxu0 0
        %5526 = vmatpush1.bf16.msra.mxu0 0
        %5527 = vmatprep.mubr.bf16.mxu0 0
        %5528 = vmatmul.mubr.bf16.gmra.mrb[0].mxu0 %v5408
        %v5529 = vpop.f32.mrb[0].mxu0
        %v5530 = vadd.f32 %v5445, %v5529
        %v5531 = vpop.f32.mrb[0].mxu0
        %v5532 = vpop.f32.mrb[0].mxu0
        %v5533 = vadd.f32 %v5445, %v5532
        %v5534 = vpop.f32.mrb[0].mxu0
        %5535 = vmatprep.mubr.bf16.mxu0 0
        %5536 = vmatmul.mubr.bf16.gmra.mrb[0].mxu0 %v5409
        %v5537 = vpop.f32.mrb[0].mxu0
        %v5538 = vadd.f32 %v5445, %v5537
        %v5539 = vpop.f32.mrb[0].mxu0
        %v5540 = vpop.f32.mrb[0].mxu0
        %v5541 = vadd.f32 %v5445, %v5540
        %v5542 = vpop.f32.mrb[0].mxu0
        %5543 = vmatprep.mubr.bf16.mxu0 0
        %5544 = vmatmul.mubr.bf16.gmra.mrb[0].mxu0 %v5410
        %v5545 = vpop.f32.mrb[0].mxu0
        %v5546 = vadd.f32 %v5445, %v5545
        %v5547 = vpop.f32.mrb[0].mxu0
        %v5548 = vpop.f32.mrb[0].mxu0
        %v5549 = vadd.f32 %v5445, %v5548
        %v5550 = vpop.f32.mrb[0].mxu0
        %5551 = vmatprep.mubr.bf16.mxu0 0
        %5552 = vmatmul.mubr.bf16.gmra.mrb[0].mxu0 %v5411
        %v5553 = vpop.f32.mrb[0].mxu0
        %v5554 = vadd.f32 %v5445, %v5553
        %v5555 = vpop.f32.mrb[0].mxu0
        %v5556 = vpop.f32.mrb[0].mxu0
        %v5557 = vadd.f32 %v5445, %v5556
        %v5558 = vpop.f32.mrb[0].mxu0
        %5559 = vmatprep.mubr.bf16.mxu0 0
        %5560 = vmatmul.mubr.bf16.gmra.mrb[0].mxu0 %v5412
        %v5561 = vpop.f32.mrb[0].mxu0
        %v5562 = vadd.f32 %v5445, %v5561
        %v5563 = vpop.f32.mrb[0].mxu0
        %v5564 = vpop.f32.mrb[0].mxu0
        %v5565 = vadd.f32 %v5445, %v5564
        %v5566 = vpop.f32.mrb[0].mxu0
        %5567 = vmatprep.mubr.bf16.mxu0 0
        %5568 = vmatmul.mubr.bf16.gmra.mrb[0].mxu0 %v5413
        %v5569 = vpop.f32.mrb[0].mxu0
        %v5570 = vadd.f32 %v5445, %v5569
        %v5571 = vpop.f32.mrb[0].mxu0
        %v5572 = vpop.f32.mrb[0].mxu0
        %v5573 = vadd.f32 %v5445, %v5572
        %v5574 = vpop.f32.mrb[0].mxu0
        %5575 = vmatprep.mubr.bf16.mxu0 0
        %5576 = vmatmul.mubr.bf16.gmra.mrb[0].mxu0 %v5414
        %v5577 = vpop.f32.mrb[0].mxu0
        %v5578 = vadd.f32 %v5445, %v5577
        %v5579 = vpop.f32.mrb[0].mxu0
        %v5580 = vpop.f32.mrb[0].mxu0
        %v5581 = vadd.f32 %v5445, %v5580
        %v5582 = vpop.f32.mrb[0].mxu0
        %5583 = vmatprep.mubr.bf16.mxu0 0
        %5584 = vmatmul.mubr.bf16.gmra.mrb[0].mxu0 %v5415
        %v5585 = vpop.f32.mrb[0].mxu0
        %v5586 = vadd.f32 %v5445, %v5585
        %v5587 = vpop.f32.mrb[0].mxu0
        %v5588 = vpop.f32.mrb[0].mxu0
        %v5589 = vadd.f32 %v5445, %v5588
        %v5590 = vpop.f32.mrb[0].mxu0
        %5591 = vmatprep.mubr.bf16.mxu0 0
        %5592 = vmatmul.mubr.bf16.gmra.mrb[0].mxu0 %v5416
        %v5593 = vpop.f32.mrb[0].mxu0
        %v5594 = vadd.f32 %v5445, %v5593
        %v5595 = vpop.f32.mrb[0].mxu0
        %v5596 = vpop.f32.mrb[0].mxu0
        %v5597 = vadd.f32 %v5445, %v5596
        %v5598 = vpop.f32.mrb[0].mxu0
        %5599 = vmatprep.mubr.bf16.mxu0 0
        %5600 = vmatmul.mubr.bf16.gmra.mrb[0].mxu0 %v5417
        %v5601 = vpop.f32.mrb[0].mxu0
        %v5602 = vadd.f32 %v5445, %v5601
        %v5603 = vpop.f32.mrb[0].mxu0
        %v5604 = vpop.f32.mrb[0].mxu0
        %v5605 = vadd.f32 %v5445, %v5604
        %v5606 = vpop.f32.mrb[0].mxu0
        %5607 = vmatprep.mubr.bf16.mxu0 0
        %5608 = vmatmul.mubr.bf16.gmra.mrb[0].mxu0 %v5418
        %v5609 = vpop.f32.mrb[0].mxu0
        %v5610 = vadd.f32 %v5445, %v5609
        %v5611 = vpop.f32.mrb[0].mxu0
        %v5612 = vpop.f32.mrb[0].mxu0
        %v5613 = vadd.f32 %v5445, %v5612
        %v5614 = vpop.f32.mrb[0].mxu0
        %5615 = vmatprep.mubr.bf16.mxu0 0
        %5616 = vmatmul.mubr.bf16.gmra.mrb[0].mxu0 %v5419
        %v5617 = vpop.f32.mrb[0].mxu0
        %v5618 = vadd.f32 %v5445, %v5617
        %v5619 = vpop.f32.mrb[0].mxu0
        %v5620 = vpop.f32.mrb[0].mxu0
        %v5621 = vadd.f32 %v5445, %v5620
        %v5622 = vpop.f32.mrb[0].mxu0
        %5623 = vmatprep.mubr.bf16.mxu0 0
        %5624 = vmatmul.mubr.bf16.gmra.mrb[0].mxu0 %v5420
        %v5625 = vpop.f32.mrb[0].mxu0
        %v5626 = vadd.f32 %v5445, %v5625
        %v5627 = vpop.f32.mrb[0].mxu0
        %v5628 = vpop.f32.mrb[0].mxu0
        %v5629 = vadd.f32 %v5445, %v5628
        %v5630 = vpop.f32.mrb[0].mxu0
        %5631 = vmatprep.mubr.bf16.mxu0 0
        %5632 = vmatmul.mubr.bf16.gmra.mrb[0].mxu0 %v5421
        %v5633 = vpop.f32.mrb[0].mxu0
        %v5634 = vadd.f32 %v5445, %v5633
        %v5635 = vpop.f32.mrb[0].mxu0
        %v5636 = vpop.f32.mrb[0].mxu0
        %v5637 = vadd.f32 %v5445, %v5636
        %v5638 = vpop.f32.mrb[0].mxu0
        %5639 = vmatprep.mubr.bf16.mxu0 0
        %5640 = vmatmul.mubr.bf16.gmra.mrb[0].mxu0 %v5422
        %v5641 = vpop.f32.mrb[0].mxu0
        %v5642 = vadd.f32 %v5445, %v5641
        %v5643 = vpop.f32.mrb[0].mxu0
        %v5644 = vpop.f32.mrb[0].mxu0
        %v5645 = vadd.f32 %v5445, %v5644
        %v5646 = vpop.f32.mrb[0].mxu0
        %5647 = vmatprep.mubr.bf16.mxu0 0
        %5648 = vmatmul.mubr.bf16.gmra.mrb[0].mxu0 %v5423
        %v5649 = vpop.f32.mrb[0].mxu0
        %v5650 = vadd.f32 %v5445, %v5649
        %v5651 = vpop.f32.mrb[0].mxu0
        %v5652 = vpop.f32.mrb[0].mxu0
        %v5653 = vadd.f32 %v5445, %v5652
        %v5654 = vpop.f32.mrb[0].mxu0
        %5655 = vdwg.mxu0
        %v5656 = vunpack.c.l.bf16 %v342
        %v5657 = vunpack.c.l.bf16 %v343
        %v5658 = vunpack.c.l.bf16 %v344
        %v5659 = vunpack.c.l.bf16 %v345
        %v5660 = vunpack.c.l.bf16 %v346
        %v5661 = vunpack.c.l.bf16 %v347
        %v5662 = vunpack.c.l.bf16 %v348
        %v5663 = vunpack.c.l.bf16 %v349
        %v5664 = vunpack.c.l.bf16 %v350
        %v5665 = vunpack.c.l.bf16 %v351
        %v5666 = vunpack.c.l.bf16 %v352
        %v5667 = vunpack.c.l.bf16 %v353
        %v5668 = vunpack.c.l.bf16 %v354
        %v5669 = vunpack.c.l.bf16 %v355
        %v5670 = vunpack.c.l.bf16 %v356
        %v5671 = vunpack.c.l.bf16 %v357
        %v5672 = vunpack.c.l.bf16 %v358
        %v5673 = vunpack.c.l.bf16 %v359
        %v5674 = vunpack.c.l.bf16 %v360
        %v5675 = vunpack.c.l.bf16 %v361
        %v5676 = vunpack.c.l.bf16 %v362
        %v5677 = vunpack.c.l.bf16 %v363
        %v5678 = vunpack.c.l.bf16 %v364
        %v5679 = vunpack.c.l.bf16 %v365
        %v5680 = vunpack.c.l.bf16 %v366
        %v5681 = vunpack.c.l.bf16 %v367
        %v5682 = vunpack.c.l.bf16 %v368
        %v5683 = vunpack.c.l.bf16 %v369
        %v5684 = vunpack.c.l.bf16 %v370
        %v5685 = vunpack.c.l.bf16 %v371
        %v5686 = vunpack.c.l.bf16 %v372
        %v5687 = vunpack.c.l.bf16 %v373
        %v5688 = vadd.f32 %v5530, %v5656
        %v5689 = vadd.f32 %v5533, %v5657
        %v5690 = vadd.f32 %v5538, %v5658
        %v5691 = vadd.f32 %v5541, %v5659
        %v5692 = vadd.f32 %v5546, %v5660
        %v5693 = vadd.f32 %v5549, %v5661
        %v5694 = vadd.f32 %v5554, %v5662
        %v5695 = vadd.f32 %v5557, %v5663
        %v5696 = vadd.f32 %v5562, %v5664
        %v5697 = vadd.f32 %v5565, %v5665
        %v5698 = vadd.f32 %v5570, %v5666
        %v5699 = vadd.f32 %v5573, %v5667
        %v5700 = vadd.f32 %v5578, %v5668
        %v5701 = vadd.f32 %v5581, %v5669
        %v5702 = vadd.f32 %v5586, %v5670
        %v5703 = vadd.f32 %v5589, %v5671
        %v5704 = vadd.f32 %v5594, %v5672
        %v5705 = vadd.f32 %v5597, %v5673
        %v5706 = vadd.f32 %v5602, %v5674
        %v5707 = vadd.f32 %v5605, %v5675
        %v5708 = vadd.f32 %v5610, %v5676
        %v5709 = vadd.f32 %v5613, %v5677
        %v5710 = vadd.f32 %v5618, %v5678
        %v5711 = vadd.f32 %v5621, %v5679
        %v5712 = vadd.f32 %v5626, %v5680
        %v5713 = vadd.f32 %v5629, %v5681
        %v5714 = vadd.f32 %v5634, %v5682
        %v5715 = vadd.f32 %v5637, %v5683
        %v5716 = vadd.f32 %v5642, %v5684
        %v5717 = vadd.f32 %v5645, %v5685
        %v5718 = vadd.f32 %v5650, %v5686
        %v5719 = vadd.f32 %v5653, %v5687
        %v5720 = vmax.f32 %v5688, 0.0
        %v5721 = vmax.f32 %v5689, 0.0
        %v5722 = vmax.f32 %v5690, 0.0
        %v5723 = vmax.f32 %v5691, 0.0
        %v5724 = vmax.f32 %v5692, 0.0
        %v5725 = vmax.f32 %v5693, 0.0
        %v5726 = vmax.f32 %v5694, 0.0
        %v5727 = vmax.f32 %v5695, 0.0
        %v5728 = vmax.f32 %v5696, 0.0
        %v5729 = vmax.f32 %v5697, 0.0
        %v5730 = vmax.f32 %v5698, 0.0
        %v5731 = vmax.f32 %v5699, 0.0
        %v5732 = vmax.f32 %v5700, 0.0
        %v5733 = vmax.f32 %v5701, 0.0
        %v5734 = vmax.f32 %v5702, 0.0
        %v5735 = vmax.f32 %v5703, 0.0
        %v5736 = vmax.f32 %v5704, 0.0
        %v5737 = vmax.f32 %v5705, 0.0
        %v5738 = vmax.f32 %v5706, 0.0
        %v5739 = vmax.f32 %v5707, 0.0
        %v5740 = vmax.f32 %v5708, 0.0
        %v5741 = vmax.f32 %v5709, 0.0
        %v5742 = vmax.f32 %v5710, 0.0
        %v5743 = vmax.f32 %v5711, 0.0
        %v5744 = vmax.f32 %v5712, 0.0
        %v5745 = vmax.f32 %v5713, 0.0
        %v5746 = vmax.f32 %v5714, 0.0
        %v5747 = vmax.f32 %v5715, 0.0
        %v5748 = vmax.f32 %v5716, 0.0
        %v5749 = vmax.f32 %v5717, 0.0
        %v5750 = vmax.f32 %v5718, 0.0
        %v5751 = vmax.f32 %v5719, 0.0
        %5752 = vst [vmem:[%s340] sm:$0xff] %v5720
        %5753 = vst [vmem:[%s340 + $0x8] sm:$0xff] %v5721
        %5754 = vst [vmem:[%s340 + $0x10] sm:$0xff] %v5722
        %5755 = vst [vmem:[%s340 + $0x18] sm:$0xff] %v5723
        %5756 = vst [vmem:[%s340 + $0x20] sm:$0xff] %v5724
        %5757 = vst [vmem:[%s340 + $0x28] sm:$0xff] %v5725
        %5758 = vst [vmem:[%s340 + $0x30] sm:$0xff] %v5726
        %5759 = vst [vmem:[%s340 + $0x38] sm:$0xff] %v5727
        %5760 = vst [vmem:[%s340 + $0x40] sm:$0xff] %v5728
        %5761 = vst [vmem:[%s340 + $0x48] sm:$0xff] %v5729
        %5762 = vst [vmem:[%s340 + $0x50] sm:$0xff] %v5730
        %5763 = vst [vmem:[%s340 + $0x58] sm:$0xff] %v5731
        %5764 = vst [vmem:[%s340 + $0x60] sm:$0xff] %v5732
        %5765 = vst [vmem:[%s340 + $0x68] sm:$0xff] %v5733
        %5766 = vst [vmem:[%s340 + $0x70] sm:$0xff] %v5734
        %5767 = vst [vmem:[%s340 + $0x78] sm:$0xff] %v5735
        %5768 = vst [vmem:[%s340 + $0x80] sm:$0xff] %v5736
        %5769 = vst [vmem:[%s340 + $0x88] sm:$0xff] %v5737
        %5770 = vst [vmem:[%s340 + $0x90] sm:$0xff] %v5738
        %5771 = vst [vmem:[%s340 + $0x98] sm:$0xff] %v5739
        %5772 = vst [vmem:[%s340 + $0xa0] sm:$0xff] %v5740
        %5773 = vst [vmem:[%s340 + $0xa8] sm:$0xff] %v5741
        %5774 = vst [vmem:[%s340 + $0xb0] sm:$0xff] %v5742
        %5775 = vst [vmem:[%s340 + $0xb8] sm:$0xff] %v5743
        %5776 = vst [vmem:[%s340 + $0xc0] sm:$0xff] %v5744
        %5777 = vst [vmem:[%s340 + $0xc8] sm:$0xff] %v5745
        %5778 = vst [vmem:[%s340 + $0xd0] sm:$0xff] %v5746
        %5779 = vst [vmem:[%s340 + $0xd8] sm:$0xff] %v5747
        %5780 = vst [vmem:[%s340 + $0xe0] sm:$0xff] %v5748
        %5781 = vst [vmem:[%s340 + $0xe8] sm:$0xff] %v5749
        %5782 = vst [vmem:[%s340 + $0xf0] sm:$0xff] %v5750
        %5783 = vst [vmem:[%s340 + $0xf8] sm:$0xff] %v5751
        %s5784 = sand.u32 %s186, 1
        %s5785 = scalar_lea.sflag [#allocation5], %s5784
        %s5786 = sand.u32 %s186, 1
        %s5787 = smul.addr %s5786, 256
        %s5788 = scalar_lea.vmem [#allocation11], %s5787
        // Predicated region
        $region65: #{tpu_custom_call.1} parent=47 // pred_check
          %p5789 = pneg %p196
        $region66: #{tpu_custom_call.1} parent=47 // pred_check_branch
          %5791 = sbr.rel (%p5789) target = $region68
        $region67: #{tpu_custom_call.1} parent=47 // pred_region
          %s5793 = ssub.s32 4096, 4096
          %5794 = vsyncadd %s5785, %s5793
          %s5795 = smul.addr %s26, 32
          %s5796 = smul.addr %s5795, 128
          %s5797 = scalar_lea.hbm %s7, %s5796
          %s5798 = sshll.u32 %s5788, 4
          %s5799 = int_to_ptr.vmem [resolvable:$true] %s5798
          %5804 = dma.vmem_to_hbm [thread:$0]  %s5799, 4096, %s5797, %s5785, 128, 128, 8
        $region68: #{tpu_custom_call.1} parent=47 // pred_fallthru
          _
      $region48: #{tpu_custom_call.1} parent=5 // pred_fallthru
        _
      %p5805 = scmp.le.s32.totalorder 2, %s21
      // Predicated region
      $region69: #{tpu_custom_call.1} parent=5 // pred_check
        %p5806 = pneg %p5805
      $region70: #{tpu_custom_call.1} parent=5 // pred_check_branch
        %5808 = sbr.rel (%p5806) target = $region72
      $region71: #{tpu_custom_call.1} parent=5 // pred_region
        %s5809 = ssub.s32 %s21, 2
        // Predicated region
        $region73: #{tpu_custom_call.1} parent=71 // pred_check
          %p5810 = pneg %p202
        $region74: #{tpu_custom_call.1} parent=71 // pred_check_branch
          %5812 = sbr.rel (%p5810) target = $region76
        $region75: #{tpu_custom_call.1} parent=71 // pred_region
          %s5813 = sand.u32 %s187, 1
          %s5814 = scalar_lea.sflag [#allocation5], %s5813
          %s5815 = sand.u32 %s187, 1
          %s5816 = smul.addr %s5815, 256
          %s5817 = scalar_lea.vmem [#allocation11], %s5816
          %5818 = dma.done %s5814, 4096
        $region76: #{tpu_custom_call.1} parent=71 // pred_fallthru
          _
      $region72: #{tpu_custom_call.1} parent=5 // pred_fallthru
        _
    $region6: #{tpu_custom_call.1} parent=1 // loop_footer
      %s25 = sadd.s32 1, %s21
    $region7: #{tpu_custom_call.1} parent=1 // loop_footer_branch
      %20 = sbr.rel target = $region3
    $region8: #{tpu_custom_call.1} parent=1 // loop_exit
      _
    %5819 = vsyncpa [#allocation4], 1
    %s5820 = scalar_lea.sflag [#allocation4], 1
    %5821 = vsyncpa %s5820, 1
    %5822 = vsyncpa [#allocation7], 1
    %5823 = vsyncpa [#allocation10], 1
    %5824 = vsyncpa [#allocation5], 1
    %s5825 = scalar_lea.sflag [#allocation5], 1
    %5826 = vsyncpa %s5825, 1

</llo_original>
